<compile_context>
chip_gen: v7x
topology: tpu7x:2x2x1
jax: 0.10.0
libtpu: 0.0.40
codegen_flags: <defaults>
</compile_context>

<pallas_src>
import functools

import jax
import jax.numpy as jnp
from jax import lax
from jax.experimental import pallas as pl
from jax.experimental.pallas import tpu as pltpu

# On v6e / v7x set this to jnp.bfloat16: the MXU is bf16-native (~2x rate and
# half the weight DMA bytes).  Gate nonlinearities and the cell state stay in
# f32 either way (v5e has no bf16 VPU/EUP path).  Kept at f32 here so the
# small-shape correctness check below is tight against the pure-f32 reference.
MXU_DTYPE = jnp.float32


# ------------------------------ fused kernel --------------------------------
def _lstm_recurrence(gates_scr, whh_t_ref, hseq_scr, T, Bb, H):
    """One LSTM layer's recurrence.

    gates_scr : (T*Bb, 4H) f32  precomputed x_t @ W_ih^T + b (time-major rows)
    whh_t_ref : (H, 4H)         pre-transposed recurrent weight
    hseq_scr  : (T*Bb, H)  f32  per-step hidden states (written in place)
    """
    whh_t = whh_t_ref[...].astype(MXU_DTYPE)
    h = jnp.zeros((Bb, H), jnp.float32)
    c = jnp.zeros((Bb, H), jnp.float32)
    # T is small and static -> fully unroll; every slice below is static.
    for t in range(T):
        g = gates_scr[t * Bb:(t + 1) * Bb, :] + jnp.dot(
            h.astype(MXU_DTYPE), whh_t, preferred_element_type=jnp.float32)
        # PyTorch LSTM gate order: input, forget, cell(g), output
        i = jax.nn.sigmoid(g[:, 0 * H:1 * H])
        f = jax.nn.sigmoid(g[:, 1 * H:2 * H])
        gg = jnp.tanh(g[:, 2 * H:3 * H])
        o = jax.nn.sigmoid(g[:, 3 * H:4 * H])
        c = f * c + i * gg
        h = o * jnp.tanh(c)
        hseq_scr[t * Bb:(t + 1) * Bb, :] = h


def _encoder_fused_kernel(x_ref, ln_g_ref, ln_b_ref,
                          wih0_ref, whh0_ref, b0_ref,
                          wih1_ref, whh1_ref, b1_ref,
                          lw_ref, lb_ref,
                          out_ref,
                          gates_scr, hseq_scr,
                          *, T, Bb):
    H = whh0_ref.shape[0]

    # ---- LayerNorm over the feature dim: whole (T*Bb, F) slab in one pass ----
    x = x_ref[0].astype(jnp.float32)                       # (T*Bb, F)
    mean = jnp.mean(x, axis=-1, keepdims=True)
    var = jnp.mean((x - mean) ** 2, axis=-1, keepdims=True)
    xn = (x - mean) * lax.rsqrt(var + 1e-5) * ln_g_ref[...] + ln_b_ref[...]

    # ---- layer 0: hoisted input projection (one big MXU matmul, bias folded) -
    gates_scr[...] = jnp.dot(
        xn.astype(MXU_DTYPE), wih0_ref[...].astype(MXU_DTYPE),
        preferred_element_type=jnp.float32) + b0_ref[...]
    _lstm_recurrence(gates_scr, whh0_ref, hseq_scr, T, Bb, H)

    # ---- layer 1: input projection over ALL layer-0 outputs at once ----------
    gates_scr[...] = jnp.dot(
        hseq_scr[...].astype(MXU_DTYPE), wih1_ref[...].astype(MXU_DTYPE),
        preferred_element_type=jnp.float32) + b1_ref[...]
    _lstm_recurrence(gates_scr, whh1_ref, hseq_scr, T, Bb, H)

    # ---- Dropout(p=0.01) is identity at inference; final Linear fused --------
    y = jnp.dot(
        hseq_scr[...].astype(MXU_DTYPE), lw_ref[...].astype(MXU_DTYPE),
        preferred_element_type=jnp.float32) + lb_ref[...]
    out_ref[0] = y.astype(out_ref.dtype)


# ------------------------------ wrapper --------------------------------------
def _pick_batch_block(B):
    # v7x has two TensorCores; shard the independent per-utterance recurrences
    # across them via a "parallel" batch grid axis when the (8, .) sublane
    # block constraint allows a clean split.
    if B % 16 == 0:
        return B // 2
    return B


def encoder_forward(x, params, batch_block=None):
    """x: (B, T, f1, f2) or (B, T, F).  Returns (B, T, out_sz)."""
    B, T = x.shape[0], x.shape[1]
    x = x.reshape(B, T, -1)                      # x.reshape((B, T, -1))
    F = x.shape[-1]
    H = params["w_hh0"].shape[1]
    O = params["lin_w"].shape[0]

    if batch_block is None:
        batch_block = _pick_batch_block(B)
    assert B % batch_block == 0
    Bb = batch_block
    nb = B // Bb

    # One host-side relayout to "blocked time-major":
    #   x_btm[b, t*Bb + lb, f] == x[b*Bb + lb, t, f]
    # so the kernel only ever touches lane-dense 2-D slabs (no in-kernel
    # transposes/reshapes) and each recurrence step reads a contiguous row
    # block gates_scr[t*Bb:(t+1)*Bb].
    x_btm = x.reshape(nb, Bb, T, F).transpose(0, 2, 1, 3).reshape(nb, T * Bb, F)

    # Weights pre-transposed once on the host (keeps XLU transposes out of the
    # kernel); biases are folded into the hoisted input projections.
    wih0_t = params["w_ih0"].T          # (F, 4H)
    whh0_t = params["w_hh0"].T          # (H, 4H)
    wih1_t = params["w_ih1"].T          # (H, 4H)
    whh1_t = params["w_hh1"].T          # (H, 4H)
    lw_t = params["lin_w"].T            # (H, O)

    kernel = functools.partial(_encoder_fused_kernel, T=T, Bb=Bb)
    full = lambda b: (0, 0)

    # TODO(synk): production-scale T/B needs time-chunked streaming
    # (emit_pipeline over T chunks with carried h/c) instead of a fully
    # resident (T*Bb, .) slab, to fit v7x's 64 MiB VMEM.
    out_btm = pl.pallas_call(
        kernel,
        out_shape=jax.ShapeDtypeStruct((nb, T * Bb, O), x.dtype),
        grid=(nb,),
        in_specs=[
            pl.BlockSpec((1, T * Bb, F), lambda b: (b, 0, 0)),
            pl.BlockSpec((1, F), full),
            pl.BlockSpec((1, F), full),
            pl.BlockSpec((F, 4 * H), full),
            pl.BlockSpec((H, 4 * H), full),
            pl.BlockSpec((1, 4 * H), full),
            pl.BlockSpec((H, 4 * H), full),
            pl.BlockSpec((H, 4 * H), full),
            pl.BlockSpec((1, 4 * H), full),
            pl.BlockSpec((H, O), full),
            pl.BlockSpec((1, O), full),
        ],
        out_specs=pl.BlockSpec((1, T * Bb, O), lambda b: (b, 0, 0)),
        scratch_shapes=[
            pltpu.VMEM((T * Bb, 4 * H), jnp.float32),   # shared gates buffer
            pltpu.VMEM((T * Bb, H), jnp.float32),       # layer-output buffer
        ],
        compiler_params=pltpu.CompilerParams(
            dimension_semantics=("parallel",),
            vmem_limit_bytes=64 * 1024 * 1024,
        ),
    )(x_btm, params["ln_gamma"].reshape(1, F), params["ln_beta"].reshape(1, F),
      wih0_t, whh0_t, params["b0"].reshape(1, 4 * H),
      wih1_t, whh1_t, params["b1"].reshape(1, 4 * H),
      lw_t, params["lin_b"].reshape(1, O))

    # TODO(synk): `state` passthrough / `lengths` masking / `return_state` of
    # the PyTorch forward are not implemented (zero init state, no masking,
    # matching the module's default call path).
    return (out_btm.reshape(nb, T, Bb, O)
                   .transpose(0, 2, 1, 3)
                   .reshape(B, T, O))


# ------------------------------ Pure-JAX reference ---------------------------
def _lstm_ref(x_tm, w_ih, w_hh, b):
    T, B, Fin = x_tm.shape
    H = w_hh.shape[1]

    def step(carry, x_t):
        h, c = carry
        gates = x_t @ w_ih.T + h @ w_hh.T + b
        i = jax.nn.sigmoid(gates[:, :H])
        f = jax.nn.sigmoid(gates[:, H:2 * H])
        g = jnp.tanh(gates[:, 2 * H:3 * H])
        o = jax.nn.sigmoid(gates[:, 3 * H:])
        c = f * c + i * g
        h = o * jnp.tanh(c)
        return (h, c), h

    init = (jnp.zeros((B, H), jnp.float32), jnp.zeros((B, H), jnp.float32))
    _, ys = lax.scan(step, init, x_tm)
    return ys


def encoder_ref(x, params):
    B, T = x.shape[0], x.shape[1]
    x = x.reshape(B, T, -1)
    mean = jnp.mean(x, axis=-1, keepdims=True)
    var = jnp.mean((x - mean) ** 2, axis=-1, keepdims=True)
    x = (x - mean) * lax.rsqrt(var + 1e-5) * params["ln_gamma"] + params["ln_beta"]
    x_tm = x.transpose(1, 0, 2)
    h1 = _lstm_ref(x_tm, params["w_ih0"], params["w_hh0"], params["b0"])
    h2 = _lstm_ref(h1, params["w_ih1"], params["w_hh1"], params["b1"])
    y = h2.transpose(1, 0, 2)
    return y @ params["lin_w"].T + params["lin_b"]


# ----------------------------------- main ------------------------------------
if __name__ == "__main__":
    B, T, F1, F2 = 2, 8, 8, 4      # input features (B, T, f1, f2)
    F = F1 * F2                    # feature_sz = 32
    H = 32                         # hidden_sz
    O = 48                         # out_sz (!= hidden_sz -> Linear is used)

    key = jax.random.PRNGKey(0)
    ks = jax.random.split(key, 10)
    scale = 0.1
    params = {
        "ln_gamma": jnp.ones((F,), jnp.float32),
        "ln_beta": jnp.zeros((F,), jnp.float32),
        # layer 0: F -> H  (PyTorch LSTM weight shapes: (4H, in), (4H, H), (4H,))
        "w_ih0": scale * jax.random.normal(ks[0], (4 * H, F), jnp.float32),
        "w_hh0": scale * jax.random.normal(ks[1], (4 * H, H), jnp.float32),
        "b0": scale * jax.random.normal(ks[2], (4 * H,), jnp.float32),
        # layer 1: H -> H
        "w_ih1": scale * jax.random.normal(ks[3], (4 * H, H), jnp.float32),
        "w_hh1": scale * jax.random.normal(ks[4], (4 * H, H), jnp.float32),
        "b1": scale * jax.random.normal(ks[5], (4 * H,), jnp.float32),
        # final linear: H -> O
        "lin_w": scale * jax.random.normal(ks[6], (O, H), jnp.float32),
        "lin_b": scale * jax.random.normal(ks[7], (O,), jnp.float32),
    }

    x = jax.random.normal(ks[8], (B, T, F1, F2), jnp.float32)

    out = jax.block_until_ready(encoder_forward(x, params))
    ref = jax.block_until_ready(encoder_ref(x, params))

    assert out.shape == (B, T, O), out.shape
    assert bool(jnp.all(jnp.isfinite(out)))
    assert bool(jnp.allclose(out, ref, rtol=2e-2, atol=2e-2)), float(
        jnp.max(jnp.abs(out - ref))
    )
    print("KERNEL_OK")
</pallas_src>

<mosaic_0001>
module attributes {stable_mosaic.version = 11 : i64} {
  func.func @_encoder_fused_kernel(%arg0: i32, %arg1: memref<1x16x32xf32, #tpu.memory_space<vmem>>, %arg2: memref<1x32xf32, #tpu.memory_space<vmem>>, %arg3: memref<1x32xf32, #tpu.memory_space<vmem>>, %arg4: memref<32x128xf32, #tpu.memory_space<vmem>>, %arg5: memref<32x128xf32, #tpu.memory_space<vmem>>, %arg6: memref<1x128xf32, #tpu.memory_space<vmem>>, %arg7: memref<32x128xf32, #tpu.memory_space<vmem>>, %arg8: memref<32x128xf32, #tpu.memory_space<vmem>>, %arg9: memref<1x128xf32, #tpu.memory_space<vmem>>, %arg10: memref<32x48xf32, #tpu.memory_space<vmem>>, %arg11: memref<1x48xf32, #tpu.memory_space<vmem>>, %arg12: memref<1x16x48xf32, #tpu.memory_space<vmem>>, %arg13: memref<16x128xf32, #tpu.memory_space<vmem>>, %arg14: memref<16x32xf32, #tpu.memory_space<vmem>>) attributes {dimension_semantics = [#tpu.dimension_semantics<parallel>], iteration_bounds = array<i64: 1>, scalar_prefetch = 0 : i64, scratch_operands = 2 : i64, tpu.core_type = #tpu.core_type<tc>, window_params = [{transform_indices = @transform_0, window_bounds = array<i64: 1, 16, 32>}, {pipeline_mode = #tpu.pipeline_mode<synchronous>, transform_indices = @transform_1, window_bounds = array<i64: 1, 32>}, {pipeline_mode = #tpu.pipeline_mode<synchronous>, transform_indices = @transform_2, window_bounds = array<i64: 1, 32>}, {pipeline_mode = #tpu.pipeline_mode<synchronous>, transform_indices = @transform_3, window_bounds = array<i64: 32, 128>}, {pipeline_mode = #tpu.pipeline_mode<synchronous>, transform_indices = @transform_4, window_bounds = array<i64: 32, 128>}, {pipeline_mode = #tpu.pipeline_mode<synchronous>, transform_indices = @transform_5, window_bounds = array<i64: 1, 128>}, {pipeline_mode = #tpu.pipeline_mode<synchronous>, transform_indices = @transform_6, window_bounds = array<i64: 32, 128>}, {pipeline_mode = #tpu.pipeline_mode<synchronous>, transform_indices = @transform_7, window_bounds = array<i64: 32, 128>}, {pipeline_mode = #tpu.pipeline_mode<synchronous>, transform_indices = @transform_8, window_bounds = array<i64: 1, 128>}, {pipeline_mode = #tpu.pipeline_mode<synchronous>, transform_indices = @transform_9, window_bounds = array<i64: 32, 48>}, {pipeline_mode = #tpu.pipeline_mode<synchronous>, transform_indices = @transform_10, window_bounds = array<i64: 1, 48>}, {transform_indices = @transform_11, window_bounds = array<i64: 1, 16, 48>}]} {
    %c0 = arith.constant 0 : index
    %c0_0 = arith.constant 0 : index
    %c0_1 = arith.constant 0 : index
    %0 = vector.load %arg1[%c0, %c0_0, %c0_1] : memref<1x16x32xf32, #tpu.memory_space<vmem>>, vector<1x16x32xf32>
    %1 = vector.shape_cast %0 : vector<1x16x32xf32> to vector<16x32xf32>
    %cst = arith.constant dense<0.000000e+00> : vector<16xf32>
    %2 = vector.multi_reduction <add>, %1, %cst [1] : vector<16x32xf32> to vector<16xf32>
    %3 = vector.shape_cast %2 : vector<16xf32> to vector<16x1xf32>
    %cst_2 = arith.constant 3.200000e+01 : f32
    %4 = vector.broadcast %cst_2 : f32 to vector<16x1xf32>
    %5 = arith.divf %3, %4 : vector<16x1xf32>
    %6 = vector.broadcast %5 : vector<16x1xf32> to vector<16x32xf32>
    %7 = arith.subf %1, %6 : vector<16x32xf32>
    %8 = arith.mulf %7, %7 : vector<16x32xf32>
    %cst_3 = arith.constant dense<0.000000e+00> : vector<16xf32>
    %9 = vector.multi_reduction <add>, %8, %cst_3 [1] : vector<16x32xf32> to vector<16xf32>
    %10 = vector.shape_cast %9 : vector<16xf32> to vector<16x1xf32>
    %cst_4 = arith.constant 3.200000e+01 : f32
    %11 = vector.broadcast %cst_4 : f32 to vector<16x1xf32>
    %12 = arith.divf %10, %11 : vector<16x1xf32>
    %13 = vector.broadcast %5 : vector<16x1xf32> to vector<16x32xf32>
    %14 = arith.subf %1, %13 : vector<16x32xf32>
    %cst_5 = arith.constant 9.99999974E-6 : f32
    %15 = vector.broadcast %cst_5 : f32 to vector<16x1xf32>
    %16 = arith.addf %12, %15 : vector<16x1xf32>
    %17 = math.rsqrt %16 : vector<16x1xf32>
    %18 = vector.broadcast %17 : vector<16x1xf32> to vector<16x32xf32>
    %19 = arith.mulf %14, %18 : vector<16x32xf32>
    %c0_6 = arith.constant 0 : index
    %c0_7 = arith.constant 0 : index
    %20 = vector.load %arg2[%c0_6, %c0_7] : memref<1x32xf32, #tpu.memory_space<vmem>>, vector<1x32xf32>
    %21 = vector.broadcast %20 : vector<1x32xf32> to vector<16x32xf32>
    %22 = arith.mulf %19, %21 : vector<16x32xf32>
    %c0_8 = arith.constant 0 : index
    %c0_9 = arith.constant 0 : index
    %23 = vector.load %arg3[%c0_8, %c0_9] : memref<1x32xf32, #tpu.memory_space<vmem>>, vector<1x32xf32>
    %24 = vector.broadcast %23 : vector<1x32xf32> to vector<16x32xf32>
    %25 = arith.addf %22, %24 : vector<16x32xf32>
    %c0_10 = arith.constant 0 : index
    %c0_11 = arith.constant 0 : index
    %26 = vector.load %arg4[%c0_10, %c0_11] : memref<32x128xf32, #tpu.memory_space<vmem>>, vector<32x128xf32>
    %cst_12 = arith.constant dense<0.000000e+00> : vector<16x128xf32>
    %27 = tpu.matmul %25, %26, %cst_12 {dimension_numbers = #tpu.dot_dimension_numbers<[1], [0], [0], [1], [0, 0, 1, 1], [], []>} : vector<16x32xf32>, vector<32x128xf32>, vector<16x128xf32> -> vector<16x128xf32>
    %c0_13 = arith.constant 0 : index
    %c0_14 = arith.constant 0 : index
    %28 = vector.load %arg6[%c0_13, %c0_14] : memref<1x128xf32, #tpu.memory_space<vmem>>, vector<1x128xf32>
    %29 = vector.broadcast %28 : vector<1x128xf32> to vector<16x128xf32>
    %30 = arith.addf %27, %29 : vector<16x128xf32>
    %c0_15 = arith.constant 0 : index
    %c0_16 = arith.constant 0 : index
    %31 = vector.load %arg13[%c0_15, %c0_16] : memref<16x128xf32, #tpu.memory_space<vmem>>, vector<16x128xf32>
    tpu.vector_store %arg13[%c0_15, %c0_16], %30 {strides = array<i32>} : memref<16x128xf32, #tpu.memory_space<vmem>>, vector<16x128xf32>,
    %c0_17 = arith.constant 0 : index
    %c0_18 = arith.constant 0 : index
    %32 = vector.load %arg5[%c0_17, %c0_18] : memref<32x128xf32, #tpu.memory_space<vmem>>, vector<32x128xf32>
    %cst_19 = arith.constant 0.000000e+00 : f32
    %33 = vector.broadcast %cst_19 : f32 to vector<2x32xf32>
    %cst_20 = arith.constant 0.000000e+00 : f32
    %34 = vector.broadcast %cst_20 : f32 to vector<2x32xf32>
    %c0_21 = arith.constant 0 : index
    %c0_22 = arith.constant 0 : index
    %35 = vector.load %arg13[%c0_21, %c0_22] : memref<16x128xf32, #tpu.memory_space<vmem>>, vector<2x128xf32>
    %cst_23 = arith.constant dense<0.000000e+00> : vector<2x128xf32>
    %36 = tpu.matmul %33, %32, %cst_23 {dimension_numbers = #tpu.dot_dimension_numbers<[1], [0], [0], [1], [0, 0, 1, 1], [], []>} : vector<2x32xf32>, vector<32x128xf32>, vector<2x128xf32> -> vector<2x128xf32>
    %37 = arith.addf %35, %36 : vector<2x128xf32>
    %38 = vector.extract_strided_slice %37 {offsets = [0, 0], sizes = [2, 32], strides = [1, 1]} : vector<2x128xf32> to vector<2x32xf32>
    %39 = arith.negf %38 : vector<2x32xf32>
    %40 = math.exp %39 : vector<2x32xf32>
    %cst_24 = arith.constant 1.000000e+00 : f32
    %41 = vector.broadcast %cst_24 : f32 to vector<2x32xf32>
    %42 = arith.addf %41, %40 : vector<2x32xf32>
    %43 = arith.divf %41, %42 : vector<2x32xf32>
    %44 = vector.extract_strided_slice %37 {offsets = [0, 32], sizes = [2, 32], strides = [1, 1]} : vector<2x128xf32> to vector<2x32xf32>
    %45 = arith.negf %44 : vector<2x32xf32>
    %46 = math.exp %45 : vector<2x32xf32>
    %cst_25 = arith.constant 1.000000e+00 : f32
    %47 = vector.broadcast %cst_25 : f32 to vector<2x32xf32>
    %48 = arith.addf %47, %46 : vector<2x32xf32>
    %49 = arith.divf %47, %48 : vector<2x32xf32>
    %50 = vector.extract_strided_slice %37 {offsets = [0, 64], sizes = [2, 32], strides = [1, 1]} : vector<2x128xf32> to vector<2x32xf32>
    %51 = math.tanh %50 : vector<2x32xf32>
    %52 = vector.extract_strided_slice %37 {offsets = [0, 96], sizes = [2, 32], strides = [1, 1]} : vector<2x128xf32> to vector<2x32xf32>
    %53 = arith.negf %52 : vector<2x32xf32>
    %54 = math.exp %53 : vector<2x32xf32>
    %cst_26 = arith.constant 1.000000e+00 : f32
    %55 = vector.broadcast %cst_26 : f32 to vector<2x32xf32>
    %56 = arith.addf %55, %54 : vector<2x32xf32>
    %57 = arith.divf %55, %56 : vector<2x32xf32>
    %58 = arith.mulf %49, %34 : vector<2x32xf32>
    %59 = arith.mulf %43, %51 : vector<2x32xf32>
    %60 = arith.addf %58, %59 : vector<2x32xf32>
    %61 = math.tanh %60 : vector<2x32xf32>
    %62 = arith.mulf %57, %61 : vector<2x32xf32>
    %c0_27 = arith.constant 0 : index
    %c0_28 = arith.constant 0 : index
    %63 = vector.load %arg14[%c0_27, %c0_28] : memref<16x32xf32, #tpu.memory_space<vmem>>, vector<2x32xf32>
    tpu.vector_store %arg14[%c0_27, %c0_28], %62 {strides = array<i32>} : memref<16x32xf32, #tpu.memory_space<vmem>>, vector<2x32xf32>,
    %c2 = arith.constant 2 : index
    %c0_29 = arith.constant 0 : index
    %64 = vector.load %arg13[%c2, %c0_29] : memref<16x128xf32, #tpu.memory_space<vmem>>, vector<2x128xf32>
    %cst_30 = arith.constant dense<0.000000e+00> : vector<2x128xf32>
    %65 = tpu.matmul %62, %32, %cst_30 {dimension_numbers = #tpu.dot_dimension_numbers<[1], [0], [0], [1], [0, 0, 1, 1], [], []>} : vector<2x32xf32>, vector<32x128xf32>, vector<2x128xf32> -> vector<2x128xf32>
    %66 = arith.addf %64, %65 : vector<2x128xf32>
    %67 = vector.extract_strided_slice %66 {offsets = [0, 0], sizes = [2, 32], strides = [1, 1]} : vector<2x128xf32> to vector<2x32xf32>
    %68 = arith.negf %67 : vector<2x32xf32>
    %69 = math.exp %68 : vector<2x32xf32>
    %cst_31 = arith.constant 1.000000e+00 : f32
    %70 = vector.broadcast %cst_31 : f32 to vector<2x32xf32>
    %71 = arith.addf %70, %69 : vector<2x32xf32>
    %72 = arith.divf %70, %71 : vector<2x32xf32>
    %73 = vector.extract_strided_slice %66 {offsets = [0, 32], sizes = [2, 32], strides = [1, 1]} : vector<2x128xf32> to vector<2x32xf32>
    %74 = arith.negf %73 : vector<2x32xf32>
    %75 = math.exp %74 : vector<2x32xf32>
    %cst_32 = arith.constant 1.000000e+00 : f32
    %76 = vector.broadcast %cst_32 : f32 to vector<2x32xf32>
    %77 = arith.addf %76, %75 : vector<2x32xf32>
    %78 = arith.divf %76, %77 : vector<2x32xf32>
    %79 = vector.extract_strided_slice %66 {offsets = [0, 64], sizes = [2, 32], strides = [1, 1]} : vector<2x128xf32> to vector<2x32xf32>
    %80 = math.tanh %79 : vector<2x32xf32>
    %81 = vector.extract_strided_slice %66 {offsets = [0, 96], sizes = [2, 32], strides = [1, 1]} : vector<2x128xf32> to vector<2x32xf32>
    %82 = arith.negf %81 : vector<2x32xf32>
    %83 = math.exp %82 : vector<2x32xf32>
    %cst_33 = arith.constant 1.000000e+00 : f32
    %84 = vector.broadcast %cst_33 : f32 to vector<2x32xf32>
    %85 = arith.addf %84, %83 : vector<2x32xf32>
    %86 = arith.divf %84, %85 : vector<2x32xf32>
    %87 = arith.mulf %78, %60 : vector<2x32xf32>
    %88 = arith.mulf %72, %80 : vector<2x32xf32>
    %89 = arith.addf %87, %88 : vector<2x32xf32>
    %90 = math.tanh %89 : vector<2x32xf32>
    %91 = arith.mulf %86, %90 : vector<2x32xf32>
    %c2_34 = arith.constant 2 : index
    %c0_35 = arith.constant 0 : index
    %92 = vector.load %arg14[%c2_34, %c0_35] : memref<16x32xf32, #tpu.memory_space<vmem>>, vector<2x32xf32>
    tpu.vector_store %arg14[%c2_34, %c0_35], %91 {strides = array<i32>} : memref<16x32xf32, #tpu.memory_space<vmem>>, vector<2x32xf32>,
    %c4 = arith.constant 4 : index
    %c0_36 = arith.constant 0 : index
    %93 = vector.load %arg13[%c4, %c0_36] : memref<16x128xf32, #tpu.memory_space<vmem>>, vector<2x128xf32>
    %cst_37 = arith.constant dense<0.000000e+00> : vector<2x128xf32>
    %94 = tpu.matmul %91, %32, %cst_37 {dimension_numbers = #tpu.dot_dimension_numbers<[1], [0], [0], [1], [0, 0, 1, 1], [], []>} : vector<2x32xf32>, vector<32x128xf32>, vector<2x128xf32> -> vector<2x128xf32>
    %95 = arith.addf %93, %94 : vector<2x128xf32>
    %96 = vector.extract_strided_slice %95 {offsets = [0, 0], sizes = [2, 32], strides = [1, 1]} : vector<2x128xf32> to vector<2x32xf32>
    %97 = arith.negf %96 : vector<2x32xf32>
    %98 = math.exp %97 : vector<2x32xf32>
    %cst_38 = arith.constant 1.000000e+00 : f32
    %99 = vector.broadcast %cst_38 : f32 to vector<2x32xf32>
    %100 = arith.addf %99, %98 : vector<2x32xf32>
    %101 = arith.divf %99, %100 : vector<2x32xf32>
    %102 = vector.extract_strided_slice %95 {offsets = [0, 32], sizes = [2, 32], strides = [1, 1]} : vector<2x128xf32> to vector<2x32xf32>
    %103 = arith.negf %102 : vector<2x32xf32>
    %104 = math.exp %103 : vector<2x32xf32>
    %cst_39 = arith.constant 1.000000e+00 : f32
    %105 = vector.broadcast %cst_39 : f32 to vector<2x32xf32>
    %106 = arith.addf %105, %104 : vector<2x32xf32>
    %107 = arith.divf %105, %106 : vector<2x32xf32>
    %108 = vector.extract_strided_slice %95 {offsets = [0, 64], sizes = [2, 32], strides = [1, 1]} : vector<2x128xf32> to vector<2x32xf32>
    %109 = math.tanh %108 : vector<2x32xf32>
    %110 = vector.extract_strided_slice %95 {offsets = [0, 96], sizes = [2, 32], strides = [1, 1]} : vector<2x128xf32> to vector<2x32xf32>
    %111 = arith.negf %110 : vector<2x32xf32>
    %112 = math.exp %111 : vector<2x32xf32>
    %cst_40 = arith.constant 1.000000e+00 : f32
    %113 = vector.broadcast %cst_40 : f32 to vector<2x32xf32>
    %114 = arith.addf %113, %112 : vector<2x32xf32>
    %115 = arith.divf %113, %114 : vector<2x32xf32>
    %116 = arith.mulf %107, %89 : vector<2x32xf32>
    %117 = arith.mulf %101, %109 : vector<2x32xf32>
    %118 = arith.addf %116, %117 : vector<2x32xf32>
    %119 = math.tanh %118 : vector<2x32xf32>
    %120 = arith.mulf %115, %119 : vector<2x32xf32>
    %c4_41 = arith.constant 4 : index
    %c0_42 = arith.constant 0 : index
    %121 = vector.load %arg14[%c4_41, %c0_42] : memref<16x32xf32, #tpu.memory_space<vmem>>, vector<2x32xf32>
    tpu.vector_store %arg14[%c4_41, %c0_42], %120 {strides = array<i32>} : memref<16x32xf32, #tpu.memory_space<vmem>>, vector<2x32xf32>,
    %c6 = arith.constant 6 : index
    %c0_43 = arith.constant 0 : index
    %122 = vector.load %arg13[%c6, %c0_43] : memref<16x128xf32, #tpu.memory_space<vmem>>, vector<2x128xf32>
    %cst_44 = arith.constant dense<0.000000e+00> : vector<2x128xf32>
    %123 = tpu.matmul %120, %32, %cst_44 {dimension_numbers = #tpu.dot_dimension_numbers<[1], [0], [0], [1], [0, 0, 1, 1], [], []>} : vector<2x32xf32>, vector<32x128xf32>, vector<2x128xf32> -> vector<2x128xf32>
    %124 = arith.addf %122, %123 : vector<2x128xf32>
    %125 = vector.extract_strided_slice %124 {offsets = [0, 0], sizes = [2, 32], strides = [1, 1]} : vector<2x128xf32> to vector<2x32xf32>
    %126 = arith.negf %125 : vector<2x32xf32>
    %127 = math.exp %126 : vector<2x32xf32>
    %cst_45 = arith.constant 1.000000e+00 : f32
    %128 = vector.broadcast %cst_45 : f32 to vector<2x32xf32>
    %129 = arith.addf %128, %127 : vector<2x32xf32>
    %130 = arith.divf %128, %129 : vector<2x32xf32>
    %131 = vector.extract_strided_slice %124 {offsets = [0, 32], sizes = [2, 32], strides = [1, 1]} : vector<2x128xf32> to vector<2x32xf32>
    %132 = arith.negf %131 : vector<2x32xf32>
    %133 = math.exp %132 : vector<2x32xf32>
    %cst_46 = arith.constant 1.000000e+00 : f32
    %134 = vector.broadcast %cst_46 : f32 to vector<2x32xf32>
    %135 = arith.addf %134, %133 : vector<2x32xf32>
    %136 = arith.divf %134, %135 : vector<2x32xf32>
    %137 = vector.extract_strided_slice %124 {offsets = [0, 64], sizes = [2, 32], strides = [1, 1]} : vector<2x128xf32> to vector<2x32xf32>
    %138 = math.tanh %137 : vector<2x32xf32>
    %139 = vector.extract_strided_slice %124 {offsets = [0, 96], sizes = [2, 32], strides = [1, 1]} : vector<2x128xf32> to vector<2x32xf32>
    %140 = arith.negf %139 : vector<2x32xf32>
    %141 = math.exp %140 : vector<2x32xf32>
    %cst_47 = arith.constant 1.000000e+00 : f32
    %142 = vector.broadcast %cst_47 : f32 to vector<2x32xf32>
    %143 = arith.addf %142, %141 : vector<2x32xf32>
    %144 = arith.divf %142, %143 : vector<2x32xf32>
    %145 = arith.mulf %136, %118 : vector<2x32xf32>
    %146 = arith.mulf %130, %138 : vector<2x32xf32>
    %147 = arith.addf %145, %146 : vector<2x32xf32>
    %148 = math.tanh %147 : vector<2x32xf32>
    %149 = arith.mulf %144, %148 : vector<2x32xf32>
    %c6_48 = arith.constant 6 : index
    %c0_49 = arith.constant 0 : index
    %150 = vector.load %arg14[%c6_48, %c0_49] : memref<16x32xf32, #tpu.memory_space<vmem>>, vector<2x32xf32>
    tpu.vector_store %arg14[%c6_48, %c0_49], %149 {strides = array<i32>} : memref<16x32xf32, #tpu.memory_space<vmem>>, vector<2x32xf32>,
    %c8 = arith.constant 8 : index
    %c0_50 = arith.constant 0 : index
    %151 = vector.load %arg13[%c8, %c0_50] : memref<16x128xf32, #tpu.memory_space<vmem>>, vector<2x128xf32>
    %cst_51 = arith.constant dense<0.000000e+00> : vector<2x128xf32>
    %152 = tpu.matmul %149, %32, %cst_51 {dimension_numbers = #tpu.dot_dimension_numbers<[1], [0], [0], [1], [0, 0, 1, 1], [], []>} : vector<2x32xf32>, vector<32x128xf32>, vector<2x128xf32> -> vector<2x128xf32>
    %153 = arith.addf %151, %152 : vector<2x128xf32>
    %154 = vector.extract_strided_slice %153 {offsets = [0, 0], sizes = [2, 32], strides = [1, 1]} : vector<2x128xf32> to vector<2x32xf32>
    %155 = arith.negf %154 : vector<2x32xf32>
    %156 = math.exp %155 : vector<2x32xf32>
    %cst_52 = arith.constant 1.000000e+00 : f32
    %157 = vector.broadcast %cst_52 : f32 to vector<2x32xf32>
    %158 = arith.addf %157, %156 : vector<2x32xf32>
    %159 = arith.divf %157, %158 : vector<2x32xf32>
    %160 = vector.extract_strided_slice %153 {offsets = [0, 32], sizes = [2, 32], strides = [1, 1]} : vector<2x128xf32> to vector<2x32xf32>
    %161 = arith.negf %160 : vector<2x32xf32>
    %162 = math.exp %161 : vector<2x32xf32>
    %cst_53 = arith.constant 1.000000e+00 : f32
    %163 = vector.broadcast %cst_53 : f32 to vector<2x32xf32>
    %164 = arith.addf %163, %162 : vector<2x32xf32>
    %165 = arith.divf %163, %164 : vector<2x32xf32>
    %166 = vector.extract_strided_slice %153 {offsets = [0, 64], sizes = [2, 32], strides = [1, 1]} : vector<2x128xf32> to vector<2x32xf32>
    %167 = math.tanh %166 : vector<2x32xf32>
    %168 = vector.extract_strided_slice %153 {offsets = [0, 96], sizes = [2, 32], strides = [1, 1]} : vector<2x128xf32> to vector<2x32xf32>
    %169 = arith.negf %168 : vector<2x32xf32>
    %170 = math.exp %169 : vector<2x32xf32>
    %cst_54 = arith.constant 1.000000e+00 : f32
    %171 = vector.broadcast %cst_54 : f32 to vector<2x32xf32>
    %172 = arith.addf %171, %170 : vector<2x32xf32>
    %173 = arith.divf %171, %172 : vector<2x32xf32>
    %174 = arith.mulf %165, %147 : vector<2x32xf32>
    %175 = arith.mulf %159, %167 : vector<2x32xf32>
    %176 = arith.addf %174, %175 : vector<2x32xf32>
    %177 = math.tanh %176 : vector<2x32xf32>
    %178 = arith.mulf %173, %177 : vector<2x32xf32>
    %c8_55 = arith.constant 8 : index
    %c0_56 = arith.constant 0 : index
    %179 = vector.load %arg14[%c8_55, %c0_56] : memref<16x32xf32, #tpu.memory_space<vmem>>, vector<2x32xf32>
    tpu.vector_store %arg14[%c8_55, %c0_56], %178 {strides = array<i32>} : memref<16x32xf32, #tpu.memory_space<vmem>>, vector<2x32xf32>,
    %c10 = arith.constant 10 : index
    %c0_57 = arith.constant 0 : index
    %180 = vector.load %arg13[%c10, %c0_57] : memref<16x128xf32, #tpu.memory_space<vmem>>, vector<2x128xf32>
    %cst_58 = arith.constant dense<0.000000e+00> : vector<2x128xf32>
    %181 = tpu.matmul %178, %32, %cst_58 {dimension_numbers = #tpu.dot_dimension_numbers<[1], [0], [0], [1], [0, 0, 1, 1], [], []>} : vector<2x32xf32>, vector<32x128xf32>, vector<2x128xf32> -> vector<2x128xf32>
    %182 = arith.addf %180, %181 : vector<2x128xf32>
    %183 = vector.extract_strided_slice %182 {offsets = [0, 0], sizes = [2, 32], strides = [1, 1]} : vector<2x128xf32> to vector<2x32xf32>
    %184 = arith.negf %183 : vector<2x32xf32>
    %185 = math.exp %184 : vector<2x32xf32>
    %cst_59 = arith.constant 1.000000e+00 : f32
    %186 = vector.broadcast %cst_59 : f32 to vector<2x32xf32>
    %187 = arith.addf %186, %185 : vector<2x32xf32>
    %188 = arith.divf %186, %187 : vector<2x32xf32>
    %189 = vector.extract_strided_slice %182 {offsets = [0, 32], sizes = [2, 32], strides = [1, 1]} : vector<2x128xf32> to vector<2x32xf32>
    %190 = arith.negf %189 : vector<2x32xf32>
    %191 = math.exp %190 : vector<2x32xf32>
    %cst_60 = arith.constant 1.000000e+00 : f32
    %192 = vector.broadcast %cst_60 : f32 to vector<2x32xf32>
    %193 = arith.addf %192, %191 : vector<2x32xf32>
    %194 = arith.divf %192, %193 : vector<2x32xf32>
    %195 = vector.extract_strided_slice %182 {offsets = [0, 64], sizes = [2, 32], strides = [1, 1]} : vector<2x128xf32> to vector<2x32xf32>
    %196 = math.tanh %195 : vector<2x32xf32>
    %197 = vector.extract_strided_slice %182 {offsets = [0, 96], sizes = [2, 32], strides = [1, 1]} : vector<2x128xf32> to vector<2x32xf32>
    %198 = arith.negf %197 : vector<2x32xf32>
    %199 = math.exp %198 : vector<2x32xf32>
    %cst_61 = arith.constant 1.000000e+00 : f32
    %200 = vector.broadcast %cst_61 : f32 to vector<2x32xf32>
    %201 = arith.addf %200, %199 : vector<2x32xf32>
    %202 = arith.divf %200, %201 : vector<2x32xf32>
    %203 = arith.mulf %194, %176 : vector<2x32xf32>
    %204 = arith.mulf %188, %196 : vector<2x32xf32>
    %205 = arith.addf %203, %204 : vector<2x32xf32>
    %206 = math.tanh %205 : vector<2x32xf32>
    %207 = arith.mulf %202, %206 : vector<2x32xf32>
    %c10_62 = arith.constant 10 : index
    %c0_63 = arith.constant 0 : index
    %208 = vector.load %arg14[%c10_62, %c0_63] : memref<16x32xf32, #tpu.memory_space<vmem>>, vector<2x32xf32>
    tpu.vector_store %arg14[%c10_62, %c0_63], %207 {strides = array<i32>} : memref<16x32xf32, #tpu.memory_space<vmem>>, vector<2x32xf32>,
    %c12 = arith.constant 12 : index
    %c0_64 = arith.constant 0 : index
    %209 = vector.load %arg13[%c12, %c0_64] : memref<16x128xf32, #tpu.memory_space<vmem>>, vector<2x128xf32>
    %cst_65 = arith.constant dense<0.000000e+00> : vector<2x128xf32>
    %210 = tpu.matmul %207, %32, %cst_65 {dimension_numbers = #tpu.dot_dimension_numbers<[1], [0], [0], [1], [0, 0, 1, 1], [], []>} : vector<2x32xf32>, vector<32x128xf32>, vector<2x128xf32> -> vector<2x128xf32>
    %211 = arith.addf %209, %210 : vector<2x128xf32>
    %212 = vector.extract_strided_slice %211 {offsets = [0, 0], sizes = [2, 32], strides = [1, 1]} : vector<2x128xf32> to vector<2x32xf32>
    %213 = arith.negf %212 : vector<2x32xf32>
    %214 = math.exp %213 : vector<2x32xf32>
    %cst_66 = arith.constant 1.000000e+00 : f32
    %215 = vector.broadcast %cst_66 : f32 to vector<2x32xf32>
    %216 = arith.addf %215, %214 : vector<2x32xf32>
    %217 = arith.divf %215, %216 : vector<2x32xf32>
    %218 = vector.extract_strided_slice %211 {offsets = [0, 32], sizes = [2, 32], strides = [1, 1]} : vector<2x128xf32> to vector<2x32xf32>
    %219 = arith.negf %218 : vector<2x32xf32>
    %220 = math.exp %219 : vector<2x32xf32>
    %cst_67 = arith.constant 1.000000e+00 : f32
    %221 = vector.broadcast %cst_67 : f32 to vector<2x32xf32>
    %222 = arith.addf %221, %220 : vector<2x32xf32>
    %223 = arith.divf %221, %222 : vector<2x32xf32>
    %224 = vector.extract_strided_slice %211 {offsets = [0, 64], sizes = [2, 32], strides = [1, 1]} : vector<2x128xf32> to vector<2x32xf32>
    %225 = math.tanh %224 : vector<2x32xf32>
    %226 = vector.extract_strided_slice %211 {offsets = [0, 96], sizes = [2, 32], strides = [1, 1]} : vector<2x128xf32> to vector<2x32xf32>
    %227 = arith.negf %226 : vector<2x32xf32>
    %228 = math.exp %227 : vector<2x32xf32>
    %cst_68 = arith.constant 1.000000e+00 : f32
    %229 = vector.broadcast %cst_68 : f32 to vector<2x32xf32>
    %230 = arith.addf %229, %228 : vector<2x32xf32>
    %231 = arith.divf %229, %230 : vector<2x32xf32>
    %232 = arith.mulf %223, %205 : vector<2x32xf32>
    %233 = arith.mulf %217, %225 : vector<2x32xf32>
    %234 = arith.addf %232, %233 : vector<2x32xf32>
    %235 = math.tanh %234 : vector<2x32xf32>
    %236 = arith.mulf %231, %235 : vector<2x32xf32>
    %c12_69 = arith.constant 12 : index
    %c0_70 = arith.constant 0 : index
    %237 = vector.load %arg14[%c12_69, %c0_70] : memref<16x32xf32, #tpu.memory_space<vmem>>, vector<2x32xf32>
    tpu.vector_store %arg14[%c12_69, %c0_70], %236 {strides = array<i32>} : memref<16x32xf32, #tpu.memory_space<vmem>>, vector<2x32xf32>,
    %c14 = arith.constant 14 : index
    %c0_71 = arith.constant 0 : index
    %238 = vector.load %arg13[%c14, %c0_71] : memref<16x128xf32, #tpu.memory_space<vmem>>, vector<2x128xf32>
    %cst_72 = arith.constant dense<0.000000e+00> : vector<2x128xf32>
    %239 = tpu.matmul %236, %32, %cst_72 {dimension_numbers = #tpu.dot_dimension_numbers<[1], [0], [0], [1], [0, 0, 1, 1], [], []>} : vector<2x32xf32>, vector<32x128xf32>, vector<2x128xf32> -> vector<2x128xf32>
    %240 = arith.addf %238, %239 : vector<2x128xf32>
    %241 = vector.extract_strided_slice %240 {offsets = [0, 0], sizes = [2, 32], strides = [1, 1]} : vector<2x128xf32> to vector<2x32xf32>
    %242 = arith.negf %241 : vector<2x32xf32>
    %243 = math.exp %242 : vector<2x32xf32>
    %cst_73 = arith.constant 1.000000e+00 : f32
    %244 = vector.broadcast %cst_73 : f32 to vector<2x32xf32>
    %245 = arith.addf %244, %243 : vector<2x32xf32>
    %246 = arith.divf %244, %245 : vector<2x32xf32>
    %247 = vector.extract_strided_slice %240 {offsets = [0, 32], sizes = [2, 32], strides = [1, 1]} : vector<2x128xf32> to vector<2x32xf32>
    %248 = arith.negf %247 : vector<2x32xf32>
    %249 = math.exp %248 : vector<2x32xf32>
    %cst_74 = arith.constant 1.000000e+00 : f32
    %250 = vector.broadcast %cst_74 : f32 to vector<2x32xf32>
    %251 = arith.addf %250, %249 : vector<2x32xf32>
    %252 = arith.divf %250, %251 : vector<2x32xf32>
    %253 = vector.extract_strided_slice %240 {offsets = [0, 64], sizes = [2, 32], strides = [1, 1]} : vector<2x128xf32> to vector<2x32xf32>
    %254 = math.tanh %253 : vector<2x32xf32>
    %255 = vector.extract_strided_slice %240 {offsets = [0, 96], sizes = [2, 32], strides = [1, 1]} : vector<2x128xf32> to vector<2x32xf32>
    %256 = arith.negf %255 : vector<2x32xf32>
    %257 = math.exp %256 : vector<2x32xf32>
    %cst_75 = arith.constant 1.000000e+00 : f32
    %258 = vector.broadcast %cst_75 : f32 to vector<2x32xf32>
    %259 = arith.addf %258, %257 : vector<2x32xf32>
    %260 = arith.divf %258, %259 : vector<2x32xf32>
    %261 = arith.mulf %252, %234 : vector<2x32xf32>
    %262 = arith.mulf %246, %254 : vector<2x32xf32>
    %263 = arith.addf %261, %262 : vector<2x32xf32>
    %264 = math.tanh %263 : vector<2x32xf32>
    %265 = arith.mulf %260, %264 : vector<2x32xf32>
    %c14_76 = arith.constant 14 : index
    %c0_77 = arith.constant 0 : index
    %266 = vector.load %arg14[%c14_76, %c0_77] : memref<16x32xf32, #tpu.memory_space<vmem>>, vector<2x32xf32>
    tpu.vector_store %arg14[%c14_76, %c0_77], %265 {strides = array<i32>} : memref<16x32xf32, #tpu.memory_space<vmem>>, vector<2x32xf32>,
    %c0_78 = arith.constant 0 : index
    %c0_79 = arith.constant 0 : index
    %267 = vector.load %arg14[%c0_78, %c0_79] : memref<16x32xf32, #tpu.memory_space<vmem>>, vector<16x32xf32>
    %c0_80 = arith.constant 0 : index
    %c0_81 = arith.constant 0 : index
    %268 = vector.load %arg7[%c0_80, %c0_81] : memref<32x128xf32, #tpu.memory_space<vmem>>, vector<32x128xf32>
    %cst_82 = arith.constant dense<0.000000e+00> : vector<16x128xf32>
    %269 = tpu.matmul %267, %268, %cst_82 {dimension_numbers = #tpu.dot_dimension_numbers<[1], [0], [0], [1], [0, 0, 1, 1], [], []>} : vector<16x32xf32>, vector<32x128xf32>, vector<16x128xf32> -> vector<16x128xf32>
    %c0_83 = arith.constant 0 : index
    %c0_84 = arith.constant 0 : index
    %270 = vector.load %arg9[%c0_83, %c0_84] : memref<1x128xf32, #tpu.memory_space<vmem>>, vector<1x128xf32>
    %271 = vector.broadcast %270 : vector<1x128xf32> to vector<16x128xf32>
    %272 = arith.addf %269, %271 : vector<16x128xf32>
    %c0_85 = arith.constant 0 : index
    %c0_86 = arith.constant 0 : index
    %273 = vector.load %arg13[%c0_85, %c0_86] : memref<16x128xf32, #tpu.memory_space<vmem>>, vector<16x128xf32>
    tpu.vector_store %arg13[%c0_85, %c0_86], %272 {strides = array<i32>} : memref<16x128xf32, #tpu.memory_space<vmem>>, vector<16x128xf32>,
    %c0_87 = arith.constant 0 : index
    %c0_88 = arith.constant 0 : index
    %274 = vector.load %arg8[%c0_87, %c0_88] : memref<32x128xf32, #tpu.memory_space<vmem>>, vector<32x128xf32>
    %cst_89 = arith.constant 0.000000e+00 : f32
    %275 = vector.broadcast %cst_89 : f32 to vector<2x32xf32>
    %cst_90 = arith.constant 0.000000e+00 : f32
    %276 = vector.broadcast %cst_90 : f32 to vector<2x32xf32>
    %c0_91 = arith.constant 0 : index
    %c0_92 = arith.constant 0 : index
    %277 = vector.load %arg13[%c0_91, %c0_92] : memref<16x128xf32, #tpu.memory_space<vmem>>, vector<2x128xf32>
    %cst_93 = arith.constant dense<0.000000e+00> : vector<2x128xf32>
    %278 = tpu.matmul %275, %274, %cst_93 {dimension_numbers = #tpu.dot_dimension_numbers<[1], [0], [0], [1], [0, 0, 1, 1], [], []>} : vector<2x32xf32>, vector<32x128xf32>, vector<2x128xf32> -> vector<2x128xf32>
    %279 = arith.addf %277, %278 : vector<2x128xf32>
    %280 = vector.extract_strided_slice %279 {offsets = [0, 0], sizes = [2, 32], strides = [1, 1]} : vector<2x128xf32> to vector<2x32xf32>
    %281 = arith.negf %280 : vector<2x32xf32>
    %282 = math.exp %281 : vector<2x32xf32>
    %cst_94 = arith.constant 1.000000e+00 : f32
    %283 = vector.broadcast %cst_94 : f32 to vector<2x32xf32>
    %284 = arith.addf %283, %282 : vector<2x32xf32>
    %285 = arith.divf %283, %284 : vector<2x32xf32>
    %286 = vector.extract_strided_slice %279 {offsets = [0, 32], sizes = [2, 32], strides = [1, 1]} : vector<2x128xf32> to vector<2x32xf32>
    %287 = arith.negf %286 : vector<2x32xf32>
    %288 = math.exp %287 : vector<2x32xf32>
    %cst_95 = arith.constant 1.000000e+00 : f32
    %289 = vector.broadcast %cst_95 : f32 to vector<2x32xf32>
    %290 = arith.addf %289, %288 : vector<2x32xf32>
    %291 = arith.divf %289, %290 : vector<2x32xf32>
    %292 = vector.extract_strided_slice %279 {offsets = [0, 64], sizes = [2, 32], strides = [1, 1]} : vector<2x128xf32> to vector<2x32xf32>
    %293 = math.tanh %292 : vector<2x32xf32>
    %294 = vector.extract_strided_slice %279 {offsets = [0, 96], sizes = [2, 32], strides = [1, 1]} : vector<2x128xf32> to vector<2x32xf32>
    %295 = arith.negf %294 : vector<2x32xf32>
    %296 = math.exp %295 : vector<2x32xf32>
    %cst_96 = arith.constant 1.000000e+00 : f32
    %297 = vector.broadcast %cst_96 : f32 to vector<2x32xf32>
    %298 = arith.addf %297, %296 : vector<2x32xf32>
    %299 = arith.divf %297, %298 : vector<2x32xf32>
    %300 = arith.mulf %291, %276 : vector<2x32xf32>
    %301 = arith.mulf %285, %293 : vector<2x32xf32>
    %302 = arith.addf %300, %301 : vector<2x32xf32>
    %303 = math.tanh %302 : vector<2x32xf32>
    %304 = arith.mulf %299, %303 : vector<2x32xf32>
    %c0_97 = arith.constant 0 : index
    %c0_98 = arith.constant 0 : index
    %305 = vector.load %arg14[%c0_97, %c0_98] : memref<16x32xf32, #tpu.memory_space<vmem>>, vector<2x32xf32>
    tpu.vector_store %arg14[%c0_97, %c0_98], %304 {strides = array<i32>} : memref<16x32xf32, #tpu.memory_space<vmem>>, vector<2x32xf32>,
    %c2_99 = arith.constant 2 : index
    %c0_100 = arith.constant 0 : index
    %306 = vector.load %arg13[%c2_99, %c0_100] : memref<16x128xf32, #tpu.memory_space<vmem>>, vector<2x128xf32>
    %cst_101 = arith.constant dense<0.000000e+00> : vector<2x128xf32>
    %307 = tpu.matmul %304, %274, %cst_101 {dimension_numbers = #tpu.dot_dimension_numbers<[1], [0], [0], [1], [0, 0, 1, 1], [], []>} : vector<2x32xf32>, vector<32x128xf32>, vector<2x128xf32> -> vector<2x128xf32>
    %308 = arith.addf %306, %307 : vector<2x128xf32>
    %309 = vector.extract_strided_slice %308 {offsets = [0, 0], sizes = [2, 32], strides = [1, 1]} : vector<2x128xf32> to vector<2x32xf32>
    %310 = arith.negf %309 : vector<2x32xf32>
    %311 = math.exp %310 : vector<2x32xf32>
    %cst_102 = arith.constant 1.000000e+00 : f32
    %312 = vector.broadcast %cst_102 : f32 to vector<2x32xf32>
    %313 = arith.addf %312, %311 : vector<2x32xf32>
    %314 = arith.divf %312, %313 : vector<2x32xf32>
    %315 = vector.extract_strided_slice %308 {offsets = [0, 32], sizes = [2, 32], strides = [1, 1]} : vector<2x128xf32> to vector<2x32xf32>
    %316 = arith.negf %315 : vector<2x32xf32>
    %317 = math.exp %316 : vector<2x32xf32>
    %cst_103 = arith.constant 1.000000e+00 : f32
    %318 = vector.broadcast %cst_103 : f32 to vector<2x32xf32>
    %319 = arith.addf %318, %317 : vector<2x32xf32>
    %320 = arith.divf %318, %319 : vector<2x32xf32>
    %321 = vector.extract_strided_slice %308 {offsets = [0, 64], sizes = [2, 32], strides = [1, 1]} : vector<2x128xf32> to vector<2x32xf32>
    %322 = math.tanh %321 : vector<2x32xf32>
    %323 = vector.extract_strided_slice %308 {offsets = [0, 96], sizes = [2, 32], strides = [1, 1]} : vector<2x128xf32> to vector<2x32xf32>
    %324 = arith.negf %323 : vector<2x32xf32>
    %325 = math.exp %324 : vector<2x32xf32>
    %cst_104 = arith.constant 1.000000e+00 : f32
    %326 = vector.broadcast %cst_104 : f32 to vector<2x32xf32>
    %327 = arith.addf %326, %325 : vector<2x32xf32>
    %328 = arith.divf %326, %327 : vector<2x32xf32>
    %329 = arith.mulf %320, %302 : vector<2x32xf32>
    %330 = arith.mulf %314, %322 : vector<2x32xf32>
    %331 = arith.addf %329, %330 : vector<2x32xf32>
    %332 = math.tanh %331 : vector<2x32xf32>
    %333 = arith.mulf %328, %332 : vector<2x32xf32>
    %c2_105 = arith.constant 2 : index
    %c0_106 = arith.constant 0 : index
    %334 = vector.load %arg14[%c2_105, %c0_106] : memref<16x32xf32, #tpu.memory_space<vmem>>, vector<2x32xf32>
    tpu.vector_store %arg14[%c2_105, %c0_106], %333 {strides = array<i32>} : memref<16x32xf32, #tpu.memory_space<vmem>>, vector<2x32xf32>,
    %c4_107 = arith.constant 4 : index
    %c0_108 = arith.constant 0 : index
    %335 = vector.load %arg13[%c4_107, %c0_108] : memref<16x128xf32, #tpu.memory_space<vmem>>, vector<2x128xf32>
    %cst_109 = arith.constant dense<0.000000e+00> : vector<2x128xf32>
    %336 = tpu.matmul %333, %274, %cst_109 {dimension_numbers = #tpu.dot_dimension_numbers<[1], [0], [0], [1], [0, 0, 1, 1], [], []>} : vector<2x32xf32>, vector<32x128xf32>, vector<2x128xf32> -> vector<2x128xf32>
    %337 = arith.addf %335, %336 : vector<2x128xf32>
    %338 = vector.extract_strided_slice %337 {offsets = [0, 0], sizes = [2, 32], strides = [1, 1]} : vector<2x128xf32> to vector<2x32xf32>
    %339 = arith.negf %338 : vector<2x32xf32>
    %340 = math.exp %339 : vector<2x32xf32>
    %cst_110 = arith.constant 1.000000e+00 : f32
    %341 = vector.broadcast %cst_110 : f32 to vector<2x32xf32>
    %342 = arith.addf %341, %340 : vector<2x32xf32>
    %343 = arith.divf %341, %342 : vector<2x32xf32>
    %344 = vector.extract_strided_slice %337 {offsets = [0, 32], sizes = [2, 32], strides = [1, 1]} : vector<2x128xf32> to vector<2x32xf32>
    %345 = arith.negf %344 : vector<2x32xf32>
    %346 = math.exp %345 : vector<2x32xf32>
    %cst_111 = arith.constant 1.000000e+00 : f32
    %347 = vector.broadcast %cst_111 : f32 to vector<2x32xf32>
    %348 = arith.addf %347, %346 : vector<2x32xf32>
    %349 = arith.divf %347, %348 : vector<2x32xf32>
    %350 = vector.extract_strided_slice %337 {offsets = [0, 64], sizes = [2, 32], strides = [1, 1]} : vector<2x128xf32> to vector<2x32xf32>
    %351 = math.tanh %350 : vector<2x32xf32>
    %352 = vector.extract_strided_slice %337 {offsets = [0, 96], sizes = [2, 32], strides = [1, 1]} : vector<2x128xf32> to vector<2x32xf32>
    %353 = arith.negf %352 : vector<2x32xf32>
    %354 = math.exp %353 : vector<2x32xf32>
    %cst_112 = arith.constant 1.000000e+00 : f32
    %355 = vector.broadcast %cst_112 : f32 to vector<2x32xf32>
    %356 = arith.addf %355, %354 : vector<2x32xf32>
    %357 = arith.divf %355, %356 : vector<2x32xf32>
    %358 = arith.mulf %349, %331 : vector<2x32xf32>
    %359 = arith.mulf %343, %351 : vector<2x32xf32>
    %360 = arith.addf %358, %359 : vector<2x32xf32>
    %361 = math.tanh %360 : vector<2x32xf32>
    %362 = arith.mulf %357, %361 : vector<2x32xf32>
    %c4_113 = arith.constant 4 : index
    %c0_114 = arith.constant 0 : index
    %363 = vector.load %arg14[%c4_113, %c0_114] : memref<16x32xf32, #tpu.memory_space<vmem>>, vector<2x32xf32>
    tpu.vector_store %arg14[%c4_113, %c0_114], %362 {strides = array<i32>} : memref<16x32xf32, #tpu.memory_space<vmem>>, vector<2x32xf32>,
    %c6_115 = arith.constant 6 : index
    %c0_116 = arith.constant 0 : index
    %364 = vector.load %arg13[%c6_115, %c0_116] : memref<16x128xf32, #tpu.memory_space<vmem>>, vector<2x128xf32>
    %cst_117 = arith.constant dense<0.000000e+00> : vector<2x128xf32>
    %365 = tpu.matmul %362, %274, %cst_117 {dimension_numbers = #tpu.dot_dimension_numbers<[1], [0], [0], [1], [0, 0, 1, 1], [], []>} : vector<2x32xf32>, vector<32x128xf32>, vector<2x128xf32> -> vector<2x128xf32>
    %366 = arith.addf %364, %365 : vector<2x128xf32>
    %367 = vector.extract_strided_slice %366 {offsets = [0, 0], sizes = [2, 32], strides = [1, 1]} : vector<2x128xf32> to vector<2x32xf32>
    %368 = arith.negf %367 : vector<2x32xf32>
    %369 = math.exp %368 : vector<2x32xf32>
    %cst_118 = arith.constant 1.000000e+00 : f32
    %370 = vector.broadcast %cst_118 : f32 to vector<2x32xf32>
    %371 = arith.addf %370, %369 : vector<2x32xf32>
    %372 = arith.divf %370, %371 : vector<2x32xf32>
    %373 = vector.extract_strided_slice %366 {offsets = [0, 32], sizes = [2, 32], strides = [1, 1]} : vector<2x128xf32> to vector<2x32xf32>
    %374 = arith.negf %373 : vector<2x32xf32>
    %375 = math.exp %374 : vector<2x32xf32>
    %cst_119 = arith.constant 1.000000e+00 : f32
    %376 = vector.broadcast %cst_119 : f32 to vector<2x32xf32>
    %377 = arith.addf %376, %375 : vector<2x32xf32>
    %378 = arith.divf %376, %377 : vector<2x32xf32>
    %379 = vector.extract_strided_slice %366 {offsets = [0, 64], sizes = [2, 32], strides = [1, 1]} : vector<2x128xf32> to vector<2x32xf32>
    %380 = math.tanh %379 : vector<2x32xf32>
    %381 = vector.extract_strided_slice %366 {offsets = [0, 96], sizes = [2, 32], strides = [1, 1]} : vector<2x128xf32> to vector<2x32xf32>
    %382 = arith.negf %381 : vector<2x32xf32>
    %383 = math.exp %382 : vector<2x32xf32>
    %cst_120 = arith.constant 1.000000e+00 : f32
    %384 = vector.broadcast %cst_120 : f32 to vector<2x32xf32>
    %385 = arith.addf %384, %383 : vector<2x32xf32>
    %386 = arith.divf %384, %385 : vector<2x32xf32>
    %387 = arith.mulf %378, %360 : vector<2x32xf32>
    %388 = arith.mulf %372, %380 : vector<2x32xf32>
    %389 = arith.addf %387, %388 : vector<2x32xf32>
    %390 = math.tanh %389 : vector<2x32xf32>
    %391 = arith.mulf %386, %390 : vector<2x32xf32>
    %c6_121 = arith.constant 6 : index
    %c0_122 = arith.constant 0 : index
    %392 = vector.load %arg14[%c6_121, %c0_122] : memref<16x32xf32, #tpu.memory_space<vmem>>, vector<2x32xf32>
    tpu.vector_store %arg14[%c6_121, %c0_122], %391 {strides = array<i32>} : memref<16x32xf32, #tpu.memory_space<vmem>>, vector<2x32xf32>,
    %c8_123 = arith.constant 8 : index
    %c0_124 = arith.constant 0 : index
    %393 = vector.load %arg13[%c8_123, %c0_124] : memref<16x128xf32, #tpu.memory_space<vmem>>, vector<2x128xf32>
    %cst_125 = arith.constant dense<0.000000e+00> : vector<2x128xf32>
    %394 = tpu.matmul %391, %274, %cst_125 {dimension_numbers = #tpu.dot_dimension_numbers<[1], [0], [0], [1], [0, 0, 1, 1], [], []>} : vector<2x32xf32>, vector<32x128xf32>, vector<2x128xf32> -> vector<2x128xf32>
    %395 = arith.addf %393, %394 : vector<2x128xf32>
    %396 = vector.extract_strided_slice %395 {offsets = [0, 0], sizes = [2, 32], strides = [1, 1]} : vector<2x128xf32> to vector<2x32xf32>
    %397 = arith.negf %396 : vector<2x32xf32>
    %398 = math.exp %397 : vector<2x32xf32>
    %cst_126 = arith.constant 1.000000e+00 : f32
    %399 = vector.broadcast %cst_126 : f32 to vector<2x32xf32>
    %400 = arith.addf %399, %398 : vector<2x32xf32>
    %401 = arith.divf %399, %400 : vector<2x32xf32>
    %402 = vector.extract_strided_slice %395 {offsets = [0, 32], sizes = [2, 32], strides = [1, 1]} : vector<2x128xf32> to vector<2x32xf32>
    %403 = arith.negf %402 : vector<2x32xf32>
    %404 = math.exp %403 : vector<2x32xf32>
    %cst_127 = arith.constant 1.000000e+00 : f32
    %405 = vector.broadcast %cst_127 : f32 to vector<2x32xf32>
    %406 = arith.addf %405, %404 : vector<2x32xf32>
    %407 = arith.divf %405, %406 : vector<2x32xf32>
    %408 = vector.extract_strided_slice %395 {offsets = [0, 64], sizes = [2, 32], strides = [1, 1]} : vector<2x128xf32> to vector<2x32xf32>
    %409 = math.tanh %408 : vector<2x32xf32>
    %410 = vector.extract_strided_slice %395 {offsets = [0, 96], sizes = [2, 32], strides = [1, 1]} : vector<2x128xf32> to vector<2x32xf32>
    %411 = arith.negf %410 : vector<2x32xf32>
    %412 = math.exp %411 : vector<2x32xf32>
    %cst_128 = arith.constant 1.000000e+00 : f32
    %413 = vector.broadcast %cst_128 : f32 to vector<2x32xf32>
    %414 = arith.addf %413, %412 : vector<2x32xf32>
    %415 = arith.divf %413, %414 : vector<2x32xf32>
    %416 = arith.mulf %407, %389 : vector<2x32xf32>
    %417 = arith.mulf %401, %409 : vector<2x32xf32>
    %418 = arith.addf %416, %417 : vector<2x32xf32>
    %419 = math.tanh %418 : vector<2x32xf32>
    %420 = arith.mulf %415, %419 : vector<2x32xf32>
    %c8_129 = arith.constant 8 : index
    %c0_130 = arith.constant 0 : index
    %421 = vector.load %arg14[%c8_129, %c0_130] : memref<16x32xf32, #tpu.memory_space<vmem>>, vector<2x32xf32>
    tpu.vector_store %arg14[%c8_129, %c0_130], %420 {strides = array<i32>} : memref<16x32xf32, #tpu.memory_space<vmem>>, vector<2x32xf32>,
    %c10_131 = arith.constant 10 : index
    %c0_132 = arith.constant 0 : index
    %422 = vector.load %arg13[%c10_131, %c0_132] : memref<16x128xf32, #tpu.memory_space<vmem>>, vector<2x128xf32>
    %cst_133 = arith.constant dense<0.000000e+00> : vector<2x128xf32>
    %423 = tpu.matmul %420, %274, %cst_133 {dimension_numbers = #tpu.dot_dimension_numbers<[1], [0], [0], [1], [0, 0, 1, 1], [], []>} : vector<2x32xf32>, vector<32x128xf32>, vector<2x128xf32> -> vector<2x128xf32>
    %424 = arith.addf %422, %423 : vector<2x128xf32>
    %425 = vector.extract_strided_slice %424 {offsets = [0, 0], sizes = [2, 32], strides = [1, 1]} : vector<2x128xf32> to vector<2x32xf32>
    %426 = arith.negf %425 : vector<2x32xf32>
    %427 = math.exp %426 : vector<2x32xf32>
    %cst_134 = arith.constant 1.000000e+00 : f32
    %428 = vector.broadcast %cst_134 : f32 to vector<2x32xf32>
    %429 = arith.addf %428, %427 : vector<2x32xf32>
    %430 = arith.divf %428, %429 : vector<2x32xf32>
    %431 = vector.extract_strided_slice %424 {offsets = [0, 32], sizes = [2, 32], strides = [1, 1]} : vector<2x128xf32> to vector<2x32xf32>
    %432 = arith.negf %431 : vector<2x32xf32>
    %433 = math.exp %432 : vector<2x32xf32>
    %cst_135 = arith.constant 1.000000e+00 : f32
    %434 = vector.broadcast %cst_135 : f32 to vector<2x32xf32>
    %435 = arith.addf %434, %433 : vector<2x32xf32>
    %436 = arith.divf %434, %435 : vector<2x32xf32>
    %437 = vector.extract_strided_slice %424 {offsets = [0, 64], sizes = [2, 32], strides = [1, 1]} : vector<2x128xf32> to vector<2x32xf32>
    %438 = math.tanh %437 : vector<2x32xf32>
    %439 = vector.extract_strided_slice %424 {offsets = [0, 96], sizes = [2, 32], strides = [1, 1]} : vector<2x128xf32> to vector<2x32xf32>
    %440 = arith.negf %439 : vector<2x32xf32>
    %441 = math.exp %440 : vector<2x32xf32>
    %cst_136 = arith.constant 1.000000e+00 : f32
    %442 = vector.broadcast %cst_136 : f32 to vector<2x32xf32>
    %443 = arith.addf %442, %441 : vector<2x32xf32>
    %444 = arith.divf %442, %443 : vector<2x32xf32>
    %445 = arith.mulf %436, %418 : vector<2x32xf32>
    %446 = arith.mulf %430, %438 : vector<2x32xf32>
    %447 = arith.addf %445, %446 : vector<2x32xf32>
    %448 = math.tanh %447 : vector<2x32xf32>
    %449 = arith.mulf %444, %448 : vector<2x32xf32>
    %c10_137 = arith.constant 10 : index
    %c0_138 = arith.constant 0 : index
    %450 = vector.load %arg14[%c10_137, %c0_138] : memref<16x32xf32, #tpu.memory_space<vmem>>, vector<2x32xf32>
    tpu.vector_store %arg14[%c10_137, %c0_138], %449 {strides = array<i32>} : memref<16x32xf32, #tpu.memory_space<vmem>>, vector<2x32xf32>,
    %c12_139 = arith.constant 12 : index
    %c0_140 = arith.constant 0 : index
    %451 = vector.load %arg13[%c12_139, %c0_140] : memref<16x128xf32, #tpu.memory_space<vmem>>, vector<2x128xf32>
    %cst_141 = arith.constant dense<0.000000e+00> : vector<2x128xf32>
    %452 = tpu.matmul %449, %274, %cst_141 {dimension_numbers = #tpu.dot_dimension_numbers<[1], [0], [0], [1], [0, 0, 1, 1], [], []>} : vector<2x32xf32>, vector<32x128xf32>, vector<2x128xf32> -> vector<2x128xf32>
    %453 = arith.addf %451, %452 : vector<2x128xf32>
    %454 = vector.extract_strided_slice %453 {offsets = [0, 0], sizes = [2, 32], strides = [1, 1]} : vector<2x128xf32> to vector<2x32xf32>
    %455 = arith.negf %454 : vector<2x32xf32>
    %456 = math.exp %455 : vector<2x32xf32>
    %cst_142 = arith.constant 1.000000e+00 : f32
    %457 = vector.broadcast %cst_142 : f32 to vector<2x32xf32>
    %458 = arith.addf %457, %456 : vector<2x32xf32>
    %459 = arith.divf %457, %458 : vector<2x32xf32>
    %460 = vector.extract_strided_slice %453 {offsets = [0, 32], sizes = [2, 32], strides = [1, 1]} : vector<2x128xf32> to vector<2x32xf32>
    %461 = arith.negf %460 : vector<2x32xf32>
    %462 = math.exp %461 : vector<2x32xf32>
    %cst_143 = arith.constant 1.000000e+00 : f32
    %463 = vector.broadcast %cst_143 : f32 to vector<2x32xf32>
    %464 = arith.addf %463, %462 : vector<2x32xf32>
    %465 = arith.divf %463, %464 : vector<2x32xf32>
    %466 = vector.extract_strided_slice %453 {offsets = [0, 64], sizes = [2, 32], strides = [1, 1]} : vector<2x128xf32> to vector<2x32xf32>
    %467 = math.tanh %466 : vector<2x32xf32>
    %468 = vector.extract_strided_slice %453 {offsets = [0, 96], sizes = [2, 32], strides = [1, 1]} : vector<2x128xf32> to vector<2x32xf32>
    %469 = arith.negf %468 : vector<2x32xf32>
    %470 = math.exp %469 : vector<2x32xf32>
    %cst_144 = arith.constant 1.000000e+00 : f32
    %471 = vector.broadcast %cst_144 : f32 to vector<2x32xf32>
    %472 = arith.addf %471, %470 : vector<2x32xf32>
    %473 = arith.divf %471, %472 : vector<2x32xf32>
    %474 = arith.mulf %465, %447 : vector<2x32xf32>
    %475 = arith.mulf %459, %467 : vector<2x32xf32>
    %476 = arith.addf %474, %475 : vector<2x32xf32>
    %477 = math.tanh %476 : vector<2x32xf32>
    %478 = arith.mulf %473, %477 : vector<2x32xf32>
    %c12_145 = arith.constant 12 : index
    %c0_146 = arith.constant 0 : index
    %479 = vector.load %arg14[%c12_145, %c0_146] : memref<16x32xf32, #tpu.memory_space<vmem>>, vector<2x32xf32>
    tpu.vector_store %arg14[%c12_145, %c0_146], %478 {strides = array<i32>} : memref<16x32xf32, #tpu.memory_space<vmem>>, vector<2x32xf32>,
    %c14_147 = arith.constant 14 : index
    %c0_148 = arith.constant 0 : index
    %480 = vector.load %arg13[%c14_147, %c0_148] : memref<16x128xf32, #tpu.memory_space<vmem>>, vector<2x128xf32>
    %cst_149 = arith.constant dense<0.000000e+00> : vector<2x128xf32>
    %481 = tpu.matmul %478, %274, %cst_149 {dimension_numbers = #tpu.dot_dimension_numbers<[1], [0], [0], [1], [0, 0, 1, 1], [], []>} : vector<2x32xf32>, vector<32x128xf32>, vector<2x128xf32> -> vector<2x128xf32>
    %482 = arith.addf %480, %481 : vector<2x128xf32>
    %483 = vector.extract_strided_slice %482 {offsets = [0, 0], sizes = [2, 32], strides = [1, 1]} : vector<2x128xf32> to vector<2x32xf32>
    %484 = arith.negf %483 : vector<2x32xf32>
    %485 = math.exp %484 : vector<2x32xf32>
    %cst_150 = arith.constant 1.000000e+00 : f32
    %486 = vector.broadcast %cst_150 : f32 to vector<2x32xf32>
    %487 = arith.addf %486, %485 : vector<2x32xf32>
    %488 = arith.divf %486, %487 : vector<2x32xf32>
    %489 = vector.extract_strided_slice %482 {offsets = [0, 32], sizes = [2, 32], strides = [1, 1]} : vector<2x128xf32> to vector<2x32xf32>
    %490 = arith.negf %489 : vector<2x32xf32>
    %491 = math.exp %490 : vector<2x32xf32>
    %cst_151 = arith.constant 1.000000e+00 : f32
    %492 = vector.broadcast %cst_151 : f32 to vector<2x32xf32>
    %493 = arith.addf %492, %491 : vector<2x32xf32>
    %494 = arith.divf %492, %493 : vector<2x32xf32>
    %495 = vector.extract_strided_slice %482 {offsets = [0, 64], sizes = [2, 32], strides = [1, 1]} : vector<2x128xf32> to vector<2x32xf32>
    %496 = math.tanh %495 : vector<2x32xf32>
    %497 = vector.extract_strided_slice %482 {offsets = [0, 96], sizes = [2, 32], strides = [1, 1]} : vector<2x128xf32> to vector<2x32xf32>
    %498 = arith.negf %497 : vector<2x32xf32>
    %499 = math.exp %498 : vector<2x32xf32>
    %cst_152 = arith.constant 1.000000e+00 : f32
    %500 = vector.broadcast %cst_152 : f32 to vector<2x32xf32>
    %501 = arith.addf %500, %499 : vector<2x32xf32>
    %502 = arith.divf %500, %501 : vector<2x32xf32>
    %503 = arith.mulf %494, %476 : vector<2x32xf32>
    %504 = arith.mulf %488, %496 : vector<2x32xf32>
    %505 = arith.addf %503, %504 : vector<2x32xf32>
    %506 = math.tanh %505 : vector<2x32xf32>
    %507 = arith.mulf %502, %506 : vector<2x32xf32>
    %c14_153 = arith.constant 14 : index
    %c0_154 = arith.constant 0 : index
    %508 = vector.load %arg14[%c14_153, %c0_154] : memref<16x32xf32, #tpu.memory_space<vmem>>, vector<2x32xf32>
    tpu.vector_store %arg14[%c14_153, %c0_154], %507 {strides = array<i32>} : memref<16x32xf32, #tpu.memory_space<vmem>>, vector<2x32xf32>,
    %c0_155 = arith.constant 0 : index
    %c0_156 = arith.constant 0 : index
    %509 = vector.load %arg14[%c0_155, %c0_156] : memref<16x32xf32, #tpu.memory_space<vmem>>, vector<16x32xf32>
    %c0_157 = arith.constant 0 : index
    %c0_158 = arith.constant 0 : index
    %510 = vector.load %arg10[%c0_157, %c0_158] : memref<32x48xf32, #tpu.memory_space<vmem>>, vector<32x48xf32>
    %cst_159 = arith.constant dense<0.000000e+00> : vector<16x48xf32>
    %511 = tpu.matmul %509, %510, %cst_159 {dimension_numbers = #tpu.dot_dimension_numbers<[1], [0], [0], [1], [0, 0, 1, 1], [], []>} : vector<16x32xf32>, vector<32x48xf32>, vector<16x48xf32> -> vector<16x48xf32>
    %c0_160 = arith.constant 0 : index
    %c0_161 = arith.constant 0 : index
    %512 = vector.load %arg11[%c0_160, %c0_161] : memref<1x48xf32, #tpu.memory_space<vmem>>, vector<1x48xf32>
    %513 = vector.broadcast %512 : vector<1x48xf32> to vector<16x48xf32>
    %514 = arith.addf %511, %513 : vector<16x48xf32>
    %c0_162 = arith.constant 0 : index
    %c0_163 = arith.constant 0 : index
    %c0_164 = arith.constant 0 : index
    %515 = vector.load %arg12[%c0_162, %c0_163, %c0_164] : memref<1x16x48xf32, #tpu.memory_space<vmem>>, vector<1x16x48xf32>
    %516 = vector.shape_cast %515 : vector<1x16x48xf32> to vector<16x48xf32>
    %517 = vector.shape_cast %514 : vector<16x48xf32> to vector<1x16x48xf32>
    tpu.vector_store %arg12[%c0_162, %c0_163, %c0_164], %517 {strides = array<i32>} : memref<1x16x48xf32, #tpu.memory_space<vmem>>, vector<1x16x48xf32>,
    return
  }
  func.func @transform_0(%arg0: i32) -> (i32, i32, i32) {
    %c0_i32 = arith.constant 0 : i32
    %c0_i32_0 = arith.constant 0 : i32
    %c0_i32_1 = arith.constant 0 : i32
    return %arg0, %c0_i32, %c0_i32_0 : i32, i32, i32
  }
  func.func @transform_1(%arg0: i32) -> (i32, i32) {
    %c0_i32 = arith.constant 0 : i32
    %c0_i32_0 = arith.constant 0 : i32
    %c0_i32_1 = arith.constant 0 : i32
    return %c0_i32, %c0_i32_0 : i32, i32
  }
  func.func @transform_2(%arg0: i32) -> (i32, i32) {
    %c0_i32 = arith.constant 0 : i32
    %c0_i32_0 = arith.constant 0 : i32
    %c0_i32_1 = arith.constant 0 : i32
    return %c0_i32, %c0_i32_0 : i32, i32
  }
  func.func @transform_3(%arg0: i32) -> (i32, i32) {
    %c0_i32 = arith.constant 0 : i32
    %c0_i32_0 = arith.constant 0 : i32
    %c0_i32_1 = arith.constant 0 : i32
    return %c0_i32, %c0_i32_0 : i32, i32
  }
  func.func @transform_4(%arg0: i32) -> (i32, i32) {
    %c0_i32 = arith.constant 0 : i32
    %c0_i32_0 = arith.constant 0 : i32
    %c0_i32_1 = arith.constant 0 : i32
    return %c0_i32, %c0_i32_0 : i32, i32
  }
  func.func @transform_5(%arg0: i32) -> (i32, i32) {
    %c0_i32 = arith.constant 0 : i32
    %c0_i32_0 = arith.constant 0 : i32
    %c0_i32_1 = arith.constant 0 : i32
    return %c0_i32, %c0_i32_0 : i32, i32
  }
  func.func @transform_6(%arg0: i32) -> (i32, i32) {
    %c0_i32 = arith.constant 0 : i32
    %c0_i32_0 = arith.constant 0 : i32
    %c0_i32_1 = arith.constant 0 : i32
    return %c0_i32, %c0_i32_0 : i32, i32
  }
  func.func @transform_7(%arg0: i32) -> (i32, i32) {
    %c0_i32 = arith.constant 0 : i32
    %c0_i32_0 = arith.constant 0 : i32
    %c0_i32_1 = arith.constant 0 : i32
    return %c0_i32, %c0_i32_0 : i32, i32
  }
  func.func @transform_8(%arg0: i32) -> (i32, i32) {
    %c0_i32 = arith.constant 0 : i32
    %c0_i32_0 = arith.constant 0 : i32
    %c0_i32_1 = arith.constant 0 : i32
    return %c0_i32, %c0_i32_0 : i32, i32
  }
  func.func @transform_9(%arg0: i32) -> (i32, i32) {
    %c0_i32 = arith.constant 0 : i32
    %c0_i32_0 = arith.constant 0 : i32
    %c0_i32_1 = arith.constant 0 : i32
    return %c0_i32, %c0_i32_0 : i32, i32
  }
  func.func @transform_10(%arg0: i32) -> (i32, i32) {
    %c0_i32 = arith.constant 0 : i32
    %c0_i32_0 = arith.constant 0 : i32
    %c0_i32_1 = arith.constant 0 : i32
    return %c0_i32, %c0_i32_0 : i32, i32
  }
  func.func @transform_11(%arg0: i32) -> (i32, i32, i32) {
    %c0_i32 = arith.constant 0 : i32
    %c0_i32_0 = arith.constant 0 : i32
    %c0_i32_1 = arith.constant 0 : i32
    return %arg0, %c0_i32, %c0_i32_0 : i32, i32, i32
  }
}

</mosaic_0001>

<llo_original>
// kernel: tpu_custom_call.1
$region0: #{tpu_custom_call.1}
  #allocation0 [shape = 'u32[]', space=smem, size = 0x4, offset = 0x4, fixed_abs, tag = 'smem constant byte address 0x4 - core index']
  #allocation1 [shape = 'u32[144,128]{1,0:T(1,128)}', space=vmem, size = 0x12000, scoped, tag = 'internal scratch']
  #allocation2 [shape = 'f32[16,128]{1,0:T(8,128)}', space=vmem, size = 0x2000, scoped, tag = 'scratch operand']
  #allocation3 [shape = 'f32[16,32]{1,0:T(8,128)}', space=vmem, size = 0x2000, scoped, tag = 'scratch operand']
  %s0 = inlined_call_operand.hbm [shape: f32[1,16,32], index: 0, kind: input, shape index: {}]
  %s1 = inlined_call_operand.hbm [shape: f32[1,32], index: 1, kind: input, shape index: {}]
  %s2 = inlined_call_operand.hbm [shape: f32[1,32], index: 2, kind: input, shape index: {}]
  %s3 = inlined_call_operand.hbm [shape: f32[32,128], index: 3, kind: input, shape index: {}]
  %s4 = inlined_call_operand.hbm [shape: f32[32,128], index: 4, kind: input, shape index: {}]
  %s5 = inlined_call_operand.hbm [shape: f32[1,128], index: 5, kind: input, shape index: {}]
  %s6 = inlined_call_operand.hbm [shape: f32[32,128], index: 6, kind: input, shape index: {}]
  %s7 = inlined_call_operand.hbm [shape: f32[32,128], index: 7, kind: input, shape index: {}]
  %s8 = inlined_call_operand.hbm [shape: f32[1,128], index: 8, kind: input, shape index: {}]
  %s9 = inlined_call_operand.hbm [shape: f32[32,48], index: 9, kind: input, shape index: {}]
  %s10 = inlined_call_operand.hbm [shape: f32[1,48], index: 10, kind: input, shape index: {}]
  %s11 = inlined_call_operand.hbm [shape: f32[1,16,48], index: 11, kind: output, shape index: {}]
  %s12 = sld [smem:[#allocation0]]
  $region98: #{tpu_custom_call.1} parent=0
    _
  %s14 = ssub.s32 1, %s12
  %s15 = scalar_select 0, %s14, %s12
  $region1: #{tpu_custom_call.1} parent=0
    #allocation4 [shape = 'u8[8192]{0}', space=vmem, size = 0x2000, scoped, tag = 'input window, operand 0, single buffered']
    #allocation5 [shape = 's32[1]{0}', space=sflag, size = 0x4, scoped, tag = 'scoped memory for tpu_custom_call.1']
    #allocation6 [shape = 's32[1]{0}', space=sflag, size = 0x4, scoped, tag = 'scoped memory for tpu_custom_call.1']
    #allocation7 [shape = 'u8[512]{0}', space=vmem, size = 0x400, scoped, tag = 'input window, operand 1, single buffered']
    #allocation8 [shape = 's32[1]{0}', space=sflag, size = 0x4, scoped, tag = 'scoped memory for tpu_custom_call.1']
    #allocation9 [shape = 'u8[512]{0}', space=vmem, size = 0x400, scoped, tag = 'input window, operand 2, single buffered']
    #allocation10 [shape = 'u8[16384]{0}', space=vmem, size = 0x4000, scoped, tag = 'input window, operand 3, single buffered']
    #allocation11 [shape = 's32[1]{0}', space=sflag, size = 0x4, scoped, tag = 'scoped memory for tpu_custom_call.1']
    #allocation12 [shape = 'u8[16384]{0}', space=vmem, size = 0x4000, scoped, tag = 'input window, operand 4, single buffered']
    #allocation13 [shape = 'u8[512]{0}', space=vmem, size = 0x400, scoped, tag = 'input window, operand 5, single buffered']
    #allocation14 [shape = 's32[1]{0}', space=sflag, size = 0x4, scoped, tag = 'scoped memory for tpu_custom_call.1']
    #allocation15 [shape = 'u8[16384]{0}', space=vmem, size = 0x4000, scoped, tag = 'input window, operand 6, single buffered']
    #allocation16 [shape = 'u8[16384]{0}', space=vmem, size = 0x4000, scoped, tag = 'input window, operand 7, single buffered']
    #allocation17 [shape = 's32[1]{0}', space=sflag, size = 0x4, scoped, tag = 'scoped memory for tpu_custom_call.1']
    #allocation18 [shape = 'u8[512]{0}', space=vmem, size = 0x400, scoped, tag = 'input window, operand 8, single buffered']
    #allocation19 [shape = 'u8[16384]{0}', space=vmem, size = 0x4000, scoped, tag = 'input window, operand 9, single buffered']
    #allocation20 [shape = 's32[1]{0}', space=sflag, size = 0x4, scoped, tag = 'scoped memory for tpu_custom_call.1']
    #allocation21 [shape = 'u8[512]{0}', space=vmem, size = 0x400, scoped, tag = 'input window, operand 10, single buffered']
    #allocation22 [shape = 'u8[8192]{0}', space=vmem, size = 0x2000, scoped, tag = 'output window, operand 0, single buffered']
    %16 = vsyncpa [#allocation5], 0
    %17 = vsyncpa [#allocation8], 0
    %18 = vsyncpa [#allocation11], 0
    %19 = vsyncpa [#allocation14], 0
    %20 = vsyncpa [#allocation17], 0
    %21 = vsyncpa [#allocation20], 0
    %22 = vsyncpa [#allocation6], 0
    // Predicated region
    $region2: #{tpu_custom_call.1} parent=1 // pred_check
      _
    $region3: #{tpu_custom_call.1} parent=1 // pred_check_branch
      %24 = sbr.rel (0) target = $region5
    $region4: #{tpu_custom_call.1} parent=1 // pred_region
      %s26 = ssub.s32 256, 256
      %27 = vsyncadd [#allocation5], %s26
      %s28 = sshll.u32 [#allocation4], 4
      %s29 = int_to_ptr.vmem [resolvable:$true] %s28
      %34 = dma.hbm_to_vmem [thread:$0]  %s0, 256, %s29, [#allocation5], 128, 128, 8
    $region5: #{tpu_custom_call.1} parent=1 // pred_fallthru
      _
    // Predicated region
    $region6: #{tpu_custom_call.1} parent=1 // pred_check
      _
    $region7: #{tpu_custom_call.1} parent=1 // pred_check_branch
      %36 = sbr.rel (0) target = $region9
    $region8: #{tpu_custom_call.1} parent=1 // pred_region
      %s38 = ssub.s32 16, 16
      %39 = vsyncadd [#allocation8], %s38
      %s41 = sshll.u32 [#allocation7], 4
      %s42 = int_to_ptr.vmem [resolvable:$true] %s41
      %44 = dma.hbm_to_vmem [thread:$0]  %s1, 16, %s42, [#allocation8]
    $region9: #{tpu_custom_call.1} parent=1 // pred_fallthru
      _
    // Predicated region
    $region10: #{tpu_custom_call.1} parent=1 // pred_check
      _
    $region11: #{tpu_custom_call.1} parent=1 // pred_check_branch
      %46 = sbr.rel (0) target = $region13
    $region12: #{tpu_custom_call.1} parent=1 // pred_region
      %s48 = ssub.s32 16, 16
      %49 = vsyncadd [#allocation8], %s48
      %s51 = sshll.u32 [#allocation9], 4
      %s52 = int_to_ptr.vmem [resolvable:$true] %s51
      %54 = dma.hbm_to_vmem [thread:$0]  %s2, 16, %s52, [#allocation8]
    $region13: #{tpu_custom_call.1} parent=1 // pred_fallthru
      _
    // Predicated region
    $region14: #{tpu_custom_call.1} parent=1 // pred_check
      _
    $region15: #{tpu_custom_call.1} parent=1 // pred_check_branch
      %56 = sbr.rel (0) target = $region17
    $region16: #{tpu_custom_call.1} parent=1 // pred_region
      %s58 = ssub.s32 512, 512
      %59 = vsyncadd [#allocation11], %s58
      %s60 = sshll.u32 [#allocation10], 4
      %s61 = int_to_ptr.vmem [resolvable:$true] %s60
      %66 = dma.hbm_to_vmem [thread:$0]  %s3, 512, %s61, [#allocation11], 128, 128, 8
    $region17: #{tpu_custom_call.1} parent=1 // pred_fallthru
      _
    // Predicated region
    $region18: #{tpu_custom_call.1} parent=1 // pred_check
      _
    $region19: #{tpu_custom_call.1} parent=1 // pred_check_branch
      %68 = sbr.rel (0) target = $region21
    $region20: #{tpu_custom_call.1} parent=1 // pred_region
      %s70 = ssub.s32 512, 512
      %71 = vsyncadd [#allocation11], %s70
      %s72 = sshll.u32 [#allocation12], 4
      %s73 = int_to_ptr.vmem [resolvable:$true] %s72
      %78 = dma.hbm_to_vmem [thread:$0]  %s4, 512, %s73, [#allocation11], 128, 128, 8
    $region21: #{tpu_custom_call.1} parent=1 // pred_fallthru
      _
    // Predicated region
    $region22: #{tpu_custom_call.1} parent=1 // pred_check
      _
    $region23: #{tpu_custom_call.1} parent=1 // pred_check_branch
      %80 = sbr.rel (0) target = $region25
    $region24: #{tpu_custom_call.1} parent=1 // pred_region
      %s82 = ssub.s32 16, 16
      %83 = vsyncadd [#allocation14], %s82
      %s85 = sshll.u32 [#allocation13], 4
      %s86 = int_to_ptr.vmem [resolvable:$true] %s85
      %88 = dma.hbm_to_vmem [thread:$0]  %s5, 16, %s86, [#allocation14]
    $region25: #{tpu_custom_call.1} parent=1 // pred_fallthru
      _
    // Predicated region
    $region26: #{tpu_custom_call.1} parent=1 // pred_check
      _
    $region27: #{tpu_custom_call.1} parent=1 // pred_check_branch
      %90 = sbr.rel (0) target = $region29
    $region28: #{tpu_custom_call.1} parent=1 // pred_region
      %s92 = ssub.s32 512, 512
      %93 = vsyncadd [#allocation14], %s92
      %s94 = sshll.u32 [#allocation15], 4
      %s95 = int_to_ptr.vmem [resolvable:$true] %s94
      %100 = dma.hbm_to_vmem [thread:$0]  %s6, 512, %s95, [#allocation14], 128, 128, 8
    $region29: #{tpu_custom_call.1} parent=1 // pred_fallthru
      _
    // Predicated region
    $region30: #{tpu_custom_call.1} parent=1 // pred_check
      _
    $region31: #{tpu_custom_call.1} parent=1 // pred_check_branch
      %102 = sbr.rel (0) target = $region33
    $region32: #{tpu_custom_call.1} parent=1 // pred_region
      %s104 = ssub.s32 512, 512
      %105 = vsyncadd [#allocation17], %s104
      %s106 = sshll.u32 [#allocation16], 4
      %s107 = int_to_ptr.vmem [resolvable:$true] %s106
      %112 = dma.hbm_to_vmem [thread:$0]  %s7, 512, %s107, [#allocation17], 128, 128, 8
    $region33: #{tpu_custom_call.1} parent=1 // pred_fallthru
      _
    // Predicated region
    $region34: #{tpu_custom_call.1} parent=1 // pred_check
      _
    $region35: #{tpu_custom_call.1} parent=1 // pred_check_branch
      %114 = sbr.rel (0) target = $region37
    $region36: #{tpu_custom_call.1} parent=1 // pred_region
      %s116 = ssub.s32 16, 16
      %117 = vsyncadd [#allocation17], %s116
      %s119 = sshll.u32 [#allocation18], 4
      %s120 = int_to_ptr.vmem [resolvable:$true] %s119
      %122 = dma.hbm_to_vmem [thread:$0]  %s8, 16, %s120, [#allocation17]
    $region37: #{tpu_custom_call.1} parent=1 // pred_fallthru
      _
    // Predicated region
    $region38: #{tpu_custom_call.1} parent=1 // pred_check
      _
    $region39: #{tpu_custom_call.1} parent=1 // pred_check_branch
      %124 = sbr.rel (0) target = $region41
    $region40: #{tpu_custom_call.1} parent=1 // pred_region
      %s126 = ssub.s32 512, 512
      %127 = vsyncadd [#allocation20], %s126
      %s128 = sshll.u32 [#allocation19], 4
      %s129 = int_to_ptr.vmem [resolvable:$true] %s128
      %134 = dma.hbm_to_vmem [thread:$0]  %s9, 512, %s129, [#allocation20], 128, 128, 8
    $region41: #{tpu_custom_call.1} parent=1 // pred_fallthru
      _
    // Predicated region
    $region42: #{tpu_custom_call.1} parent=1 // pred_check
      _
    $region43: #{tpu_custom_call.1} parent=1 // pred_check_branch
      %136 = sbr.rel (0) target = $region45
    $region44: #{tpu_custom_call.1} parent=1 // pred_region
      %s138 = ssub.s32 16, 16
      %139 = vsyncadd [#allocation20], %s138
      %s141 = sshll.u32 [#allocation21], 4
      %s142 = int_to_ptr.vmem [resolvable:$true] %s141
      %144 = dma.hbm_to_vmem [thread:$0]  %s10, 16, %s142, [#allocation20]
    $region45: #{tpu_custom_call.1} parent=1 // pred_fallthru
      _
    // Predicated region
    $region46: #{tpu_custom_call.1} parent=1 // pred_check
      _
    $region47: #{tpu_custom_call.1} parent=1 // pred_check_branch
      %146 = sbr.rel (0) target = $region49
    $region48: #{tpu_custom_call.1} parent=1 // pred_region
      %147 = dma.done [#allocation5], 256
    $region49: #{tpu_custom_call.1} parent=1 // pred_fallthru
      _
    // Predicated region
    $region50: #{tpu_custom_call.1} parent=1 // pred_check
      _
    $region51: #{tpu_custom_call.1} parent=1 // pred_check_branch
      %149 = sbr.rel (0) target = $region53
    $region52: #{tpu_custom_call.1} parent=1 // pred_region
      %150 = dma.done [#allocation8], 16
    $region53: #{tpu_custom_call.1} parent=1 // pred_fallthru
      _
    // Predicated region
    $region54: #{tpu_custom_call.1} parent=1 // pred_check
      _
    $region55: #{tpu_custom_call.1} parent=1 // pred_check_branch
      %152 = sbr.rel (0) target = $region57
    $region56: #{tpu_custom_call.1} parent=1 // pred_region
      %153 = dma.done [#allocation8], 16
    $region57: #{tpu_custom_call.1} parent=1 // pred_fallthru
      _
    // Predicated region
    $region58: #{tpu_custom_call.1} parent=1 // pred_check
      _
    $region59: #{tpu_custom_call.1} parent=1 // pred_check_branch
      %155 = sbr.rel (0) target = $region61
    $region60: #{tpu_custom_call.1} parent=1 // pred_region
      %156 = dma.done [#allocation11], 512
    $region61: #{tpu_custom_call.1} parent=1 // pred_fallthru
      _
    // Predicated region
    $region62: #{tpu_custom_call.1} parent=1 // pred_check
      _
    $region63: #{tpu_custom_call.1} parent=1 // pred_check_branch
      %158 = sbr.rel (0) target = $region65
    $region64: #{tpu_custom_call.1} parent=1 // pred_region
      %159 = dma.done [#allocation11], 512
    $region65: #{tpu_custom_call.1} parent=1 // pred_fallthru
      _
    // Predicated region
    $region66: #{tpu_custom_call.1} parent=1 // pred_check
      _
    $region67: #{tpu_custom_call.1} parent=1 // pred_check_branch
      %161 = sbr.rel (0) target = $region69
    $region68: #{tpu_custom_call.1} parent=1 // pred_region
      %162 = dma.done [#allocation14], 16
    $region69: #{tpu_custom_call.1} parent=1 // pred_fallthru
      _
    // Predicated region
    $region70: #{tpu_custom_call.1} parent=1 // pred_check
      _
    $region71: #{tpu_custom_call.1} parent=1 // pred_check_branch
      %164 = sbr.rel (0) target = $region73
    $region72: #{tpu_custom_call.1} parent=1 // pred_region
      %165 = dma.done [#allocation14], 512
    $region73: #{tpu_custom_call.1} parent=1 // pred_fallthru
      _
    // Predicated region
    $region74: #{tpu_custom_call.1} parent=1 // pred_check
      _
    $region75: #{tpu_custom_call.1} parent=1 // pred_check_branch
      %167 = sbr.rel (0) target = $region77
    $region76: #{tpu_custom_call.1} parent=1 // pred_region
      %168 = dma.done [#allocation17], 512
    $region77: #{tpu_custom_call.1} parent=1 // pred_fallthru
      _
    // Predicated region
    $region78: #{tpu_custom_call.1} parent=1 // pred_check
      _
    $region79: #{tpu_custom_call.1} parent=1 // pred_check_branch
      %170 = sbr.rel (0) target = $region81
    $region80: #{tpu_custom_call.1} parent=1 // pred_region
      %171 = dma.done [#allocation17], 16
    $region81: #{tpu_custom_call.1} parent=1 // pred_fallthru
      _
    // Predicated region
    $region82: #{tpu_custom_call.1} parent=1 // pred_check
      _
    $region83: #{tpu_custom_call.1} parent=1 // pred_check_branch
      %173 = sbr.rel (0) target = $region85
    $region84: #{tpu_custom_call.1} parent=1 // pred_region
      %174 = dma.done [#allocation20], 512
    $region85: #{tpu_custom_call.1} parent=1 // pred_fallthru
      _
    // Predicated region
    $region86: #{tpu_custom_call.1} parent=1 // pred_check
      _
    $region87: #{tpu_custom_call.1} parent=1 // pred_check_branch
      %176 = sbr.rel (0) target = $region89
    $region88: #{tpu_custom_call.1} parent=1 // pred_region
      %177 = dma.done [#allocation20], 16
    $region89: #{tpu_custom_call.1} parent=1 // pred_fallthru
      _
    %v178 = vld [vmem:[#allocation4] sm:$0xff]
    %v179 = vld [vmem:[#allocation4 + $0x8] sm:$0xff]
    %vm180 = vcmask 261120
    %v181 = vsel %vm180, %v178, 0.0
    %182 = vadd.xlane.f32.xlu0 %v181
    %v183 = vpop.xlane.xlu0 %182
    %v184 = vsel %vm180, %v179, 0.0
    %185 = vadd.xlane.f32.xlu0 %v184
    %v186 = vpop.xlane.xlu0 %185
    %v187 = vrcp.pop 32.0
    %v188 = vmul.f32 %v183, %v187
    %v189 = vmul.f32 %v186, %v187
    %v190 = vsub.f32 %v178, %v188
    %v191 = vsub.f32 %v179, %v189
    %v192 = vmul.f32 %v190, %v190
    %v193 = vmul.f32 %v191, %v191
    %v194 = vsel %vm180, %v192, 0.0
    %195 = vadd.xlane.f32.xlu0 %v194
    %v196 = vpop.xlane.xlu0 %195
    %v197 = vsel %vm180, %v193, 0.0
    %198 = vadd.xlane.f32.xlu0 %v197
    %v199 = vpop.xlane.xlu0 %198
    %v200 = vmul.f32 %v196, %v187
    %v201 = vmul.f32 %v199, %v187
    %v202 = vadd.f32 %v200, 1e-05
    %v203 = vadd.f32 %v201, 1e-05
    %v204 = vrsqrt.pop %v202
    %v205 = vrsqrt.pop %v203
    %v206 = vmul.f32 %v190, %v204
    %v207 = vmul.f32 %v191, %v205
    %v208 = vld [vmem:[#allocation7] sm:$0x1]
    %v210 = vlaneseq
    %v211 = vshrl.u32 %v210, 7
    %v212 = vsub.s32 0, %v211
    %v213 = vrot.slane %v208, %v212
    %v215 = vmul.f32 %v206, %v213
    %v216 = vmul.f32 %v207, %v213
    %v217 = vld [vmem:[#allocation9] sm:$0x1]
    %v219 = vlaneseq
    %v220 = vshrl.u32 %v219, 7
    %v221 = vsub.s32 0, %v220
    %v222 = vrot.slane %v217, %v221
    %v224 = vadd.f32 %v215, %v222
    %v225 = vadd.f32 %v216, %v222
    %v226 = vld [vmem:[#allocation10] sm:$0xff]
    %v227 = vld [vmem:[#allocation10 + $0x8] sm:$0xff]
    %v228 = vld [vmem:[#allocation10 + $0x10] sm:$0xff]
    %v229 = vld [vmem:[#allocation10 + $0x18] sm:$0xff]
    %v230 = vld [vmem:[#allocation13] sm:$0x1]
    %v232 = vlaneseq
    %v233 = vshrl.u32 %v232, 7
    %v234 = vsub.s32 0, %v233
    %v235 = vrot.slane %v230, %v234
    %v238 = vsel %vm180, %v224, 0
    %v241 = vsel %vm180, %v225, 0
    %243 = vmatprep.subr.mxu0 0.0
    %244 = vmatpush1.msra.mxu0 %v226
    %245 = vmatprep.subr.mxu0 0.0
    %246 = vmatpush1.msra.mxu0 %v227
    %247 = vmatprep.subr.mxu0 0.0
    %248 = vmatpush1.msra.mxu0 %v228
    %249 = vmatprep.subr.mxu0 0.0
    %250 = vmatpush1.msra.mxu0 %v229
    %251 = vmatprep.subr.mxu0 0.0
    %252 = vmatpush1.msra.mxu0 0.0
    %253 = vmatprep.subr.mxu0 0.0
    %254 = vmatpush1.msra.mxu0 0.0
    %255 = vmatprep.subr.mxu0 0.0
    %256 = vmatpush1.msra.mxu0 0.0
    %257 = vmatprep.subr.mxu0 0.0
    %258 = vmatpush1.msra.mxu0 0.0
    %259 = vmatprep.subr.mxu0 0.0
    %260 = vmatpush1.msra.mxu0 0.0
    %261 = vmatprep.subr.mxu0 0.0
    %262 = vmatpush1.msra.mxu0 0.0
    %263 = vmatprep.subr.mxu0 0.0
    %264 = vmatpush1.msra.mxu0 0.0
    %265 = vmatprep.subr.mxu0 0.0
    %266 = vmatpush1.msra.mxu0 0.0
    %267 = vmatprep.subr.mxu0 0.0
    %268 = vmatpush1.msra.mxu0 0.0
    %269 = vmatprep.subr.mxu0 0.0
    %270 = vmatpush1.msra.mxu0 0.0
    %271 = vmatprep.subr.mxu0 0.0
    %272 = vmatpush1.msra.mxu0 0.0
    %273 = vmatprep.subr.mxu0 0.0
    %274 = vmatpush1.msra.mxu0 0.0
    %275 = vmatprep.subr.mxu0 0.0
    %276 = vmatpush1.msra.mxu0 0.0
    %277 = vmatprep.subr.mxu0 0.0
    %278 = vmatpush1.msra.mxu0 0.0
    %279 = vmatprep.subr.mxu0 0.0
    %280 = vmatpush1.msra.mxu0 0.0
    %281 = vmatprep.subr.mxu0 0.0
    %282 = vmatpush1.msra.mxu0 0.0
    %283 = vmatprep.subr.mxu0 0.0
    %284 = vmatpush1.msra.mxu0 0.0
    %285 = vmatprep.subr.mxu0 0.0
    %286 = vmatpush1.msra.mxu0 0.0
    %287 = vmatprep.subr.mxu0 0.0
    %288 = vmatpush1.msra.mxu0 0.0
    %289 = vmatprep.subr.mxu0 0.0
    %290 = vmatpush1.msra.mxu0 0.0
    %291 = vmatprep.subr.mxu0 0.0
    %292 = vmatpush1.msra.mxu0 0.0
    %293 = vmatprep.subr.mxu0 0.0
    %294 = vmatpush1.msra.mxu0 0.0
    %295 = vmatprep.subr.mxu0 0.0
    %296 = vmatpush1.msra.mxu0 0.0
    %297 = vmatprep.subr.mxu0 0.0
    %298 = vmatpush1.msra.mxu0 0.0
    %299 = vmatprep.subr.mxu0 0.0
    %300 = vmatpush1.msra.mxu0 0.0
    %301 = vmatprep.subr.mxu0 0.0
    %302 = vmatpush1.msra.mxu0 0.0
    %303 = vmatprep.subr.mxu0 0.0
    %304 = vmatpush1.msra.mxu0 0.0
    %305 = vmatprep.subr.mxu0 0.0
    %306 = vmatpush1.msra.mxu0 0.0
    %307 = vmatprep.mubr.f32.mxu0 0.0
    %308 = vmatmul.mubr.f32.gmra.mrb[0].mxu0 %v238
    %v309 = vpop.f32.mrb[0].mxu0
    %v310 = vadd.f32 %v235, %v309
    %v311 = vpop.f32.mrb[0].mxu0
    %312 = vmatprep.mubr.f32.mxu0 0.0
    %313 = vmatmul.mubr.f32.gmra.mrb[0].mxu0 %v241
    %v314 = vpop.f32.mrb[0].mxu0
    %v315 = vadd.f32 %v235, %v314
    %v316 = vpop.f32.mrb[0].mxu0
    %317 = vdwg.mxu0
    %318 = vst [vmem:[#allocation2] sm:$0xff] %v310
    %319 = vst [vmem:[#allocation2 + $0x8] sm:$0xff] %v315
    %v320 = vld [vmem:[#allocation12] sm:$0xff]
    %v321 = vld [vmem:[#allocation12 + $0x8] sm:$0xff]
    %v322 = vld [vmem:[#allocation12 + $0x10] sm:$0xff]
    %v323 = vld [vmem:[#allocation12 + $0x18] sm:$0xff]
    %v324 = vld [vmem:[#allocation2] sm:$0x3]
    %v326 = vsel %vm180, 0.0, 0
    %328 = vmatprep.subr.mxu0 0.0
    %329 = vmatpush1.msra.mxu0 %v320
    %330 = vmatprep.subr.mxu0 0.0
    %331 = vmatpush1.msra.mxu0 %v321
    %332 = vmatprep.subr.mxu0 0.0
    %333 = vmatpush1.msra.mxu0 %v322
    %334 = vmatprep.subr.mxu0 0.0
    %335 = vmatpush1.msra.mxu0 %v323
    %336 = vmatprep.subr.mxu0 0.0
    %337 = vmatpush1.msra.mxu0 0.0
    %338 = vmatprep.subr.mxu0 0.0
    %339 = vmatpush1.msra.mxu0 0.0
    %340 = vmatprep.subr.mxu0 0.0
    %341 = vmatpush1.msra.mxu0 0.0
    %342 = vmatprep.subr.mxu0 0.0
    %343 = vmatpush1.msra.mxu0 0.0
    %344 = vmatprep.subr.mxu0 0.0
    %345 = vmatpush1.msra.mxu0 0.0
    %346 = vmatprep.subr.mxu0 0.0
    %347 = vmatpush1.msra.mxu0 0.0
    %348 = vmatprep.subr.mxu0 0.0
    %349 = vmatpush1.msra.mxu0 0.0
    %350 = vmatprep.subr.mxu0 0.0
    %351 = vmatpush1.msra.mxu0 0.0
    %352 = vmatprep.subr.mxu0 0.0
    %353 = vmatpush1.msra.mxu0 0.0
    %354 = vmatprep.subr.mxu0 0.0
    %355 = vmatpush1.msra.mxu0 0.0
    %356 = vmatprep.subr.mxu0 0.0
    %357 = vmatpush1.msra.mxu0 0.0
    %358 = vmatprep.subr.mxu0 0.0
    %359 = vmatpush1.msra.mxu0 0.0
    %360 = vmatprep.subr.mxu0 0.0
    %361 = vmatpush1.msra.mxu0 0.0
    %362 = vmatprep.subr.mxu0 0.0
    %363 = vmatpush1.msra.mxu0 0.0
    %364 = vmatprep.subr.mxu0 0.0
    %365 = vmatpush1.msra.mxu0 0.0
    %366 = vmatprep.subr.mxu0 0.0
    %367 = vmatpush1.msra.mxu0 0.0
    %368 = vmatprep.subr.mxu0 0.0
    %369 = vmatpush1.msra.mxu0 0.0
    %370 = vmatprep.subr.mxu0 0.0
    %371 = vmatpush1.msra.mxu0 0.0
    %372 = vmatprep.subr.mxu0 0.0
    %373 = vmatpush1.msra.mxu0 0.0
    %374 = vmatprep.subr.mxu0 0.0
    %375 = vmatpush1.msra.mxu0 0.0
    %376 = vmatprep.subr.mxu0 0.0
    %377 = vmatpush1.msra.mxu0 0.0
    %378 = vmatprep.subr.mxu0 0.0
    %379 = vmatpush1.msra.mxu0 0.0
    %380 = vmatprep.subr.mxu0 0.0
    %381 = vmatpush1.msra.mxu0 0.0
    %382 = vmatprep.subr.mxu0 0.0
    %383 = vmatpush1.msra.mxu0 0.0
    %384 = vmatprep.subr.mxu0 0.0
    %385 = vmatpush1.msra.mxu0 0.0
    %386 = vmatprep.subr.mxu0 0.0
    %387 = vmatpush1.msra.mxu0 0.0
    %388 = vmatprep.subr.mxu0 0.0
    %389 = vmatpush1.msra.mxu0 0.0
    %390 = vmatprep.subr.mxu0 0.0
    %391 = vmatpush1.msra.mxu0 0.0
    %392 = vmatprep.mubr.f32.mxu0 0.0
    %393 = vmatmul.mubr.f32.gmra.mrb[0].mxu0 %v326
    %v394 = vpop.f32.mrb[0].mxu0
    %v395 = vadd.f32 0.0, %v394
    %v396 = vpop.f32.mrb[0].mxu0
    %397 = vdwg.mxu0
    %v398 = vadd.f32 %v324, %v395
    %v399 = vxor.u32 %v398, 2147483648
    %v400 = vmul.f32 %v399, 1.442695
    %v401 = vpow.pop %v400
    %v402 = vadd.f32 %v401, 1.0
    %v403 = vrcp.pop %v402
    %v404 = vmul.f32 1.0, %v403
    %v405 = vtanh.pop %v398
    %v406 = vmul.f32 %v404, 0.0
    %408 = vrot.lane.b32.xlu0 %v405, 64
    %v409 = vpop.permute.xlu0 %408
    %v411 = vmul.f32 %v404, %v409
    %413 = vrot.lane.b32.xlu0 %v411, 32
    %v414 = vpop.permute.xlu0 %413
    %v416 = vadd.f32 %v406, %v414
    %v417 = vtanh.pop %v416
    %419 = vrot.lane.b32.xlu0 %v417, 64
    %v420 = vpop.permute.xlu0 %419
    %v422 = vmul.f32 %v404, %v420
    %424 = vrot.lane.b32.xlu0 %v422, 32
    %v425 = vpop.permute.xlu0 %424
    %vm427 = vcmask 254976
    %428 = vst.msk [vmem:[#allocation3] sm:$0x3] %vm427, %v425
    %v429 = vld [vmem:[#allocation2 + $0x2] sm:$0x3]
    %v430 = vsel %vm180, %v425, 0
    %432 = vmatprep.subr.mxu0 0.0
    %433 = vmatpush1.msra.mxu0 %v320
    %434 = vmatprep.subr.mxu0 0.0
    %435 = vmatpush1.msra.mxu0 %v321
    %436 = vmatprep.subr.mxu0 0.0
    %437 = vmatpush1.msra.mxu0 %v322
    %438 = vmatprep.subr.mxu0 0.0
    %439 = vmatpush1.msra.mxu0 %v323
    %440 = vmatprep.subr.mxu0 0.0
    %441 = vmatpush1.msra.mxu0 0.0
    %442 = vmatprep.subr.mxu0 0.0
    %443 = vmatpush1.msra.mxu0 0.0
    %444 = vmatprep.subr.mxu0 0.0
    %445 = vmatpush1.msra.mxu0 0.0
    %446 = vmatprep.subr.mxu0 0.0
    %447 = vmatpush1.msra.mxu0 0.0
    %448 = vmatprep.subr.mxu0 0.0
    %449 = vmatpush1.msra.mxu0 0.0
    %450 = vmatprep.subr.mxu0 0.0
    %451 = vmatpush1.msra.mxu0 0.0
    %452 = vmatprep.subr.mxu0 0.0
    %453 = vmatpush1.msra.mxu0 0.0
    %454 = vmatprep.subr.mxu0 0.0
    %455 = vmatpush1.msra.mxu0 0.0
    %456 = vmatprep.subr.mxu0 0.0
    %457 = vmatpush1.msra.mxu0 0.0
    %458 = vmatprep.subr.mxu0 0.0
    %459 = vmatpush1.msra.mxu0 0.0
    %460 = vmatprep.subr.mxu0 0.0
    %461 = vmatpush1.msra.mxu0 0.0
    %462 = vmatprep.subr.mxu0 0.0
    %463 = vmatpush1.msra.mxu0 0.0
    %464 = vmatprep.subr.mxu0 0.0
    %465 = vmatpush1.msra.mxu0 0.0
    %466 = vmatprep.subr.mxu0 0.0
    %467 = vmatpush1.msra.mxu0 0.0
    %468 = vmatprep.subr.mxu0 0.0
    %469 = vmatpush1.msra.mxu0 0.0
    %470 = vmatprep.subr.mxu0 0.0
    %471 = vmatpush1.msra.mxu0 0.0
    %472 = vmatprep.subr.mxu0 0.0
    %473 = vmatpush1.msra.mxu0 0.0
    %474 = vmatprep.subr.mxu0 0.0
    %475 = vmatpush1.msra.mxu0 0.0
    %476 = vmatprep.subr.mxu0 0.0
    %477 = vmatpush1.msra.mxu0 0.0
    %478 = vmatprep.subr.mxu0 0.0
    %479 = vmatpush1.msra.mxu0 0.0
    %480 = vmatprep.subr.mxu0 0.0
    %481 = vmatpush1.msra.mxu0 0.0
    %482 = vmatprep.subr.mxu0 0.0
    %483 = vmatpush1.msra.mxu0 0.0
    %484 = vmatprep.subr.mxu0 0.0
    %485 = vmatpush1.msra.mxu0 0.0
    %486 = vmatprep.subr.mxu0 0.0
    %487 = vmatpush1.msra.mxu0 0.0
    %488 = vmatprep.subr.mxu0 0.0
    %489 = vmatpush1.msra.mxu0 0.0
    %490 = vmatprep.subr.mxu0 0.0
    %491 = vmatpush1.msra.mxu0 0.0
    %492 = vmatprep.subr.mxu0 0.0
    %493 = vmatpush1.msra.mxu0 0.0
    %494 = vmatprep.subr.mxu0 0.0
    %495 = vmatpush1.msra.mxu0 0.0
    %496 = vmatprep.mubr.f32.mxu0 0.0
    %497 = vmatmul.mubr.f32.gmra.mrb[0].mxu0 %v430
    %v498 = vpop.f32.mrb[0].mxu0
    %v499 = vadd.f32 0.0, %v498
    %v500 = vpop.f32.mrb[0].mxu0
    %501 = vdwg.mxu0
    %v502 = vadd.f32 %v429, %v499
    %v503 = vxor.u32 %v502, 2147483648
    %v504 = vmul.f32 %v503, 1.442695
    %v505 = vpow.pop %v504
    %v506 = vadd.f32 %v505, 1.0
    %v507 = vrcp.pop %v506
    %v508 = vmul.f32 1.0, %v507
    %v509 = vtanh.pop %v502
    %v510 = vmul.f32 %v508, %v416
    %512 = vrot.lane.b32.xlu0 %v509, 64
    %v513 = vpop.permute.xlu0 %512
    %v515 = vmul.f32 %v508, %v513
    %517 = vrot.lane.b32.xlu0 %v515, 32
    %v518 = vpop.permute.xlu0 %517
    %v520 = vadd.f32 %v510, %v518
    %v521 = vtanh.pop %v520
    %523 = vrot.lane.b32.xlu0 %v521, 64
    %v524 = vpop.permute.xlu0 %523
    %v526 = vmul.f32 %v508, %v524
    %528 = vrot.lane.b32.xlu0 %v526, 32
    %v529 = vpop.permute.xlu0 %528
    %531 = vst.msk [vmem:[#allocation3 + $0x2] sm:$0x3] %vm427, %v529
    %v532 = vld [vmem:[#allocation2 + $0x4] sm:$0x3]
    %v533 = vsel %vm180, %v529, 0
    %535 = vmatprep.subr.mxu0 0.0
    %536 = vmatpush1.msra.mxu0 %v320
    %537 = vmatprep.subr.mxu0 0.0
    %538 = vmatpush1.msra.mxu0 %v321
    %539 = vmatprep.subr.mxu0 0.0
    %540 = vmatpush1.msra.mxu0 %v322
    %541 = vmatprep.subr.mxu0 0.0
    %542 = vmatpush1.msra.mxu0 %v323
    %543 = vmatprep.subr.mxu0 0.0
    %544 = vmatpush1.msra.mxu0 0.0
    %545 = vmatprep.subr.mxu0 0.0
    %546 = vmatpush1.msra.mxu0 0.0
    %547 = vmatprep.subr.mxu0 0.0
    %548 = vmatpush1.msra.mxu0 0.0
    %549 = vmatprep.subr.mxu0 0.0
    %550 = vmatpush1.msra.mxu0 0.0
    %551 = vmatprep.subr.mxu0 0.0
    %552 = vmatpush1.msra.mxu0 0.0
    %553 = vmatprep.subr.mxu0 0.0
    %554 = vmatpush1.msra.mxu0 0.0
    %555 = vmatprep.subr.mxu0 0.0
    %556 = vmatpush1.msra.mxu0 0.0
    %557 = vmatprep.subr.mxu0 0.0
    %558 = vmatpush1.msra.mxu0 0.0
    %559 = vmatprep.subr.mxu0 0.0
    %560 = vmatpush1.msra.mxu0 0.0
    %561 = vmatprep.subr.mxu0 0.0
    %562 = vmatpush1.msra.mxu0 0.0
    %563 = vmatprep.subr.mxu0 0.0
    %564 = vmatpush1.msra.mxu0 0.0
    %565 = vmatprep.subr.mxu0 0.0
    %566 = vmatpush1.msra.mxu0 0.0
    %567 = vmatprep.subr.mxu0 0.0
    %568 = vmatpush1.msra.mxu0 0.0
    %569 = vmatprep.subr.mxu0 0.0
    %570 = vmatpush1.msra.mxu0 0.0
    %571 = vmatprep.subr.mxu0 0.0
    %572 = vmatpush1.msra.mxu0 0.0
    %573 = vmatprep.subr.mxu0 0.0
    %574 = vmatpush1.msra.mxu0 0.0
    %575 = vmatprep.subr.mxu0 0.0
    %576 = vmatpush1.msra.mxu0 0.0
    %577 = vmatprep.subr.mxu0 0.0
    %578 = vmatpush1.msra.mxu0 0.0
    %579 = vmatprep.subr.mxu0 0.0
    %580 = vmatpush1.msra.mxu0 0.0
    %581 = vmatprep.subr.mxu0 0.0
    %582 = vmatpush1.msra.mxu0 0.0
    %583 = vmatprep.subr.mxu0 0.0
    %584 = vmatpush1.msra.mxu0 0.0
    %585 = vmatprep.subr.mxu0 0.0
    %586 = vmatpush1.msra.mxu0 0.0
    %587 = vmatprep.subr.mxu0 0.0
    %588 = vmatpush1.msra.mxu0 0.0
    %589 = vmatprep.subr.mxu0 0.0
    %590 = vmatpush1.msra.mxu0 0.0
    %591 = vmatprep.subr.mxu0 0.0
    %592 = vmatpush1.msra.mxu0 0.0
    %593 = vmatprep.subr.mxu0 0.0
    %594 = vmatpush1.msra.mxu0 0.0
    %595 = vmatprep.subr.mxu0 0.0
    %596 = vmatpush1.msra.mxu0 0.0
    %597 = vmatprep.subr.mxu0 0.0
    %598 = vmatpush1.msra.mxu0 0.0
    %599 = vmatprep.mubr.f32.mxu0 0.0
    %600 = vmatmul.mubr.f32.gmra.mrb[0].mxu0 %v533
    %v601 = vpop.f32.mrb[0].mxu0
    %v602 = vadd.f32 0.0, %v601
    %v603 = vpop.f32.mrb[0].mxu0
    %604 = vdwg.mxu0
    %v605 = vadd.f32 %v532, %v602
    %v606 = vxor.u32 %v605, 2147483648
    %v607 = vmul.f32 %v606, 1.442695
    %v608 = vpow.pop %v607
    %v609 = vadd.f32 %v608, 1.0
    %v610 = vrcp.pop %v609
    %v611 = vmul.f32 1.0, %v610
    %v612 = vtanh.pop %v605
    %v613 = vmul.f32 %v611, %v520
    %615 = vrot.lane.b32.xlu0 %v612, 64
    %v616 = vpop.permute.xlu0 %615
    %v618 = vmul.f32 %v611, %v616
    %620 = vrot.lane.b32.xlu0 %v618, 32
    %v621 = vpop.permute.xlu0 %620
    %v623 = vadd.f32 %v613, %v621
    %v624 = vtanh.pop %v623
    %626 = vrot.lane.b32.xlu0 %v624, 64
    %v627 = vpop.permute.xlu0 %626
    %v629 = vmul.f32 %v611, %v627
    %631 = vrot.lane.b32.xlu0 %v629, 32
    %v632 = vpop.permute.xlu0 %631
    %634 = vst.msk [vmem:[#allocation3 + $0x4] sm:$0x3] %vm427, %v632
    %v635 = vld [vmem:[#allocation2 + $0x6] sm:$0x3]
    %v636 = vsel %vm180, %v632, 0
    %638 = vmatprep.subr.mxu0 0.0
    %639 = vmatpush1.msra.mxu0 %v320
    %640 = vmatprep.subr.mxu0 0.0
    %641 = vmatpush1.msra.mxu0 %v321
    %642 = vmatprep.subr.mxu0 0.0
    %643 = vmatpush1.msra.mxu0 %v322
    %644 = vmatprep.subr.mxu0 0.0
    %645 = vmatpush1.msra.mxu0 %v323
    %646 = vmatprep.subr.mxu0 0.0
    %647 = vmatpush1.msra.mxu0 0.0
    %648 = vmatprep.subr.mxu0 0.0
    %649 = vmatpush1.msra.mxu0 0.0
    %650 = vmatprep.subr.mxu0 0.0
    %651 = vmatpush1.msra.mxu0 0.0
    %652 = vmatprep.subr.mxu0 0.0
    %653 = vmatpush1.msra.mxu0 0.0
    %654 = vmatprep.subr.mxu0 0.0
    %655 = vmatpush1.msra.mxu0 0.0
    %656 = vmatprep.subr.mxu0 0.0
    %657 = vmatpush1.msra.mxu0 0.0
    %658 = vmatprep.subr.mxu0 0.0
    %659 = vmatpush1.msra.mxu0 0.0
    %660 = vmatprep.subr.mxu0 0.0
    %661 = vmatpush1.msra.mxu0 0.0
    %662 = vmatprep.subr.mxu0 0.0
    %663 = vmatpush1.msra.mxu0 0.0
    %664 = vmatprep.subr.mxu0 0.0
    %665 = vmatpush1.msra.mxu0 0.0
    %666 = vmatprep.subr.mxu0 0.0
    %667 = vmatpush1.msra.mxu0 0.0
    %668 = vmatprep.subr.mxu0 0.0
    %669 = vmatpush1.msra.mxu0 0.0
    %670 = vmatprep.subr.mxu0 0.0
    %671 = vmatpush1.msra.mxu0 0.0
    %672 = vmatprep.subr.mxu0 0.0
    %673 = vmatpush1.msra.mxu0 0.0
    %674 = vmatprep.subr.mxu0 0.0
    %675 = vmatpush1.msra.mxu0 0.0
    %676 = vmatprep.subr.mxu0 0.0
    %677 = vmatpush1.msra.mxu0 0.0
    %678 = vmatprep.subr.mxu0 0.0
    %679 = vmatpush1.msra.mxu0 0.0
    %680 = vmatprep.subr.mxu0 0.0
    %681 = vmatpush1.msra.mxu0 0.0
    %682 = vmatprep.subr.mxu0 0.0
    %683 = vmatpush1.msra.mxu0 0.0
    %684 = vmatprep.subr.mxu0 0.0
    %685 = vmatpush1.msra.mxu0 0.0
    %686 = vmatprep.subr.mxu0 0.0
    %687 = vmatpush1.msra.mxu0 0.0
    %688 = vmatprep.subr.mxu0 0.0
    %689 = vmatpush1.msra.mxu0 0.0
    %690 = vmatprep.subr.mxu0 0.0
    %691 = vmatpush1.msra.mxu0 0.0
    %692 = vmatprep.subr.mxu0 0.0
    %693 = vmatpush1.msra.mxu0 0.0
    %694 = vmatprep.subr.mxu0 0.0
    %695 = vmatpush1.msra.mxu0 0.0
    %696 = vmatprep.subr.mxu0 0.0
    %697 = vmatpush1.msra.mxu0 0.0
    %698 = vmatprep.subr.mxu0 0.0
    %699 = vmatpush1.msra.mxu0 0.0
    %700 = vmatprep.subr.mxu0 0.0
    %701 = vmatpush1.msra.mxu0 0.0
    %702 = vmatprep.mubr.f32.mxu0 0.0
    %703 = vmatmul.mubr.f32.gmra.mrb[0].mxu0 %v636
    %v704 = vpop.f32.mrb[0].mxu0
    %v705 = vadd.f32 0.0, %v704
    %v706 = vpop.f32.mrb[0].mxu0
    %707 = vdwg.mxu0
    %v708 = vadd.f32 %v635, %v705
    %v709 = vxor.u32 %v708, 2147483648
    %v710 = vmul.f32 %v709, 1.442695
    %v711 = vpow.pop %v710
    %v712 = vadd.f32 %v711, 1.0
    %v713 = vrcp.pop %v712
    %v714 = vmul.f32 1.0, %v713
    %v715 = vtanh.pop %v708
    %v716 = vmul.f32 %v714, %v623
    %718 = vrot.lane.b32.xlu0 %v715, 64
    %v719 = vpop.permute.xlu0 %718
    %v721 = vmul.f32 %v714, %v719
    %723 = vrot.lane.b32.xlu0 %v721, 32
    %v724 = vpop.permute.xlu0 %723
    %v726 = vadd.f32 %v716, %v724
    %v727 = vtanh.pop %v726
    %729 = vrot.lane.b32.xlu0 %v727, 64
    %v730 = vpop.permute.xlu0 %729
    %v732 = vmul.f32 %v714, %v730
    %734 = vrot.lane.b32.xlu0 %v732, 32
    %v735 = vpop.permute.xlu0 %734
    %737 = vst.msk [vmem:[#allocation3 + $0x6] sm:$0x3] %vm427, %v735
    %v738 = vld [vmem:[#allocation2 + $0x8] sm:$0x3]
    %v739 = vsel %vm180, %v735, 0
    %741 = vmatprep.subr.mxu0 0.0
    %742 = vmatpush1.msra.mxu0 %v320
    %743 = vmatprep.subr.mxu0 0.0
    %744 = vmatpush1.msra.mxu0 %v321
    %745 = vmatprep.subr.mxu0 0.0
    %746 = vmatpush1.msra.mxu0 %v322
    %747 = vmatprep.subr.mxu0 0.0
    %748 = vmatpush1.msra.mxu0 %v323
    %749 = vmatprep.subr.mxu0 0.0
    %750 = vmatpush1.msra.mxu0 0.0
    %751 = vmatprep.subr.mxu0 0.0
    %752 = vmatpush1.msra.mxu0 0.0
    %753 = vmatprep.subr.mxu0 0.0
    %754 = vmatpush1.msra.mxu0 0.0
    %755 = vmatprep.subr.mxu0 0.0
    %756 = vmatpush1.msra.mxu0 0.0
    %757 = vmatprep.subr.mxu0 0.0
    %758 = vmatpush1.msra.mxu0 0.0
    %759 = vmatprep.subr.mxu0 0.0
    %760 = vmatpush1.msra.mxu0 0.0
    %761 = vmatprep.subr.mxu0 0.0
    %762 = vmatpush1.msra.mxu0 0.0
    %763 = vmatprep.subr.mxu0 0.0
    %764 = vmatpush1.msra.mxu0 0.0
    %765 = vmatprep.subr.mxu0 0.0
    %766 = vmatpush1.msra.mxu0 0.0
    %767 = vmatprep.subr.mxu0 0.0
    %768 = vmatpush1.msra.mxu0 0.0
    %769 = vmatprep.subr.mxu0 0.0
    %770 = vmatpush1.msra.mxu0 0.0
    %771 = vmatprep.subr.mxu0 0.0
    %772 = vmatpush1.msra.mxu0 0.0
    %773 = vmatprep.subr.mxu0 0.0
    %774 = vmatpush1.msra.mxu0 0.0
    %775 = vmatprep.subr.mxu0 0.0
    %776 = vmatpush1.msra.mxu0 0.0
    %777 = vmatprep.subr.mxu0 0.0
    %778 = vmatpush1.msra.mxu0 0.0
    %779 = vmatprep.subr.mxu0 0.0
    %780 = vmatpush1.msra.mxu0 0.0
    %781 = vmatprep.subr.mxu0 0.0
    %782 = vmatpush1.msra.mxu0 0.0
    %783 = vmatprep.subr.mxu0 0.0
    %784 = vmatpush1.msra.mxu0 0.0
    %785 = vmatprep.subr.mxu0 0.0
    %786 = vmatpush1.msra.mxu0 0.0
    %787 = vmatprep.subr.mxu0 0.0
    %788 = vmatpush1.msra.mxu0 0.0
    %789 = vmatprep.subr.mxu0 0.0
    %790 = vmatpush1.msra.mxu0 0.0
    %791 = vmatprep.subr.mxu0 0.0
    %792 = vmatpush1.msra.mxu0 0.0
    %793 = vmatprep.subr.mxu0 0.0
    %794 = vmatpush1.msra.mxu0 0.0
    %795 = vmatprep.subr.mxu0 0.0
    %796 = vmatpush1.msra.mxu0 0.0
    %797 = vmatprep.subr.mxu0 0.0
    %798 = vmatpush1.msra.mxu0 0.0
    %799 = vmatprep.subr.mxu0 0.0
    %800 = vmatpush1.msra.mxu0 0.0
    %801 = vmatprep.subr.mxu0 0.0
    %802 = vmatpush1.msra.mxu0 0.0
    %803 = vmatprep.subr.mxu0 0.0
    %804 = vmatpush1.msra.mxu0 0.0
    %805 = vmatprep.mubr.f32.mxu0 0.0
    %806 = vmatmul.mubr.f32.gmra.mrb[0].mxu0 %v739
    %v807 = vpop.f32.mrb[0].mxu0
    %v808 = vadd.f32 0.0, %v807
    %v809 = vpop.f32.mrb[0].mxu0
    %810 = vdwg.mxu0
    %v811 = vadd.f32 %v738, %v808
    %v812 = vxor.u32 %v811, 2147483648
    %v813 = vmul.f32 %v812, 1.442695
    %v814 = vpow.pop %v813
    %v815 = vadd.f32 %v814, 1.0
    %v816 = vrcp.pop %v815
    %v817 = vmul.f32 1.0, %v816
    %v818 = vtanh.pop %v811
    %v819 = vmul.f32 %v817, %v726
    %821 = vrot.lane.b32.xlu0 %v818, 64
    %v822 = vpop.permute.xlu0 %821
    %v824 = vmul.f32 %v817, %v822
    %826 = vrot.lane.b32.xlu0 %v824, 32
    %v827 = vpop.permute.xlu0 %826
    %v829 = vadd.f32 %v819, %v827
    %v830 = vtanh.pop %v829
    %832 = vrot.lane.b32.xlu0 %v830, 64
    %v833 = vpop.permute.xlu0 %832
    %v835 = vmul.f32 %v817, %v833
    %837 = vrot.lane.b32.xlu0 %v835, 32
    %v838 = vpop.permute.xlu0 %837
    %840 = vst.msk [vmem:[#allocation3 + $0x8] sm:$0x3] %vm427, %v838
    %v841 = vld [vmem:[#allocation2 + $0xa] sm:$0x3]
    %v842 = vsel %vm180, %v838, 0
    %844 = vmatprep.subr.mxu0 0.0
    %845 = vmatpush1.msra.mxu0 %v320
    %846 = vmatprep.subr.mxu0 0.0
    %847 = vmatpush1.msra.mxu0 %v321
    %848 = vmatprep.subr.mxu0 0.0
    %849 = vmatpush1.msra.mxu0 %v322
    %850 = vmatprep.subr.mxu0 0.0
    %851 = vmatpush1.msra.mxu0 %v323
    %852 = vmatprep.subr.mxu0 0.0
    %853 = vmatpush1.msra.mxu0 0.0
    %854 = vmatprep.subr.mxu0 0.0
    %855 = vmatpush1.msra.mxu0 0.0
    %856 = vmatprep.subr.mxu0 0.0
    %857 = vmatpush1.msra.mxu0 0.0
    %858 = vmatprep.subr.mxu0 0.0
    %859 = vmatpush1.msra.mxu0 0.0
    %860 = vmatprep.subr.mxu0 0.0
    %861 = vmatpush1.msra.mxu0 0.0
    %862 = vmatprep.subr.mxu0 0.0
    %863 = vmatpush1.msra.mxu0 0.0
    %864 = vmatprep.subr.mxu0 0.0
    %865 = vmatpush1.msra.mxu0 0.0
    %866 = vmatprep.subr.mxu0 0.0
    %867 = vmatpush1.msra.mxu0 0.0
    %868 = vmatprep.subr.mxu0 0.0
    %869 = vmatpush1.msra.mxu0 0.0
    %870 = vmatprep.subr.mxu0 0.0
    %871 = vmatpush1.msra.mxu0 0.0
    %872 = vmatprep.subr.mxu0 0.0
    %873 = vmatpush1.msra.mxu0 0.0
    %874 = vmatprep.subr.mxu0 0.0
    %875 = vmatpush1.msra.mxu0 0.0
    %876 = vmatprep.subr.mxu0 0.0
    %877 = vmatpush1.msra.mxu0 0.0
    %878 = vmatprep.subr.mxu0 0.0
    %879 = vmatpush1.msra.mxu0 0.0
    %880 = vmatprep.subr.mxu0 0.0
    %881 = vmatpush1.msra.mxu0 0.0
    %882 = vmatprep.subr.mxu0 0.0
    %883 = vmatpush1.msra.mxu0 0.0
    %884 = vmatprep.subr.mxu0 0.0
    %885 = vmatpush1.msra.mxu0 0.0
    %886 = vmatprep.subr.mxu0 0.0
    %887 = vmatpush1.msra.mxu0 0.0
    %888 = vmatprep.subr.mxu0 0.0
    %889 = vmatpush1.msra.mxu0 0.0
    %890 = vmatprep.subr.mxu0 0.0
    %891 = vmatpush1.msra.mxu0 0.0
    %892 = vmatprep.subr.mxu0 0.0
    %893 = vmatpush1.msra.mxu0 0.0
    %894 = vmatprep.subr.mxu0 0.0
    %895 = vmatpush1.msra.mxu0 0.0
    %896 = vmatprep.subr.mxu0 0.0
    %897 = vmatpush1.msra.mxu0 0.0
    %898 = vmatprep.subr.mxu0 0.0
    %899 = vmatpush1.msra.mxu0 0.0
    %900 = vmatprep.subr.mxu0 0.0
    %901 = vmatpush1.msra.mxu0 0.0
    %902 = vmatprep.subr.mxu0 0.0
    %903 = vmatpush1.msra.mxu0 0.0
    %904 = vmatprep.subr.mxu0 0.0
    %905 = vmatpush1.msra.mxu0 0.0
    %906 = vmatprep.subr.mxu0 0.0
    %907 = vmatpush1.msra.mxu0 0.0
    %908 = vmatprep.mubr.f32.mxu0 0.0
    %909 = vmatmul.mubr.f32.gmra.mrb[0].mxu0 %v842
    %v910 = vpop.f32.mrb[0].mxu0
    %v911 = vadd.f32 0.0, %v910
    %v912 = vpop.f32.mrb[0].mxu0
    %913 = vdwg.mxu0
    %v914 = vadd.f32 %v841, %v911
    %v915 = vxor.u32 %v914, 2147483648
    %v916 = vmul.f32 %v915, 1.442695
    %v917 = vpow.pop %v916
    %v918 = vadd.f32 %v917, 1.0
    %v919 = vrcp.pop %v918
    %v920 = vmul.f32 1.0, %v919
    %v921 = vtanh.pop %v914
    %v922 = vmul.f32 %v920, %v829
    %924 = vrot.lane.b32.xlu0 %v921, 64
    %v925 = vpop.permute.xlu0 %924
    %v927 = vmul.f32 %v920, %v925
    %929 = vrot.lane.b32.xlu0 %v927, 32
    %v930 = vpop.permute.xlu0 %929
    %v932 = vadd.f32 %v922, %v930
    %v933 = vtanh.pop %v932
    %935 = vrot.lane.b32.xlu0 %v933, 64
    %v936 = vpop.permute.xlu0 %935
    %v938 = vmul.f32 %v920, %v936
    %940 = vrot.lane.b32.xlu0 %v938, 32
    %v941 = vpop.permute.xlu0 %940
    %943 = vst.msk [vmem:[#allocation3 + $0xa] sm:$0x3] %vm427, %v941
    %v944 = vld [vmem:[#allocation2 + $0xc] sm:$0x3]
    %v945 = vsel %vm180, %v941, 0
    %947 = vmatprep.subr.mxu0 0.0
    %948 = vmatpush1.msra.mxu0 %v320
    %949 = vmatprep.subr.mxu0 0.0
    %950 = vmatpush1.msra.mxu0 %v321
    %951 = vmatprep.subr.mxu0 0.0
    %952 = vmatpush1.msra.mxu0 %v322
    %953 = vmatprep.subr.mxu0 0.0
    %954 = vmatpush1.msra.mxu0 %v323
    %955 = vmatprep.subr.mxu0 0.0
    %956 = vmatpush1.msra.mxu0 0.0
    %957 = vmatprep.subr.mxu0 0.0
    %958 = vmatpush1.msra.mxu0 0.0
    %959 = vmatprep.subr.mxu0 0.0
    %960 = vmatpush1.msra.mxu0 0.0
    %961 = vmatprep.subr.mxu0 0.0
    %962 = vmatpush1.msra.mxu0 0.0
    %963 = vmatprep.subr.mxu0 0.0
    %964 = vmatpush1.msra.mxu0 0.0
    %965 = vmatprep.subr.mxu0 0.0
    %966 = vmatpush1.msra.mxu0 0.0
    %967 = vmatprep.subr.mxu0 0.0
    %968 = vmatpush1.msra.mxu0 0.0
    %969 = vmatprep.subr.mxu0 0.0
    %970 = vmatpush1.msra.mxu0 0.0
    %971 = vmatprep.subr.mxu0 0.0
    %972 = vmatpush1.msra.mxu0 0.0
    %973 = vmatprep.subr.mxu0 0.0
    %974 = vmatpush1.msra.mxu0 0.0
    %975 = vmatprep.subr.mxu0 0.0
    %976 = vmatpush1.msra.mxu0 0.0
    %977 = vmatprep.subr.mxu0 0.0
    %978 = vmatpush1.msra.mxu0 0.0
    %979 = vmatprep.subr.mxu0 0.0
    %980 = vmatpush1.msra.mxu0 0.0
    %981 = vmatprep.subr.mxu0 0.0
    %982 = vmatpush1.msra.mxu0 0.0
    %983 = vmatprep.subr.mxu0 0.0
    %984 = vmatpush1.msra.mxu0 0.0
    %985 = vmatprep.subr.mxu0 0.0
    %986 = vmatpush1.msra.mxu0 0.0
    %987 = vmatprep.subr.mxu0 0.0
    %988 = vmatpush1.msra.mxu0 0.0
    %989 = vmatprep.subr.mxu0 0.0
    %990 = vmatpush1.msra.mxu0 0.0
    %991 = vmatprep.subr.mxu0 0.0
    %992 = vmatpush1.msra.mxu0 0.0
    %993 = vmatprep.subr.mxu0 0.0
    %994 = vmatpush1.msra.mxu0 0.0
    %995 = vmatprep.subr.mxu0 0.0
    %996 = vmatpush1.msra.mxu0 0.0
    %997 = vmatprep.subr.mxu0 0.0
    %998 = vmatpush1.msra.mxu0 0.0
    %999 = vmatprep.subr.mxu0 0.0
    %1000 = vmatpush1.msra.mxu0 0.0
    %1001 = vmatprep.subr.mxu0 0.0
    %1002 = vmatpush1.msra.mxu0 0.0
    %1003 = vmatprep.subr.mxu0 0.0
    %1004 = vmatpush1.msra.mxu0 0.0
    %1005 = vmatprep.subr.mxu0 0.0
    %1006 = vmatpush1.msra.mxu0 0.0
    %1007 = vmatprep.subr.mxu0 0.0
    %1008 = vmatpush1.msra.mxu0 0.0
    %1009 = vmatprep.subr.mxu0 0.0
    %1010 = vmatpush1.msra.mxu0 0.0
    %1011 = vmatprep.mubr.f32.mxu0 0.0
    %1012 = vmatmul.mubr.f32.gmra.mrb[0].mxu0 %v945
    %v1013 = vpop.f32.mrb[0].mxu0
    %v1014 = vadd.f32 0.0, %v1013
    %v1015 = vpop.f32.mrb[0].mxu0
    %1016 = vdwg.mxu0
    %v1017 = vadd.f32 %v944, %v1014
    %v1018 = vxor.u32 %v1017, 2147483648
    %v1019 = vmul.f32 %v1018, 1.442695
    %v1020 = vpow.pop %v1019
    %v1021 = vadd.f32 %v1020, 1.0
    %v1022 = vrcp.pop %v1021
    %v1023 = vmul.f32 1.0, %v1022
    %v1024 = vtanh.pop %v1017
    %v1025 = vmul.f32 %v1023, %v932
    %1027 = vrot.lane.b32.xlu0 %v1024, 64
    %v1028 = vpop.permute.xlu0 %1027
    %v1030 = vmul.f32 %v1023, %v1028
    %1032 = vrot.lane.b32.xlu0 %v1030, 32
    %v1033 = vpop.permute.xlu0 %1032
    %v1035 = vadd.f32 %v1025, %v1033
    %v1036 = vtanh.pop %v1035
    %1038 = vrot.lane.b32.xlu0 %v1036, 64
    %v1039 = vpop.permute.xlu0 %1038
    %v1041 = vmul.f32 %v1023, %v1039
    %1043 = vrot.lane.b32.xlu0 %v1041, 32
    %v1044 = vpop.permute.xlu0 %1043
    %1046 = vst.msk [vmem:[#allocation3 + $0xc] sm:$0x3] %vm427, %v1044
    %v1047 = vld [vmem:[#allocation2 + $0xe] sm:$0x3]
    %v1048 = vsel %vm180, %v1044, 0
    %1050 = vmatprep.subr.mxu0 0.0
    %1051 = vmatpush1.msra.mxu0 %v320
    %1052 = vmatprep.subr.mxu0 0.0
    %1053 = vmatpush1.msra.mxu0 %v321
    %1054 = vmatprep.subr.mxu0 0.0
    %1055 = vmatpush1.msra.mxu0 %v322
    %1056 = vmatprep.subr.mxu0 0.0
    %1057 = vmatpush1.msra.mxu0 %v323
    %1058 = vmatprep.subr.mxu0 0.0
    %1059 = vmatpush1.msra.mxu0 0.0
    %1060 = vmatprep.subr.mxu0 0.0
    %1061 = vmatpush1.msra.mxu0 0.0
    %1062 = vmatprep.subr.mxu0 0.0
    %1063 = vmatpush1.msra.mxu0 0.0
    %1064 = vmatprep.subr.mxu0 0.0
    %1065 = vmatpush1.msra.mxu0 0.0
    %1066 = vmatprep.subr.mxu0 0.0
    %1067 = vmatpush1.msra.mxu0 0.0
    %1068 = vmatprep.subr.mxu0 0.0
    %1069 = vmatpush1.msra.mxu0 0.0
    %1070 = vmatprep.subr.mxu0 0.0
    %1071 = vmatpush1.msra.mxu0 0.0
    %1072 = vmatprep.subr.mxu0 0.0
    %1073 = vmatpush1.msra.mxu0 0.0
    %1074 = vmatprep.subr.mxu0 0.0
    %1075 = vmatpush1.msra.mxu0 0.0
    %1076 = vmatprep.subr.mxu0 0.0
    %1077 = vmatpush1.msra.mxu0 0.0
    %1078 = vmatprep.subr.mxu0 0.0
    %1079 = vmatpush1.msra.mxu0 0.0
    %1080 = vmatprep.subr.mxu0 0.0
    %1081 = vmatpush1.msra.mxu0 0.0
    %1082 = vmatprep.subr.mxu0 0.0
    %1083 = vmatpush1.msra.mxu0 0.0
    %1084 = vmatprep.subr.mxu0 0.0
    %1085 = vmatpush1.msra.mxu0 0.0
    %1086 = vmatprep.subr.mxu0 0.0
    %1087 = vmatpush1.msra.mxu0 0.0
    %1088 = vmatprep.subr.mxu0 0.0
    %1089 = vmatpush1.msra.mxu0 0.0
    %1090 = vmatprep.subr.mxu0 0.0
    %1091 = vmatpush1.msra.mxu0 0.0
    %1092 = vmatprep.subr.mxu0 0.0
    %1093 = vmatpush1.msra.mxu0 0.0
    %1094 = vmatprep.subr.mxu0 0.0
    %1095 = vmatpush1.msra.mxu0 0.0
    %1096 = vmatprep.subr.mxu0 0.0
    %1097 = vmatpush1.msra.mxu0 0.0
    %1098 = vmatprep.subr.mxu0 0.0
    %1099 = vmatpush1.msra.mxu0 0.0
    %1100 = vmatprep.subr.mxu0 0.0
    %1101 = vmatpush1.msra.mxu0 0.0
    %1102 = vmatprep.subr.mxu0 0.0
    %1103 = vmatpush1.msra.mxu0 0.0
    %1104 = vmatprep.subr.mxu0 0.0
    %1105 = vmatpush1.msra.mxu0 0.0
    %1106 = vmatprep.subr.mxu0 0.0
    %1107 = vmatpush1.msra.mxu0 0.0
    %1108 = vmatprep.subr.mxu0 0.0
    %1109 = vmatpush1.msra.mxu0 0.0
    %1110 = vmatprep.subr.mxu0 0.0
    %1111 = vmatpush1.msra.mxu0 0.0
    %1112 = vmatprep.subr.mxu0 0.0
    %1113 = vmatpush1.msra.mxu0 0.0
    %1114 = vmatprep.mubr.f32.mxu0 0.0
    %1115 = vmatmul.mubr.f32.gmra.mrb[0].mxu0 %v1048
    %v1116 = vpop.f32.mrb[0].mxu0
    %v1117 = vadd.f32 0.0, %v1116
    %v1118 = vpop.f32.mrb[0].mxu0
    %1119 = vdwg.mxu0
    %v1120 = vadd.f32 %v1047, %v1117
    %v1121 = vxor.u32 %v1120, 2147483648
    %v1122 = vmul.f32 %v1121, 1.442695
    %v1123 = vpow.pop %v1122
    %v1124 = vadd.f32 %v1123, 1.0
    %v1125 = vrcp.pop %v1124
    %v1126 = vmul.f32 1.0, %v1125
    %v1127 = vtanh.pop %v1120
    %v1128 = vmul.f32 %v1126, %v1035
    %1130 = vrot.lane.b32.xlu0 %v1127, 64
    %v1131 = vpop.permute.xlu0 %1130
    %v1133 = vmul.f32 %v1126, %v1131
    %1135 = vrot.lane.b32.xlu0 %v1133, 32
    %v1136 = vpop.permute.xlu0 %1135
    %v1138 = vadd.f32 %v1128, %v1136
    %v1139 = vtanh.pop %v1138
    %1141 = vrot.lane.b32.xlu0 %v1139, 64
    %v1142 = vpop.permute.xlu0 %1141
    %v1144 = vmul.f32 %v1126, %v1142
    %1146 = vrot.lane.b32.xlu0 %v1144, 32
    %v1147 = vpop.permute.xlu0 %1146
    %1149 = vst.msk [vmem:[#allocation3 + $0xe] sm:$0x3] %vm427, %v1147
    %v1150 = vld [vmem:[#allocation3] sm:$0xff]
    %v1151 = vld [vmem:[#allocation3 + $0x8] sm:$0xff]
    %v1152 = vld [vmem:[#allocation15] sm:$0xff]
    %v1153 = vld [vmem:[#allocation15 + $0x8] sm:$0xff]
    %v1154 = vld [vmem:[#allocation15 + $0x10] sm:$0xff]
    %v1155 = vld [vmem:[#allocation15 + $0x18] sm:$0xff]
    %v1156 = vld [vmem:[#allocation18] sm:$0x1]
    %v1158 = vlaneseq
    %v1159 = vshrl.u32 %v1158, 7
    %v1160 = vsub.s32 0, %v1159
    %v1161 = vrot.slane %v1156, %v1160
    %v1164 = vsel %vm180, %v1150, 0
    %v1167 = vsel %vm180, %v1151, 0
    %1169 = vmatprep.subr.mxu0 0.0
    %1170 = vmatpush1.msra.mxu0 %v1152
    %1171 = vmatprep.subr.mxu0 0.0
    %1172 = vmatpush1.msra.mxu0 %v1153
    %1173 = vmatprep.subr.mxu0 0.0
    %1174 = vmatpush1.msra.mxu0 %v1154
    %1175 = vmatprep.subr.mxu0 0.0
    %1176 = vmatpush1.msra.mxu0 %v1155
    %1177 = vmatprep.subr.mxu0 0.0
    %1178 = vmatpush1.msra.mxu0 0.0
    %1179 = vmatprep.subr.mxu0 0.0
    %1180 = vmatpush1.msra.mxu0 0.0
    %1181 = vmatprep.subr.mxu0 0.0
    %1182 = vmatpush1.msra.mxu0 0.0
    %1183 = vmatprep.subr.mxu0 0.0
    %1184 = vmatpush1.msra.mxu0 0.0
    %1185 = vmatprep.subr.mxu0 0.0
    %1186 = vmatpush1.msra.mxu0 0.0
    %1187 = vmatprep.subr.mxu0 0.0
    %1188 = vmatpush1.msra.mxu0 0.0
    %1189 = vmatprep.subr.mxu0 0.0
    %1190 = vmatpush1.msra.mxu0 0.0
    %1191 = vmatprep.subr.mxu0 0.0
    %1192 = vmatpush1.msra.mxu0 0.0
    %1193 = vmatprep.subr.mxu0 0.0
    %1194 = vmatpush1.msra.mxu0 0.0
    %1195 = vmatprep.subr.mxu0 0.0
    %1196 = vmatpush1.msra.mxu0 0.0
    %1197 = vmatprep.subr.mxu0 0.0
    %1198 = vmatpush1.msra.mxu0 0.0
    %1199 = vmatprep.subr.mxu0 0.0
    %1200 = vmatpush1.msra.mxu0 0.0
    %1201 = vmatprep.subr.mxu0 0.0
    %1202 = vmatpush1.msra.mxu0 0.0
    %1203 = vmatprep.subr.mxu0 0.0
    %1204 = vmatpush1.msra.mxu0 0.0
    %1205 = vmatprep.subr.mxu0 0.0
    %1206 = vmatpush1.msra.mxu0 0.0
    %1207 = vmatprep.subr.mxu0 0.0
    %1208 = vmatpush1.msra.mxu0 0.0
    %1209 = vmatprep.subr.mxu0 0.0
    %1210 = vmatpush1.msra.mxu0 0.0
    %1211 = vmatprep.subr.mxu0 0.0
    %1212 = vmatpush1.msra.mxu0 0.0
    %1213 = vmatprep.subr.mxu0 0.0
    %1214 = vmatpush1.msra.mxu0 0.0
    %1215 = vmatprep.subr.mxu0 0.0
    %1216 = vmatpush1.msra.mxu0 0.0
    %1217 = vmatprep.subr.mxu0 0.0
    %1218 = vmatpush1.msra.mxu0 0.0
    %1219 = vmatprep.subr.mxu0 0.0
    %1220 = vmatpush1.msra.mxu0 0.0
    %1221 = vmatprep.subr.mxu0 0.0
    %1222 = vmatpush1.msra.mxu0 0.0
    %1223 = vmatprep.subr.mxu0 0.0
    %1224 = vmatpush1.msra.mxu0 0.0
    %1225 = vmatprep.subr.mxu0 0.0
    %1226 = vmatpush1.msra.mxu0 0.0
    %1227 = vmatprep.subr.mxu0 0.0
    %1228 = vmatpush1.msra.mxu0 0.0
    %1229 = vmatprep.subr.mxu0 0.0
    %1230 = vmatpush1.msra.mxu0 0.0
    %1231 = vmatprep.subr.mxu0 0.0
    %1232 = vmatpush1.msra.mxu0 0.0
    %1233 = vmatprep.mubr.f32.mxu0 0.0
    %1234 = vmatmul.mubr.f32.gmra.mrb[0].mxu0 %v1164
    %v1235 = vpop.f32.mrb[0].mxu0
    %v1236 = vadd.f32 %v1161, %v1235
    %v1237 = vpop.f32.mrb[0].mxu0
    %1238 = vmatprep.mubr.f32.mxu0 0.0
    %1239 = vmatmul.mubr.f32.gmra.mrb[0].mxu0 %v1167
    %v1240 = vpop.f32.mrb[0].mxu0
    %v1241 = vadd.f32 %v1161, %v1240
    %v1242 = vpop.f32.mrb[0].mxu0
    %1243 = vdwg.mxu0
    %1244 = vst [vmem:[#allocation2] sm:$0xff] %v1236
    %1245 = vst [vmem:[#allocation2 + $0x8] sm:$0xff] %v1241
    %v1246 = vld [vmem:[#allocation16] sm:$0xff]
    %v1247 = vld [vmem:[#allocation16 + $0x8] sm:$0xff]
    %v1248 = vld [vmem:[#allocation16 + $0x10] sm:$0xff]
    %v1249 = vld [vmem:[#allocation16 + $0x18] sm:$0xff]
    %v1250 = vld [vmem:[#allocation2] sm:$0x3]
    %1251 = vmatprep.subr.mxu0 0.0
    %1252 = vmatpush1.msra.mxu0 %v1246
    %1253 = vmatprep.subr.mxu0 0.0
    %1254 = vmatpush1.msra.mxu0 %v1247
    %1255 = vmatprep.subr.mxu0 0.0
    %1256 = vmatpush1.msra.mxu0 %v1248
    %1257 = vmatprep.subr.mxu0 0.0
    %1258 = vmatpush1.msra.mxu0 %v1249
    %1259 = vmatprep.subr.mxu0 0.0
    %1260 = vmatpush1.msra.mxu0 0.0
    %1261 = vmatprep.subr.mxu0 0.0
    %1262 = vmatpush1.msra.mxu0 0.0
    %1263 = vmatprep.subr.mxu0 0.0
    %1264 = vmatpush1.msra.mxu0 0.0
    %1265 = vmatprep.subr.mxu0 0.0
    %1266 = vmatpush1.msra.mxu0 0.0
    %1267 = vmatprep.subr.mxu0 0.0
    %1268 = vmatpush1.msra.mxu0 0.0
    %1269 = vmatprep.subr.mxu0 0.0
    %1270 = vmatpush1.msra.mxu0 0.0
    %1271 = vmatprep.subr.mxu0 0.0
    %1272 = vmatpush1.msra.mxu0 0.0
    %1273 = vmatprep.subr.mxu0 0.0
    %1274 = vmatpush1.msra.mxu0 0.0
    %1275 = vmatprep.subr.mxu0 0.0
    %1276 = vmatpush1.msra.mxu0 0.0
    %1277 = vmatprep.subr.mxu0 0.0
    %1278 = vmatpush1.msra.mxu0 0.0
    %1279 = vmatprep.subr.mxu0 0.0
    %1280 = vmatpush1.msra.mxu0 0.0
    %1281 = vmatprep.subr.mxu0 0.0
    %1282 = vmatpush1.msra.mxu0 0.0
    %1283 = vmatprep.subr.mxu0 0.0
    %1284 = vmatpush1.msra.mxu0 0.0
    %1285 = vmatprep.subr.mxu0 0.0
    %1286 = vmatpush1.msra.mxu0 0.0
    %1287 = vmatprep.subr.mxu0 0.0
    %1288 = vmatpush1.msra.mxu0 0.0
    %1289 = vmatprep.subr.mxu0 0.0
    %1290 = vmatpush1.msra.mxu0 0.0
    %1291 = vmatprep.subr.mxu0 0.0
    %1292 = vmatpush1.msra.mxu0 0.0
    %1293 = vmatprep.subr.mxu0 0.0
    %1294 = vmatpush1.msra.mxu0 0.0
    %1295 = vmatprep.subr.mxu0 0.0
    %1296 = vmatpush1.msra.mxu0 0.0
    %1297 = vmatprep.subr.mxu0 0.0
    %1298 = vmatpush1.msra.mxu0 0.0
    %1299 = vmatprep.subr.mxu0 0.0
    %1300 = vmatpush1.msra.mxu0 0.0
    %1301 = vmatprep.subr.mxu0 0.0
    %1302 = vmatpush1.msra.mxu0 0.0
    %1303 = vmatprep.subr.mxu0 0.0
    %1304 = vmatpush1.msra.mxu0 0.0
    %1305 = vmatprep.subr.mxu0 0.0
    %1306 = vmatpush1.msra.mxu0 0.0
    %1307 = vmatprep.subr.mxu0 0.0
    %1308 = vmatpush1.msra.mxu0 0.0
    %1309 = vmatprep.subr.mxu0 0.0
    %1310 = vmatpush1.msra.mxu0 0.0
    %1311 = vmatprep.subr.mxu0 0.0
    %1312 = vmatpush1.msra.mxu0 0.0
    %1313 = vmatprep.subr.mxu0 0.0
    %1314 = vmatpush1.msra.mxu0 0.0
    %1315 = vmatprep.mubr.f32.mxu0 0.0
    %1316 = vmatmul.mubr.f32.gmra.mrb[0].mxu0 %v326
    %v1317 = vpop.f32.mrb[0].mxu0
    %v1318 = vadd.f32 0.0, %v1317
    %v1319 = vpop.f32.mrb[0].mxu0
    %1320 = vdwg.mxu0
    %v1321 = vadd.f32 %v1250, %v1318
    %v1322 = vxor.u32 %v1321, 2147483648
    %v1323 = vmul.f32 %v1322, 1.442695
    %v1324 = vpow.pop %v1323
    %v1325 = vadd.f32 %v1324, 1.0
    %v1326 = vrcp.pop %v1325
    %v1327 = vmul.f32 1.0, %v1326
    %v1328 = vtanh.pop %v1321
    %v1329 = vmul.f32 %v1327, 0.0
    %1331 = vrot.lane.b32.xlu0 %v1328, 64
    %v1332 = vpop.permute.xlu0 %1331
    %v1334 = vmul.f32 %v1327, %v1332
    %1336 = vrot.lane.b32.xlu0 %v1334, 32
    %v1337 = vpop.permute.xlu0 %1336
    %v1339 = vadd.f32 %v1329, %v1337
    %v1340 = vtanh.pop %v1339
    %1342 = vrot.lane.b32.xlu0 %v1340, 64
    %v1343 = vpop.permute.xlu0 %1342
    %v1345 = vmul.f32 %v1327, %v1343
    %1347 = vrot.lane.b32.xlu0 %v1345, 32
    %v1348 = vpop.permute.xlu0 %1347
    %1350 = vst.msk [vmem:[#allocation3] sm:$0x3] %vm427, %v1348
    %v1351 = vld [vmem:[#allocation2 + $0x2] sm:$0x3]
    %v1352 = vsel %vm180, %v1348, 0
    %1354 = vmatprep.subr.mxu0 0.0
    %1355 = vmatpush1.msra.mxu0 %v1246
    %1356 = vmatprep.subr.mxu0 0.0
    %1357 = vmatpush1.msra.mxu0 %v1247
    %1358 = vmatprep.subr.mxu0 0.0
    %1359 = vmatpush1.msra.mxu0 %v1248
    %1360 = vmatprep.subr.mxu0 0.0
    %1361 = vmatpush1.msra.mxu0 %v1249
    %1362 = vmatprep.subr.mxu0 0.0
    %1363 = vmatpush1.msra.mxu0 0.0
    %1364 = vmatprep.subr.mxu0 0.0
    %1365 = vmatpush1.msra.mxu0 0.0
    %1366 = vmatprep.subr.mxu0 0.0
    %1367 = vmatpush1.msra.mxu0 0.0
    %1368 = vmatprep.subr.mxu0 0.0
    %1369 = vmatpush1.msra.mxu0 0.0
    %1370 = vmatprep.subr.mxu0 0.0
    %1371 = vmatpush1.msra.mxu0 0.0
    %1372 = vmatprep.subr.mxu0 0.0
    %1373 = vmatpush1.msra.mxu0 0.0
    %1374 = vmatprep.subr.mxu0 0.0
    %1375 = vmatpush1.msra.mxu0 0.0
    %1376 = vmatprep.subr.mxu0 0.0
    %1377 = vmatpush1.msra.mxu0 0.0
    %1378 = vmatprep.subr.mxu0 0.0
    %1379 = vmatpush1.msra.mxu0 0.0
    %1380 = vmatprep.subr.mxu0 0.0
    %1381 = vmatpush1.msra.mxu0 0.0
    %1382 = vmatprep.subr.mxu0 0.0
    %1383 = vmatpush1.msra.mxu0 0.0
    %1384 = vmatprep.subr.mxu0 0.0
    %1385 = vmatpush1.msra.mxu0 0.0
    %1386 = vmatprep.subr.mxu0 0.0
    %1387 = vmatpush1.msra.mxu0 0.0
    %1388 = vmatprep.subr.mxu0 0.0
    %1389 = vmatpush1.msra.mxu0 0.0
    %1390 = vmatprep.subr.mxu0 0.0
    %1391 = vmatpush1.msra.mxu0 0.0
    %1392 = vmatprep.subr.mxu0 0.0
    %1393 = vmatpush1.msra.mxu0 0.0
    %1394 = vmatprep.subr.mxu0 0.0
    %1395 = vmatpush1.msra.mxu0 0.0
    %1396 = vmatprep.subr.mxu0 0.0
    %1397 = vmatpush1.msra.mxu0 0.0
    %1398 = vmatprep.subr.mxu0 0.0
    %1399 = vmatpush1.msra.mxu0 0.0
    %1400 = vmatprep.subr.mxu0 0.0
    %1401 = vmatpush1.msra.mxu0 0.0
    %1402 = vmatprep.subr.mxu0 0.0
    %1403 = vmatpush1.msra.mxu0 0.0
    %1404 = vmatprep.subr.mxu0 0.0
    %1405 = vmatpush1.msra.mxu0 0.0
    %1406 = vmatprep.subr.mxu0 0.0
    %1407 = vmatpush1.msra.mxu0 0.0
    %1408 = vmatprep.subr.mxu0 0.0
    %1409 = vmatpush1.msra.mxu0 0.0
    %1410 = vmatprep.subr.mxu0 0.0
    %1411 = vmatpush1.msra.mxu0 0.0
    %1412 = vmatprep.subr.mxu0 0.0
    %1413 = vmatpush1.msra.mxu0 0.0
    %1414 = vmatprep.subr.mxu0 0.0
    %1415 = vmatpush1.msra.mxu0 0.0
    %1416 = vmatprep.subr.mxu0 0.0
    %1417 = vmatpush1.msra.mxu0 0.0
    %1418 = vmatprep.mubr.f32.mxu0 0.0
    %1419 = vmatmul.mubr.f32.gmra.mrb[0].mxu0 %v1352
    %v1420 = vpop.f32.mrb[0].mxu0
    %v1421 = vadd.f32 0.0, %v1420
    %v1422 = vpop.f32.mrb[0].mxu0
    %1423 = vdwg.mxu0
    %v1424 = vadd.f32 %v1351, %v1421
    %v1425 = vxor.u32 %v1424, 2147483648
    %v1426 = vmul.f32 %v1425, 1.442695
    %v1427 = vpow.pop %v1426
    %v1428 = vadd.f32 %v1427, 1.0
    %v1429 = vrcp.pop %v1428
    %v1430 = vmul.f32 1.0, %v1429
    %v1431 = vtanh.pop %v1424
    %v1432 = vmul.f32 %v1430, %v1339
    %1434 = vrot.lane.b32.xlu0 %v1431, 64
    %v1435 = vpop.permute.xlu0 %1434
    %v1437 = vmul.f32 %v1430, %v1435
    %1439 = vrot.lane.b32.xlu0 %v1437, 32
    %v1440 = vpop.permute.xlu0 %1439
    %v1442 = vadd.f32 %v1432, %v1440
    %v1443 = vtanh.pop %v1442
    %1445 = vrot.lane.b32.xlu0 %v1443, 64
    %v1446 = vpop.permute.xlu0 %1445
    %v1448 = vmul.f32 %v1430, %v1446
    %1450 = vrot.lane.b32.xlu0 %v1448, 32
    %v1451 = vpop.permute.xlu0 %1450
    %1453 = vst.msk [vmem:[#allocation3 + $0x2] sm:$0x3] %vm427, %v1451
    %v1454 = vld [vmem:[#allocation2 + $0x4] sm:$0x3]
    %v1455 = vsel %vm180, %v1451, 0
    %1457 = vmatprep.subr.mxu0 0.0
    %1458 = vmatpush1.msra.mxu0 %v1246
    %1459 = vmatprep.subr.mxu0 0.0
    %1460 = vmatpush1.msra.mxu0 %v1247
    %1461 = vmatprep.subr.mxu0 0.0
    %1462 = vmatpush1.msra.mxu0 %v1248
    %1463 = vmatprep.subr.mxu0 0.0
    %1464 = vmatpush1.msra.mxu0 %v1249
    %1465 = vmatprep.subr.mxu0 0.0
    %1466 = vmatpush1.msra.mxu0 0.0
    %1467 = vmatprep.subr.mxu0 0.0
    %1468 = vmatpush1.msra.mxu0 0.0
    %1469 = vmatprep.subr.mxu0 0.0
    %1470 = vmatpush1.msra.mxu0 0.0
    %1471 = vmatprep.subr.mxu0 0.0
    %1472 = vmatpush1.msra.mxu0 0.0
    %1473 = vmatprep.subr.mxu0 0.0
    %1474 = vmatpush1.msra.mxu0 0.0
    %1475 = vmatprep.subr.mxu0 0.0
    %1476 = vmatpush1.msra.mxu0 0.0
    %1477 = vmatprep.subr.mxu0 0.0
    %1478 = vmatpush1.msra.mxu0 0.0
    %1479 = vmatprep.subr.mxu0 0.0
    %1480 = vmatpush1.msra.mxu0 0.0
    %1481 = vmatprep.subr.mxu0 0.0
    %1482 = vmatpush1.msra.mxu0 0.0
    %1483 = vmatprep.subr.mxu0 0.0
    %1484 = vmatpush1.msra.mxu0 0.0
    %1485 = vmatprep.subr.mxu0 0.0
    %1486 = vmatpush1.msra.mxu0 0.0
    %1487 = vmatprep.subr.mxu0 0.0
    %1488 = vmatpush1.msra.mxu0 0.0
    %1489 = vmatprep.subr.mxu0 0.0
    %1490 = vmatpush1.msra.mxu0 0.0
    %1491 = vmatprep.subr.mxu0 0.0
    %1492 = vmatpush1.msra.mxu0 0.0
    %1493 = vmatprep.subr.mxu0 0.0
    %1494 = vmatpush1.msra.mxu0 0.0
    %1495 = vmatprep.subr.mxu0 0.0
    %1496 = vmatpush1.msra.mxu0 0.0
    %1497 = vmatprep.subr.mxu0 0.0
    %1498 = vmatpush1.msra.mxu0 0.0
    %1499 = vmatprep.subr.mxu0 0.0
    %1500 = vmatpush1.msra.mxu0 0.0
    %1501 = vmatprep.subr.mxu0 0.0
    %1502 = vmatpush1.msra.mxu0 0.0
    %1503 = vmatprep.subr.mxu0 0.0
    %1504 = vmatpush1.msra.mxu0 0.0
    %1505 = vmatprep.subr.mxu0 0.0
    %1506 = vmatpush1.msra.mxu0 0.0
    %1507 = vmatprep.subr.mxu0 0.0
    %1508 = vmatpush1.msra.mxu0 0.0
    %1509 = vmatprep.subr.mxu0 0.0
    %1510 = vmatpush1.msra.mxu0 0.0
    %1511 = vmatprep.subr.mxu0 0.0
    %1512 = vmatpush1.msra.mxu0 0.0
    %1513 = vmatprep.subr.mxu0 0.0
    %1514 = vmatpush1.msra.mxu0 0.0
    %1515 = vmatprep.subr.mxu0 0.0
    %1516 = vmatpush1.msra.mxu0 0.0
    %1517 = vmatprep.subr.mxu0 0.0
    %1518 = vmatpush1.msra.mxu0 0.0
    %1519 = vmatprep.subr.mxu0 0.0
    %1520 = vmatpush1.msra.mxu0 0.0
    %1521 = vmatprep.mubr.f32.mxu0 0.0
    %1522 = vmatmul.mubr.f32.gmra.mrb[0].mxu0 %v1455
    %v1523 = vpop.f32.mrb[0].mxu0
    %v1524 = vadd.f32 0.0, %v1523
    %v1525 = vpop.f32.mrb[0].mxu0
    %1526 = vdwg.mxu0
    %v1527 = vadd.f32 %v1454, %v1524
    %v1528 = vxor.u32 %v1527, 2147483648
    %v1529 = vmul.f32 %v1528, 1.442695
    %v1530 = vpow.pop %v1529
    %v1531 = vadd.f32 %v1530, 1.0
    %v1532 = vrcp.pop %v1531
    %v1533 = vmul.f32 1.0, %v1532
    %v1534 = vtanh.pop %v1527
    %v1535 = vmul.f32 %v1533, %v1442
    %1537 = vrot.lane.b32.xlu0 %v1534, 64
    %v1538 = vpop.permute.xlu0 %1537
    %v1540 = vmul.f32 %v1533, %v1538
    %1542 = vrot.lane.b32.xlu0 %v1540, 32
    %v1543 = vpop.permute.xlu0 %1542
    %v1545 = vadd.f32 %v1535, %v1543
    %v1546 = vtanh.pop %v1545
    %1548 = vrot.lane.b32.xlu0 %v1546, 64
    %v1549 = vpop.permute.xlu0 %1548
    %v1551 = vmul.f32 %v1533, %v1549
    %1553 = vrot.lane.b32.xlu0 %v1551, 32
    %v1554 = vpop.permute.xlu0 %1553
    %1556 = vst.msk [vmem:[#allocation3 + $0x4] sm:$0x3] %vm427, %v1554
    %v1557 = vld [vmem:[#allocation2 + $0x6] sm:$0x3]
    %v1558 = vsel %vm180, %v1554, 0
    %1560 = vmatprep.subr.mxu0 0.0
    %1561 = vmatpush1.msra.mxu0 %v1246
    %1562 = vmatprep.subr.mxu0 0.0
    %1563 = vmatpush1.msra.mxu0 %v1247
    %1564 = vmatprep.subr.mxu0 0.0
    %1565 = vmatpush1.msra.mxu0 %v1248
    %1566 = vmatprep.subr.mxu0 0.0
    %1567 = vmatpush1.msra.mxu0 %v1249
    %1568 = vmatprep.subr.mxu0 0.0
    %1569 = vmatpush1.msra.mxu0 0.0
    %1570 = vmatprep.subr.mxu0 0.0
    %1571 = vmatpush1.msra.mxu0 0.0
    %1572 = vmatprep.subr.mxu0 0.0
    %1573 = vmatpush1.msra.mxu0 0.0
    %1574 = vmatprep.subr.mxu0 0.0
    %1575 = vmatpush1.msra.mxu0 0.0
    %1576 = vmatprep.subr.mxu0 0.0
    %1577 = vmatpush1.msra.mxu0 0.0
    %1578 = vmatprep.subr.mxu0 0.0
    %1579 = vmatpush1.msra.mxu0 0.0
    %1580 = vmatprep.subr.mxu0 0.0
    %1581 = vmatpush1.msra.mxu0 0.0
    %1582 = vmatprep.subr.mxu0 0.0
    %1583 = vmatpush1.msra.mxu0 0.0
    %1584 = vmatprep.subr.mxu0 0.0
    %1585 = vmatpush1.msra.mxu0 0.0
    %1586 = vmatprep.subr.mxu0 0.0
    %1587 = vmatpush1.msra.mxu0 0.0
    %1588 = vmatprep.subr.mxu0 0.0
    %1589 = vmatpush1.msra.mxu0 0.0
    %1590 = vmatprep.subr.mxu0 0.0
    %1591 = vmatpush1.msra.mxu0 0.0
    %1592 = vmatprep.subr.mxu0 0.0
    %1593 = vmatpush1.msra.mxu0 0.0
    %1594 = vmatprep.subr.mxu0 0.0
    %1595 = vmatpush1.msra.mxu0 0.0
    %1596 = vmatprep.subr.mxu0 0.0
    %1597 = vmatpush1.msra.mxu0 0.0
    %1598 = vmatprep.subr.mxu0 0.0
    %1599 = vmatpush1.msra.mxu0 0.0
    %1600 = vmatprep.subr.mxu0 0.0
    %1601 = vmatpush1.msra.mxu0 0.0
    %1602 = vmatprep.subr.mxu0 0.0
    %1603 = vmatpush1.msra.mxu0 0.0
    %1604 = vmatprep.subr.mxu0 0.0
    %1605 = vmatpush1.msra.mxu0 0.0
    %1606 = vmatprep.subr.mxu0 0.0
    %1607 = vmatpush1.msra.mxu0 0.0
    %1608 = vmatprep.subr.mxu0 0.0
    %1609 = vmatpush1.msra.mxu0 0.0
    %1610 = vmatprep.subr.mxu0 0.0
    %1611 = vmatpush1.msra.mxu0 0.0
    %1612 = vmatprep.subr.mxu0 0.0
    %1613 = vmatpush1.msra.mxu0 0.0
    %1614 = vmatprep.subr.mxu0 0.0
    %1615 = vmatpush1.msra.mxu0 0.0
    %1616 = vmatprep.subr.mxu0 0.0
    %1617 = vmatpush1.msra.mxu0 0.0
    %1618 = vmatprep.subr.mxu0 0.0
    %1619 = vmatpush1.msra.mxu0 0.0
    %1620 = vmatprep.subr.mxu0 0.0
    %1621 = vmatpush1.msra.mxu0 0.0
    %1622 = vmatprep.subr.mxu0 0.0
    %1623 = vmatpush1.msra.mxu0 0.0
    %1624 = vmatprep.mubr.f32.mxu0 0.0
    %1625 = vmatmul.mubr.f32.gmra.mrb[0].mxu0 %v1558
    %v1626 = vpop.f32.mrb[0].mxu0
    %v1627 = vadd.f32 0.0, %v1626
    %v1628 = vpop.f32.mrb[0].mxu0
    %1629 = vdwg.mxu0
    %v1630 = vadd.f32 %v1557, %v1627
    %v1631 = vxor.u32 %v1630, 2147483648
    %v1632 = vmul.f32 %v1631, 1.442695
    %v1633 = vpow.pop %v1632
    %v1634 = vadd.f32 %v1633, 1.0
    %v1635 = vrcp.pop %v1634
    %v1636 = vmul.f32 1.0, %v1635
    %v1637 = vtanh.pop %v1630
    %v1638 = vmul.f32 %v1636, %v1545
    %1640 = vrot.lane.b32.xlu0 %v1637, 64
    %v1641 = vpop.permute.xlu0 %1640
    %v1643 = vmul.f32 %v1636, %v1641
    %1645 = vrot.lane.b32.xlu0 %v1643, 32
    %v1646 = vpop.permute.xlu0 %1645
    %v1648 = vadd.f32 %v1638, %v1646
    %v1649 = vtanh.pop %v1648
    %1651 = vrot.lane.b32.xlu0 %v1649, 64
    %v1652 = vpop.permute.xlu0 %1651
    %v1654 = vmul.f32 %v1636, %v1652
    %1656 = vrot.lane.b32.xlu0 %v1654, 32
    %v1657 = vpop.permute.xlu0 %1656
    %1659 = vst.msk [vmem:[#allocation3 + $0x6] sm:$0x3] %vm427, %v1657
    %v1660 = vld [vmem:[#allocation2 + $0x8] sm:$0x3]
    %v1661 = vsel %vm180, %v1657, 0
    %1663 = vmatprep.subr.mxu0 0.0
    %1664 = vmatpush1.msra.mxu0 %v1246
    %1665 = vmatprep.subr.mxu0 0.0
    %1666 = vmatpush1.msra.mxu0 %v1247
    %1667 = vmatprep.subr.mxu0 0.0
    %1668 = vmatpush1.msra.mxu0 %v1248
    %1669 = vmatprep.subr.mxu0 0.0
    %1670 = vmatpush1.msra.mxu0 %v1249
    %1671 = vmatprep.subr.mxu0 0.0
    %1672 = vmatpush1.msra.mxu0 0.0
    %1673 = vmatprep.subr.mxu0 0.0
    %1674 = vmatpush1.msra.mxu0 0.0
    %1675 = vmatprep.subr.mxu0 0.0
    %1676 = vmatpush1.msra.mxu0 0.0
    %1677 = vmatprep.subr.mxu0 0.0
    %1678 = vmatpush1.msra.mxu0 0.0
    %1679 = vmatprep.subr.mxu0 0.0
    %1680 = vmatpush1.msra.mxu0 0.0
    %1681 = vmatprep.subr.mxu0 0.0
    %1682 = vmatpush1.msra.mxu0 0.0
    %1683 = vmatprep.subr.mxu0 0.0
    %1684 = vmatpush1.msra.mxu0 0.0
    %1685 = vmatprep.subr.mxu0 0.0
    %1686 = vmatpush1.msra.mxu0 0.0
    %1687 = vmatprep.subr.mxu0 0.0
    %1688 = vmatpush1.msra.mxu0 0.0
    %1689 = vmatprep.subr.mxu0 0.0
    %1690 = vmatpush1.msra.mxu0 0.0
    %1691 = vmatprep.subr.mxu0 0.0
    %1692 = vmatpush1.msra.mxu0 0.0
    %1693 = vmatprep.subr.mxu0 0.0
    %1694 = vmatpush1.msra.mxu0 0.0
    %1695 = vmatprep.subr.mxu0 0.0
    %1696 = vmatpush1.msra.mxu0 0.0
    %1697 = vmatprep.subr.mxu0 0.0
    %1698 = vmatpush1.msra.mxu0 0.0
    %1699 = vmatprep.subr.mxu0 0.0
    %1700 = vmatpush1.msra.mxu0 0.0
    %1701 = vmatprep.subr.mxu0 0.0
    %1702 = vmatpush1.msra.mxu0 0.0
    %1703 = vmatprep.subr.mxu0 0.0
    %1704 = vmatpush1.msra.mxu0 0.0
    %1705 = vmatprep.subr.mxu0 0.0
    %1706 = vmatpush1.msra.mxu0 0.0
    %1707 = vmatprep.subr.mxu0 0.0
    %1708 = vmatpush1.msra.mxu0 0.0
    %1709 = vmatprep.subr.mxu0 0.0
    %1710 = vmatpush1.msra.mxu0 0.0
    %1711 = vmatprep.subr.mxu0 0.0
    %1712 = vmatpush1.msra.mxu0 0.0
    %1713 = vmatprep.subr.mxu0 0.0
    %1714 = vmatpush1.msra.mxu0 0.0
    %1715 = vmatprep.subr.mxu0 0.0
    %1716 = vmatpush1.msra.mxu0 0.0
    %1717 = vmatprep.subr.mxu0 0.0
    %1718 = vmatpush1.msra.mxu0 0.0
    %1719 = vmatprep.subr.mxu0 0.0
    %1720 = vmatpush1.msra.mxu0 0.0
    %1721 = vmatprep.subr.mxu0 0.0
    %1722 = vmatpush1.msra.mxu0 0.0
    %1723 = vmatprep.subr.mxu0 0.0
    %1724 = vmatpush1.msra.mxu0 0.0
    %1725 = vmatprep.subr.mxu0 0.0
    %1726 = vmatpush1.msra.mxu0 0.0
    %1727 = vmatprep.mubr.f32.mxu0 0.0
    %1728 = vmatmul.mubr.f32.gmra.mrb[0].mxu0 %v1661
    %v1729 = vpop.f32.mrb[0].mxu0
    %v1730 = vadd.f32 0.0, %v1729
    %v1731 = vpop.f32.mrb[0].mxu0
    %1732 = vdwg.mxu0
    %v1733 = vadd.f32 %v1660, %v1730
    %v1734 = vxor.u32 %v1733, 2147483648
    %v1735 = vmul.f32 %v1734, 1.442695
    %v1736 = vpow.pop %v1735
    %v1737 = vadd.f32 %v1736, 1.0
    %v1738 = vrcp.pop %v1737
    %v1739 = vmul.f32 1.0, %v1738
    %v1740 = vtanh.pop %v1733
    %v1741 = vmul.f32 %v1739, %v1648
    %1743 = vrot.lane.b32.xlu0 %v1740, 64
    %v1744 = vpop.permute.xlu0 %1743
    %v1746 = vmul.f32 %v1739, %v1744
    %1748 = vrot.lane.b32.xlu0 %v1746, 32
    %v1749 = vpop.permute.xlu0 %1748
    %v1751 = vadd.f32 %v1741, %v1749
    %v1752 = vtanh.pop %v1751
    %1754 = vrot.lane.b32.xlu0 %v1752, 64
    %v1755 = vpop.permute.xlu0 %1754
    %v1757 = vmul.f32 %v1739, %v1755
    %1759 = vrot.lane.b32.xlu0 %v1757, 32
    %v1760 = vpop.permute.xlu0 %1759
    %1762 = vst.msk [vmem:[#allocation3 + $0x8] sm:$0x3] %vm427, %v1760
    %v1763 = vld [vmem:[#allocation2 + $0xa] sm:$0x3]
    %v1764 = vsel %vm180, %v1760, 0
    %1766 = vmatprep.subr.mxu0 0.0
    %1767 = vmatpush1.msra.mxu0 %v1246
    %1768 = vmatprep.subr.mxu0 0.0
    %1769 = vmatpush1.msra.mxu0 %v1247
    %1770 = vmatprep.subr.mxu0 0.0
    %1771 = vmatpush1.msra.mxu0 %v1248
    %1772 = vmatprep.subr.mxu0 0.0
    %1773 = vmatpush1.msra.mxu0 %v1249
    %1774 = vmatprep.subr.mxu0 0.0
    %1775 = vmatpush1.msra.mxu0 0.0
    %1776 = vmatprep.subr.mxu0 0.0
    %1777 = vmatpush1.msra.mxu0 0.0
    %1778 = vmatprep.subr.mxu0 0.0
    %1779 = vmatpush1.msra.mxu0 0.0
    %1780 = vmatprep.subr.mxu0 0.0
    %1781 = vmatpush1.msra.mxu0 0.0
    %1782 = vmatprep.subr.mxu0 0.0
    %1783 = vmatpush1.msra.mxu0 0.0
    %1784 = vmatprep.subr.mxu0 0.0
    %1785 = vmatpush1.msra.mxu0 0.0
    %1786 = vmatprep.subr.mxu0 0.0
    %1787 = vmatpush1.msra.mxu0 0.0
    %1788 = vmatprep.subr.mxu0 0.0
    %1789 = vmatpush1.msra.mxu0 0.0
    %1790 = vmatprep.subr.mxu0 0.0
    %1791 = vmatpush1.msra.mxu0 0.0
    %1792 = vmatprep.subr.mxu0 0.0
    %1793 = vmatpush1.msra.mxu0 0.0
    %1794 = vmatprep.subr.mxu0 0.0
    %1795 = vmatpush1.msra.mxu0 0.0
    %1796 = vmatprep.subr.mxu0 0.0
    %1797 = vmatpush1.msra.mxu0 0.0
    %1798 = vmatprep.subr.mxu0 0.0
    %1799 = vmatpush1.msra.mxu0 0.0
    %1800 = vmatprep.subr.mxu0 0.0
    %1801 = vmatpush1.msra.mxu0 0.0
    %1802 = vmatprep.subr.mxu0 0.0
    %1803 = vmatpush1.msra.mxu0 0.0
    %1804 = vmatprep.subr.mxu0 0.0
    %1805 = vmatpush1.msra.mxu0 0.0
    %1806 = vmatprep.subr.mxu0 0.0
    %1807 = vmatpush1.msra.mxu0 0.0
    %1808 = vmatprep.subr.mxu0 0.0
    %1809 = vmatpush1.msra.mxu0 0.0
    %1810 = vmatprep.subr.mxu0 0.0
    %1811 = vmatpush1.msra.mxu0 0.0
    %1812 = vmatprep.subr.mxu0 0.0
    %1813 = vmatpush1.msra.mxu0 0.0
    %1814 = vmatprep.subr.mxu0 0.0
    %1815 = vmatpush1.msra.mxu0 0.0
    %1816 = vmatprep.subr.mxu0 0.0
    %1817 = vmatpush1.msra.mxu0 0.0
    %1818 = vmatprep.subr.mxu0 0.0
    %1819 = vmatpush1.msra.mxu0 0.0
    %1820 = vmatprep.subr.mxu0 0.0
    %1821 = vmatpush1.msra.mxu0 0.0
    %1822 = vmatprep.subr.mxu0 0.0
    %1823 = vmatpush1.msra.mxu0 0.0
    %1824 = vmatprep.subr.mxu0 0.0
    %1825 = vmatpush1.msra.mxu0 0.0
    %1826 = vmatprep.subr.mxu0 0.0
    %1827 = vmatpush1.msra.mxu0 0.0
    %1828 = vmatprep.subr.mxu0 0.0
    %1829 = vmatpush1.msra.mxu0 0.0
    %1830 = vmatprep.mubr.f32.mxu0 0.0
    %1831 = vmatmul.mubr.f32.gmra.mrb[0].mxu0 %v1764
    %v1832 = vpop.f32.mrb[0].mxu0
    %v1833 = vadd.f32 0.0, %v1832
    %v1834 = vpop.f32.mrb[0].mxu0
    %1835 = vdwg.mxu0
    %v1836 = vadd.f32 %v1763, %v1833
    %v1837 = vxor.u32 %v1836, 2147483648
    %v1838 = vmul.f32 %v1837, 1.442695
    %v1839 = vpow.pop %v1838
    %v1840 = vadd.f32 %v1839, 1.0
    %v1841 = vrcp.pop %v1840
    %v1842 = vmul.f32 1.0, %v1841
    %v1843 = vtanh.pop %v1836
    %v1844 = vmul.f32 %v1842, %v1751
    %1846 = vrot.lane.b32.xlu0 %v1843, 64
    %v1847 = vpop.permute.xlu0 %1846
    %v1849 = vmul.f32 %v1842, %v1847
    %1851 = vrot.lane.b32.xlu0 %v1849, 32
    %v1852 = vpop.permute.xlu0 %1851
    %v1854 = vadd.f32 %v1844, %v1852
    %v1855 = vtanh.pop %v1854
    %1857 = vrot.lane.b32.xlu0 %v1855, 64
    %v1858 = vpop.permute.xlu0 %1857
    %v1860 = vmul.f32 %v1842, %v1858
    %1862 = vrot.lane.b32.xlu0 %v1860, 32
    %v1863 = vpop.permute.xlu0 %1862
    %1865 = vst.msk [vmem:[#allocation3 + $0xa] sm:$0x3] %vm427, %v1863
    %v1866 = vld [vmem:[#allocation2 + $0xc] sm:$0x3]
    %v1867 = vsel %vm180, %v1863, 0
    %1869 = vmatprep.subr.mxu0 0.0
    %1870 = vmatpush1.msra.mxu0 %v1246
    %1871 = vmatprep.subr.mxu0 0.0
    %1872 = vmatpush1.msra.mxu0 %v1247
    %1873 = vmatprep.subr.mxu0 0.0
    %1874 = vmatpush1.msra.mxu0 %v1248
    %1875 = vmatprep.subr.mxu0 0.0
    %1876 = vmatpush1.msra.mxu0 %v1249
    %1877 = vmatprep.subr.mxu0 0.0
    %1878 = vmatpush1.msra.mxu0 0.0
    %1879 = vmatprep.subr.mxu0 0.0
    %1880 = vmatpush1.msra.mxu0 0.0
    %1881 = vmatprep.subr.mxu0 0.0
    %1882 = vmatpush1.msra.mxu0 0.0
    %1883 = vmatprep.subr.mxu0 0.0
    %1884 = vmatpush1.msra.mxu0 0.0
    %1885 = vmatprep.subr.mxu0 0.0
    %1886 = vmatpush1.msra.mxu0 0.0
    %1887 = vmatprep.subr.mxu0 0.0
    %1888 = vmatpush1.msra.mxu0 0.0
    %1889 = vmatprep.subr.mxu0 0.0
    %1890 = vmatpush1.msra.mxu0 0.0
    %1891 = vmatprep.subr.mxu0 0.0
    %1892 = vmatpush1.msra.mxu0 0.0
    %1893 = vmatprep.subr.mxu0 0.0
    %1894 = vmatpush1.msra.mxu0 0.0
    %1895 = vmatprep.subr.mxu0 0.0
    %1896 = vmatpush1.msra.mxu0 0.0
    %1897 = vmatprep.subr.mxu0 0.0
    %1898 = vmatpush1.msra.mxu0 0.0
    %1899 = vmatprep.subr.mxu0 0.0
    %1900 = vmatpush1.msra.mxu0 0.0
    %1901 = vmatprep.subr.mxu0 0.0
    %1902 = vmatpush1.msra.mxu0 0.0
    %1903 = vmatprep.subr.mxu0 0.0
    %1904 = vmatpush1.msra.mxu0 0.0
    %1905 = vmatprep.subr.mxu0 0.0
    %1906 = vmatpush1.msra.mxu0 0.0
    %1907 = vmatprep.subr.mxu0 0.0
    %1908 = vmatpush1.msra.mxu0 0.0
    %1909 = vmatprep.subr.mxu0 0.0
    %1910 = vmatpush1.msra.mxu0 0.0
    %1911 = vmatprep.subr.mxu0 0.0
    %1912 = vmatpush1.msra.mxu0 0.0
    %1913 = vmatprep.subr.mxu0 0.0
    %1914 = vmatpush1.msra.mxu0 0.0
    %1915 = vmatprep.subr.mxu0 0.0
    %1916 = vmatpush1.msra.mxu0 0.0
    %1917 = vmatprep.subr.mxu0 0.0
    %1918 = vmatpush1.msra.mxu0 0.0
    %1919 = vmatprep.subr.mxu0 0.0
    %1920 = vmatpush1.msra.mxu0 0.0
    %1921 = vmatprep.subr.mxu0 0.0
    %1922 = vmatpush1.msra.mxu0 0.0
    %1923 = vmatprep.subr.mxu0 0.0
    %1924 = vmatpush1.msra.mxu0 0.0
    %1925 = vmatprep.subr.mxu0 0.0
    %1926 = vmatpush1.msra.mxu0 0.0
    %1927 = vmatprep.subr.mxu0 0.0
    %1928 = vmatpush1.msra.mxu0 0.0
    %1929 = vmatprep.subr.mxu0 0.0
    %1930 = vmatpush1.msra.mxu0 0.0
    %1931 = vmatprep.subr.mxu0 0.0
    %1932 = vmatpush1.msra.mxu0 0.0
    %1933 = vmatprep.mubr.f32.mxu0 0.0
    %1934 = vmatmul.mubr.f32.gmra.mrb[0].mxu0 %v1867
    %v1935 = vpop.f32.mrb[0].mxu0
    %v1936 = vadd.f32 0.0, %v1935
    %v1937 = vpop.f32.mrb[0].mxu0
    %1938 = vdwg.mxu0
    %v1939 = vadd.f32 %v1866, %v1936
    %v1940 = vxor.u32 %v1939, 2147483648
    %v1941 = vmul.f32 %v1940, 1.442695
    %v1942 = vpow.pop %v1941
    %v1943 = vadd.f32 %v1942, 1.0
    %v1944 = vrcp.pop %v1943
    %v1945 = vmul.f32 1.0, %v1944
    %v1946 = vtanh.pop %v1939
    %v1947 = vmul.f32 %v1945, %v1854
    %1949 = vrot.lane.b32.xlu0 %v1946, 64
    %v1950 = vpop.permute.xlu0 %1949
    %v1952 = vmul.f32 %v1945, %v1950
    %1954 = vrot.lane.b32.xlu0 %v1952, 32
    %v1955 = vpop.permute.xlu0 %1954
    %v1957 = vadd.f32 %v1947, %v1955
    %v1958 = vtanh.pop %v1957
    %1960 = vrot.lane.b32.xlu0 %v1958, 64
    %v1961 = vpop.permute.xlu0 %1960
    %v1963 = vmul.f32 %v1945, %v1961
    %1965 = vrot.lane.b32.xlu0 %v1963, 32
    %v1966 = vpop.permute.xlu0 %1965
    %1968 = vst.msk [vmem:[#allocation3 + $0xc] sm:$0x3] %vm427, %v1966
    %v1969 = vld [vmem:[#allocation2 + $0xe] sm:$0x3]
    %v1970 = vsel %vm180, %v1966, 0
    %1972 = vmatprep.subr.mxu0 0.0
    %1973 = vmatpush1.msra.mxu0 %v1246
    %1974 = vmatprep.subr.mxu0 0.0
    %1975 = vmatpush1.msra.mxu0 %v1247
    %1976 = vmatprep.subr.mxu0 0.0
    %1977 = vmatpush1.msra.mxu0 %v1248
    %1978 = vmatprep.subr.mxu0 0.0
    %1979 = vmatpush1.msra.mxu0 %v1249
    %1980 = vmatprep.subr.mxu0 0.0
    %1981 = vmatpush1.msra.mxu0 0.0
    %1982 = vmatprep.subr.mxu0 0.0
    %1983 = vmatpush1.msra.mxu0 0.0
    %1984 = vmatprep.subr.mxu0 0.0
    %1985 = vmatpush1.msra.mxu0 0.0
    %1986 = vmatprep.subr.mxu0 0.0
    %1987 = vmatpush1.msra.mxu0 0.0
    %1988 = vmatprep.subr.mxu0 0.0
    %1989 = vmatpush1.msra.mxu0 0.0
    %1990 = vmatprep.subr.mxu0 0.0
    %1991 = vmatpush1.msra.mxu0 0.0
    %1992 = vmatprep.subr.mxu0 0.0
    %1993 = vmatpush1.msra.mxu0 0.0
    %1994 = vmatprep.subr.mxu0 0.0
    %1995 = vmatpush1.msra.mxu0 0.0
    %1996 = vmatprep.subr.mxu0 0.0
    %1997 = vmatpush1.msra.mxu0 0.0
    %1998 = vmatprep.subr.mxu0 0.0
    %1999 = vmatpush1.msra.mxu0 0.0
    %2000 = vmatprep.subr.mxu0 0.0
    %2001 = vmatpush1.msra.mxu0 0.0
    %2002 = vmatprep.subr.mxu0 0.0
    %2003 = vmatpush1.msra.mxu0 0.0
    %2004 = vmatprep.subr.mxu0 0.0
    %2005 = vmatpush1.msra.mxu0 0.0
    %2006 = vmatprep.subr.mxu0 0.0
    %2007 = vmatpush1.msra.mxu0 0.0
    %2008 = vmatprep.subr.mxu0 0.0
    %2009 = vmatpush1.msra.mxu0 0.0
    %2010 = vmatprep.subr.mxu0 0.0
    %2011 = vmatpush1.msra.mxu0 0.0
    %2012 = vmatprep.subr.mxu0 0.0
    %2013 = vmatpush1.msra.mxu0 0.0
    %2014 = vmatprep.subr.mxu0 0.0
    %2015 = vmatpush1.msra.mxu0 0.0
    %2016 = vmatprep.subr.mxu0 0.0
    %2017 = vmatpush1.msra.mxu0 0.0
    %2018 = vmatprep.subr.mxu0 0.0
    %2019 = vmatpush1.msra.mxu0 0.0
    %2020 = vmatprep.subr.mxu0 0.0
    %2021 = vmatpush1.msra.mxu0 0.0
    %2022 = vmatprep.subr.mxu0 0.0
    %2023 = vmatpush1.msra.mxu0 0.0
    %2024 = vmatprep.subr.mxu0 0.0
    %2025 = vmatpush1.msra.mxu0 0.0
    %2026 = vmatprep.subr.mxu0 0.0
    %2027 = vmatpush1.msra.mxu0 0.0
    %2028 = vmatprep.subr.mxu0 0.0
    %2029 = vmatpush1.msra.mxu0 0.0
    %2030 = vmatprep.subr.mxu0 0.0
    %2031 = vmatpush1.msra.mxu0 0.0
    %2032 = vmatprep.subr.mxu0 0.0
    %2033 = vmatpush1.msra.mxu0 0.0
    %2034 = vmatprep.subr.mxu0 0.0
    %2035 = vmatpush1.msra.mxu0 0.0
    %2036 = vmatprep.mubr.f32.mxu0 0.0
    %2037 = vmatmul.mubr.f32.gmra.mrb[0].mxu0 %v1970
    %v2038 = vpop.f32.mrb[0].mxu0
    %v2039 = vadd.f32 0.0, %v2038
    %v2040 = vpop.f32.mrb[0].mxu0
    %2041 = vdwg.mxu0
    %v2042 = vadd.f32 %v1969, %v2039
    %v2043 = vxor.u32 %v2042, 2147483648
    %v2044 = vmul.f32 %v2043, 1.442695
    %v2045 = vpow.pop %v2044
    %v2046 = vadd.f32 %v2045, 1.0
    %v2047 = vrcp.pop %v2046
    %v2048 = vmul.f32 1.0, %v2047
    %v2049 = vtanh.pop %v2042
    %v2050 = vmul.f32 %v2048, %v1957
    %2052 = vrot.lane.b32.xlu0 %v2049, 64
    %v2053 = vpop.permute.xlu0 %2052
    %v2055 = vmul.f32 %v2048, %v2053
    %2057 = vrot.lane.b32.xlu0 %v2055, 32
    %v2058 = vpop.permute.xlu0 %2057
    %v2060 = vadd.f32 %v2050, %v2058
    %v2061 = vtanh.pop %v2060
    %2063 = vrot.lane.b32.xlu0 %v2061, 64
    %v2064 = vpop.permute.xlu0 %2063
    %v2066 = vmul.f32 %v2048, %v2064
    %2068 = vrot.lane.b32.xlu0 %v2066, 32
    %v2069 = vpop.permute.xlu0 %2068
    %2071 = vst.msk [vmem:[#allocation3 + $0xe] sm:$0x3] %vm427, %v2069
    %v2072 = vld [vmem:[#allocation3] sm:$0xff]
    %v2073 = vld [vmem:[#allocation3 + $0x8] sm:$0xff]
    %v2074 = vld [vmem:[#allocation19] sm:$0xff]
    %v2075 = vld [vmem:[#allocation19 + $0x8] sm:$0xff]
    %v2076 = vld [vmem:[#allocation19 + $0x10] sm:$0xff]
    %v2077 = vld [vmem:[#allocation19 + $0x18] sm:$0xff]
    %v2078 = vld [vmem:[#allocation21] sm:$0x1]
    %v2080 = vlaneseq
    %v2081 = vshrl.u32 %v2080, 7
    %v2082 = vsub.s32 0, %v2081
    %v2083 = vrot.slane %v2078, %v2082
    %v2086 = vsel %vm180, %v2072, 0
    %v2089 = vsel %vm180, %v2073, 0
    %2091 = vmatprep.subr.mxu0 0.0
    %2092 = vmatpush1.msra.mxu0 %v2074
    %2093 = vmatprep.subr.mxu0 0.0
    %2094 = vmatpush1.msra.mxu0 %v2075
    %2095 = vmatprep.subr.mxu0 0.0
    %2096 = vmatpush1.msra.mxu0 %v2076
    %2097 = vmatprep.subr.mxu0 0.0
    %2098 = vmatpush1.msra.mxu0 %v2077
    %2099 = vmatprep.subr.mxu0 0.0
    %2100 = vmatpush1.msra.mxu0 0.0
    %2101 = vmatprep.subr.mxu0 0.0
    %2102 = vmatpush1.msra.mxu0 0.0
    %2103 = vmatprep.subr.mxu0 0.0
    %2104 = vmatpush1.msra.mxu0 0.0
    %2105 = vmatprep.subr.mxu0 0.0
    %2106 = vmatpush1.msra.mxu0 0.0
    %2107 = vmatprep.subr.mxu0 0.0
    %2108 = vmatpush1.msra.mxu0 0.0
    %2109 = vmatprep.subr.mxu0 0.0
    %2110 = vmatpush1.msra.mxu0 0.0
    %2111 = vmatprep.subr.mxu0 0.0
    %2112 = vmatpush1.msra.mxu0 0.0
    %2113 = vmatprep.subr.mxu0 0.0
    %2114 = vmatpush1.msra.mxu0 0.0
    %2115 = vmatprep.subr.mxu0 0.0
    %2116 = vmatpush1.msra.mxu0 0.0
    %2117 = vmatprep.subr.mxu0 0.0
    %2118 = vmatpush1.msra.mxu0 0.0
    %2119 = vmatprep.subr.mxu0 0.0
    %2120 = vmatpush1.msra.mxu0 0.0
    %2121 = vmatprep.subr.mxu0 0.0
    %2122 = vmatpush1.msra.mxu0 0.0
    %2123 = vmatprep.subr.mxu0 0.0
    %2124 = vmatpush1.msra.mxu0 0.0
    %2125 = vmatprep.subr.mxu0 0.0
    %2126 = vmatpush1.msra.mxu0 0.0
    %2127 = vmatprep.subr.mxu0 0.0
    %2128 = vmatpush1.msra.mxu0 0.0
    %2129 = vmatprep.subr.mxu0 0.0
    %2130 = vmatpush1.msra.mxu0 0.0
    %2131 = vmatprep.subr.mxu0 0.0
    %2132 = vmatpush1.msra.mxu0 0.0
    %2133 = vmatprep.subr.mxu0 0.0
    %2134 = vmatpush1.msra.mxu0 0.0
    %2135 = vmatprep.subr.mxu0 0.0
    %2136 = vmatpush1.msra.mxu0 0.0
    %2137 = vmatprep.subr.mxu0 0.0
    %2138 = vmatpush1.msra.mxu0 0.0
    %2139 = vmatprep.subr.mxu0 0.0
    %2140 = vmatpush1.msra.mxu0 0.0
    %2141 = vmatprep.subr.mxu0 0.0
    %2142 = vmatpush1.msra.mxu0 0.0
    %2143 = vmatprep.subr.mxu0 0.0
    %2144 = vmatpush1.msra.mxu0 0.0
    %2145 = vmatprep.subr.mxu0 0.0
    %2146 = vmatpush1.msra.mxu0 0.0
    %2147 = vmatprep.subr.mxu0 0.0
    %2148 = vmatpush1.msra.mxu0 0.0
    %2149 = vmatprep.subr.mxu0 0.0
    %2150 = vmatpush1.msra.mxu0 0.0
    %2151 = vmatprep.subr.mxu0 0.0
    %2152 = vmatpush1.msra.mxu0 0.0
    %2153 = vmatprep.subr.mxu0 0.0
    %2154 = vmatpush1.msra.mxu0 0.0
    %2155 = vmatprep.mubr.f32.mxu0 0.0
    %2156 = vmatmul.mubr.f32.gmra.mrb[0].mxu0 %v2086
    %v2157 = vpop.f32.mrb[0].mxu0
    %v2158 = vadd.f32 %v2083, %v2157
    %v2159 = vpop.f32.mrb[0].mxu0
    %2160 = vmatprep.mubr.f32.mxu0 0.0
    %2161 = vmatmul.mubr.f32.gmra.mrb[0].mxu0 %v2089
    %v2162 = vpop.f32.mrb[0].mxu0
    %v2163 = vadd.f32 %v2083, %v2162
    %v2164 = vpop.f32.mrb[0].mxu0
    %2165 = vdwg.mxu0
    %vm2166 = vcmask 392192
    %2167 = vst.msk [vmem:[#allocation22] sm:$0xff] %vm2166, %v2158
    %2168 = vst.msk [vmem:[#allocation22 + $0x8] sm:$0xff] %vm2166, %v2163
    // Predicated region
    $region90: #{tpu_custom_call.1} parent=1 // pred_check
      _
    $region91: #{tpu_custom_call.1} parent=1 // pred_check_branch
      %2170 = sbr.rel (0) target = $region93
    $region92: #{tpu_custom_call.1} parent=1 // pred_region
      %s2172 = ssub.s32 256, 256
      %2173 = vsyncadd [#allocation6], %s2172
      %s2174 = sshll.u32 [#allocation22], 4
      %s2175 = int_to_ptr.vmem [resolvable:$true] %s2174
      %2180 = dma.vmem_to_hbm [thread:$0]  %s2175, 256, %s11, [#allocation6], 128, 128, 8
    $region93: #{tpu_custom_call.1} parent=1 // pred_fallthru
      _
    // Predicated region
    $region94: #{tpu_custom_call.1} parent=1 // pred_check
      _
    $region95: #{tpu_custom_call.1} parent=1 // pred_check_branch
      %2182 = sbr.rel (0) target = $region97
    $region96: #{tpu_custom_call.1} parent=1 // pred_region
      %2183 = dma.done [#allocation6], 256
    $region97: #{tpu_custom_call.1} parent=1 // pred_fallthru
      _
    %2184 = vsyncpa [#allocation5], 1
    %2185 = vsyncpa [#allocation8], 1
    %2186 = vsyncpa [#allocation11], 1
    %2187 = vsyncpa [#allocation14], 1
    %2188 = vsyncpa [#allocation17], 1
    %2189 = vsyncpa [#allocation20], 1
    %2190 = vsyncpa [#allocation6], 1

</llo_original>
